<compile_context>
chip_gen: v7x
topology: tpu7x:2x2x1
jax: 0.10.0
libtpu: 0.0.40
codegen_flags: <defaults>
</compile_context>

<pallas_src>
import jax
import jax.numpy as jnp
from jax.experimental import pallas as pl
from jax.experimental.pallas import tpu as pltpu


def _batchnorm(h, gamma=None, beta=None, eps=1e-5):
    """BatchNorm1d (training mode), single-pass statistics, all in f32.

    var = E[h^2] - E[h]^2 (biased, as PyTorch's forward normalization).
    """
    inv_b = 1.0 / h.shape[0]
    mean = jnp.sum(h, axis=0, keepdims=True) * inv_b
    mean_sq = jnp.sum(h * h, axis=0, keepdims=True) * inv_b
    var = mean_sq - mean * mean
    h_hat = (h - mean) * jax.lax.rsqrt(var + eps)
    if gamma is not None:
        h_hat = h_hat * gamma + beta
    return h_hat


def _bf16(x):
    return x.astype(jnp.bfloat16)


def simsiam_kernel(
    x_ref,                     # (B, F)   input data (one view; leading V squeezed)
    we_ref, be_ref,            # encoder: (F, D) bf16, (1, D) f32
    w1_ref, g1_ref, bb1_ref,   # projector block 1: (D, D) bf16, (1, D), (1, D)
    w2_ref, g2_ref, bb2_ref,   # projector block 2: (D, D) bf16, (1, D), (1, D)
    w3_ref,                    # projector block 3: (D, D) bf16 (BN affine=False)
    wq1_ref, gq_ref, bbq_ref,  # predictor block 1: (D, P) bf16, (1, P), (1, P)
    wq2_ref, bq2_ref,          # predictor block 2: (P, D) bf16, (1, D) f32
    p_ref, z_ref,              # outputs: (B, D), (B, D) f32
):
    x = _bf16(x_ref[...])

    # --- synthetic encoder: Linear + ReLU ---
    h = jnp.dot(x, we_ref[...], preferred_element_type=jnp.float32) + be_ref[...]
    h = jnp.maximum(h, 0.0)

    # --- projector: 3 x (Linear no-bias -> BN -> ReLU), last BN affine=False, no ReLU ---
    h1 = jnp.dot(_bf16(h), w1_ref[...], preferred_element_type=jnp.float32)
    h1 = jnp.maximum(_batchnorm(h1, g1_ref[...], bb1_ref[...]), 0.0)

    h2 = jnp.dot(_bf16(h1), w2_ref[...], preferred_element_type=jnp.float32)
    h2 = jnp.maximum(_batchnorm(h2, g2_ref[...], bb2_ref[...]), 0.0)

    z = _batchnorm(
        jnp.dot(_bf16(h2), w3_ref[...], preferred_element_type=jnp.float32))

    # --- predictor: Linear no-bias -> BN -> ReLU -> Linear (with bias) ---
    q = jnp.dot(_bf16(z), wq1_ref[...], preferred_element_type=jnp.float32)
    q = jnp.maximum(_batchnorm(q, gq_ref[...], bbq_ref[...]), 0.0)
    p = jnp.dot(_bf16(q), wq2_ref[...], preferred_element_type=jnp.float32) + bq2_ref[...]

    p_ref[...] = p
    z_ref[...] = z


def simsiam_forward(x, params):
    """SimSiam forward.

    x: (B, F) single view, or (V, B, F) stack of views (each view is an
       independent forward pass — BN statistics are per view).
    Returns (p, z) like SimSiam.forward; z is stop-gradient'd (.detach()).
    """
    squeeze_view = x.ndim == 2
    if squeeze_view:
        x = x[None]
    V, B, F = x.shape
    D = params["w_p1"].shape[1]
    P = params["w_q1"].shape[1]

    out_shapes = (
        jax.ShapeDtypeStruct((V, B, D), jnp.float32),  # p
        jax.ShapeDtypeStruct((V, B, D), jnp.float32),  # z
    )

    # Per-view blocks: leading view axis squeezed out inside the kernel.
    def view_spec(*shape):
        return pl.BlockSpec((None,) + shape, lambda v: (v,) + (0,) * len(shape))

    # Shared params: constant block index across views (DMA'd once).
    def shared_spec(arr):
        n = arr.ndim
        return pl.BlockSpec(arr.shape, lambda v, _n=n: (0,) * _n)

    args = (
        x,
        params["w_enc"], params["b_enc"],
        params["w_p1"], params["g_p1"], params["b_p1"],
        params["w_p2"], params["g_p2"], params["b_p2"],
        params["w_p3"],
        params["w_q1"], params["g_q1"], params["b_q1"],
        params["w_q2"], params["b_q2"],
    )

    in_specs = [view_spec(B, F)] + [shared_spec(a) for a in args[1:]]
    out_specs = (view_spec(B, D), view_spec(B, D))

    # Advisory cost for the XLA scheduler.
    matmul_flops = 2 * V * B * (F * D + 3 * D * D + D * P + P * D)
    weight_bytes = 2 * (F * D + 3 * D * D + D * P + P * D)          # bf16
    io_bytes = 4 * (V * B * F + 2 * V * B * D)                      # f32 in/out
    cost = pl.CostEstimate(
        flops=matmul_flops, transcendentals=0,
        bytes_accessed=weight_bytes + io_bytes)

    p, z = pl.pallas_call(
        simsiam_kernel,
        out_shape=out_shapes,
        grid_spec=pltpu.PrefetchScalarGridSpec(
            num_scalar_prefetch=0,
            grid=(V,),
            in_specs=in_specs,
            out_specs=out_specs,
        ),
        compiler_params=pltpu.CompilerParams(
            dimension_semantics=("parallel",),       # view -> TC on v7x megacore
            vmem_limit_bytes=48 << 20,               # fits v7x 64 MiB physical VMEM
        ),
        cost_estimate=cost,
    )(*args)

    if squeeze_view:
        p, z = p[0], z[0]
    return p, jax.lax.stop_gradient(z)  # .detach()


def init_params(key, in_features, dim, pred_dim):
    keys = jax.random.split(key, 6)
    scale = 0.05

    def w(k, shape):
        # matmul weights live in bf16 (MXU native, half the HBM traffic)
        return (scale * jax.random.normal(k, shape)).astype(jnp.bfloat16)

    ones = lambda n: jnp.ones((1, n), jnp.float32)
    zeros = lambda n: jnp.zeros((1, n), jnp.float32)

    return {
        # encoder (synthetic Linear)
        "w_enc": w(keys[0], (in_features, dim)),
        "b_enc": zeros(dim),
        # projector
        "w_p1": w(keys[1], (dim, dim)), "g_p1": ones(dim), "b_p1": zeros(dim),
        "w_p2": w(keys[2], (dim, dim)), "g_p2": ones(dim), "b_p2": zeros(dim),
        "w_p3": w(keys[3], (dim, dim)),  # last BN affine=False -> no gamma/beta
        # predictor
        "w_q1": w(keys[4], (dim, pred_dim)), "g_q1": ones(pred_dim), "b_q1": zeros(pred_dim),
        "w_q2": w(keys[5], (pred_dim, dim)), "b_q2": zeros(dim),
    }


if __name__ == "__main__":
    # Lane/sublane-aligned demo shapes: batch fills MXU rows, pred_dim >= 128.
    V, B, F, DIM, PRED_DIM = 2, 128, 256, 256, 128

    key = jax.random.PRNGKey(0)
    k_x, k_p = jax.random.split(key)

    # Two SimSiam views stacked on a leading axis (each BN'd independently).
    x_views = jax.random.normal(k_x, (V, B, F), dtype=jnp.float32)
    params = init_params(k_p, F, DIM, PRED_DIM)

    p, z = simsiam_forward(x_views, params)
    jax.block_until_ready((p, z))

    assert p.shape == (V, B, DIM) and z.shape == (V, B, DIM)
    assert p.dtype == jnp.float32 and z.dtype == jnp.float32
    assert bool(jnp.all(jnp.isfinite(p))) and bool(jnp.all(jnp.isfinite(z)))

    # Single-view path (matches the PyTorch forward signature exactly).
    p1, z1 = simsiam_forward(x_views[0], params)
    jax.block_until_ready((p1, z1))
    assert p1.shape == (B, DIM) and z1.shape == (B, DIM)

    print("KERNEL_OK")
</pallas_src>

<mosaic_0001>
module attributes {stable_mosaic.version = 11 : i64} {
  func.func @simsiam_kernel(%arg0: i32, %arg1: memref<1x128x256xf32, #tpu.memory_space<vmem>>, %arg2: memref<256x256xbf16, #tpu.memory_space<vmem>>, %arg3: memref<1x256xf32, #tpu.memory_space<vmem>>, %arg4: memref<256x256xbf16, #tpu.memory_space<vmem>>, %arg5: memref<1x256xf32, #tpu.memory_space<vmem>>, %arg6: memref<1x256xf32, #tpu.memory_space<vmem>>, %arg7: memref<256x256xbf16, #tpu.memory_space<vmem>>, %arg8: memref<1x256xf32, #tpu.memory_space<vmem>>, %arg9: memref<1x256xf32, #tpu.memory_space<vmem>>, %arg10: memref<256x256xbf16, #tpu.memory_space<vmem>>, %arg11: memref<256x128xbf16, #tpu.memory_space<vmem>>, %arg12: memref<1x128xf32, #tpu.memory_space<vmem>>, %arg13: memref<1x128xf32, #tpu.memory_space<vmem>>, %arg14: memref<128x256xbf16, #tpu.memory_space<vmem>>, %arg15: memref<1x256xf32, #tpu.memory_space<vmem>>, %arg16: memref<1x128x256xf32, #tpu.memory_space<vmem>>, %arg17: memref<1x128x256xf32, #tpu.memory_space<vmem>>) attributes {dimension_semantics = [#tpu.dimension_semantics<parallel>], iteration_bounds = array<i64: 2>, scalar_prefetch = 0 : i64, scratch_operands = 0 : i64, tpu.core_type = #tpu.core_type<tc>, window_params = [{transform_indices = @transform_0, window_bounds = array<i64: 1, 128, 256>}, {pipeline_mode = #tpu.pipeline_mode<synchronous>, transform_indices = @transform_1, window_bounds = array<i64: 256, 256>}, {pipeline_mode = #tpu.pipeline_mode<synchronous>, transform_indices = @transform_2, window_bounds = array<i64: 1, 256>}, {pipeline_mode = #tpu.pipeline_mode<synchronous>, transform_indices = @transform_3, window_bounds = array<i64: 256, 256>}, {pipeline_mode = #tpu.pipeline_mode<synchronous>, transform_indices = @transform_4, window_bounds = array<i64: 1, 256>}, {pipeline_mode = #tpu.pipeline_mode<synchronous>, transform_indices = @transform_5, window_bounds = array<i64: 1, 256>}, {pipeline_mode = #tpu.pipeline_mode<synchronous>, transform_indices = @transform_6, window_bounds = array<i64: 256, 256>}, {pipeline_mode = #tpu.pipeline_mode<synchronous>, transform_indices = @transform_7, window_bounds = array<i64: 1, 256>}, {pipeline_mode = #tpu.pipeline_mode<synchronous>, transform_indices = @transform_8, window_bounds = array<i64: 1, 256>}, {pipeline_mode = #tpu.pipeline_mode<synchronous>, transform_indices = @transform_9, window_bounds = array<i64: 256, 256>}, {pipeline_mode = #tpu.pipeline_mode<synchronous>, transform_indices = @transform_10, window_bounds = array<i64: 256, 128>}, {pipeline_mode = #tpu.pipeline_mode<synchronous>, transform_indices = @transform_11, window_bounds = array<i64: 1, 128>}, {pipeline_mode = #tpu.pipeline_mode<synchronous>, transform_indices = @transform_12, window_bounds = array<i64: 1, 128>}, {pipeline_mode = #tpu.pipeline_mode<synchronous>, transform_indices = @transform_13, window_bounds = array<i64: 128, 256>}, {pipeline_mode = #tpu.pipeline_mode<synchronous>, transform_indices = @transform_14, window_bounds = array<i64: 1, 256>}, {transform_indices = @transform_15, window_bounds = array<i64: 1, 128, 256>}, {transform_indices = @transform_16, window_bounds = array<i64: 1, 128, 256>}]} {
    %c0 = arith.constant 0 : index
    %c0_0 = arith.constant 0 : index
    %c0_1 = arith.constant 0 : index
    %0 = vector.load %arg1[%c0, %c0_0, %c0_1] : memref<1x128x256xf32, #tpu.memory_space<vmem>>, vector<1x128x256xf32>
    %1 = vector.shape_cast %0 : vector<1x128x256xf32> to vector<128x256xf32>
    %2 = arith.truncf %1 : vector<128x256xf32> to vector<128x256xbf16>
    %c0_2 = arith.constant 0 : index
    %c0_3 = arith.constant 0 : index
    %3 = vector.load %arg2[%c0_2, %c0_3] : memref<256x256xbf16, #tpu.memory_space<vmem>>, vector<256x256xbf16>
    %cst = arith.constant dense<0.000000e+00> : vector<128x256xf32>
    %4 = tpu.matmul %2, %3, %cst {dimension_numbers = #tpu.dot_dimension_numbers<[1], [0], [0], [1], [0, 0, 1, 1], [], []>} : vector<128x256xbf16>, vector<256x256xbf16>, vector<128x256xf32> -> vector<128x256xf32>
    %c0_4 = arith.constant 0 : index
    %c0_5 = arith.constant 0 : index
    %5 = vector.load %arg3[%c0_4, %c0_5] : memref<1x256xf32, #tpu.memory_space<vmem>>, vector<1x256xf32>
    %6 = vector.broadcast %5 : vector<1x256xf32> to vector<128x256xf32>
    %7 = arith.addf %4, %6 : vector<128x256xf32>
    %cst_6 = arith.constant 0.000000e+00 : f32
    %8 = vector.broadcast %cst_6 : f32 to vector<128x256xf32>
    %9 = arith.maximumf %7, %8 : vector<128x256xf32>
    %10 = arith.truncf %9 : vector<128x256xf32> to vector<128x256xbf16>
    %c0_7 = arith.constant 0 : index
    %c0_8 = arith.constant 0 : index
    %11 = vector.load %arg4[%c0_7, %c0_8] : memref<256x256xbf16, #tpu.memory_space<vmem>>, vector<256x256xbf16>
    %cst_9 = arith.constant dense<0.000000e+00> : vector<128x256xf32>
    %12 = tpu.matmul %10, %11, %cst_9 {dimension_numbers = #tpu.dot_dimension_numbers<[1], [0], [0], [1], [0, 0, 1, 1], [], []>} : vector<128x256xbf16>, vector<256x256xbf16>, vector<128x256xf32> -> vector<128x256xf32>
    %c0_10 = arith.constant 0 : index
    %c0_11 = arith.constant 0 : index
    %13 = vector.load %arg5[%c0_10, %c0_11] : memref<1x256xf32, #tpu.memory_space<vmem>>, vector<1x256xf32>
    %c0_12 = arith.constant 0 : index
    %c0_13 = arith.constant 0 : index
    %14 = vector.load %arg6[%c0_12, %c0_13] : memref<1x256xf32, #tpu.memory_space<vmem>>, vector<1x256xf32>
    %cst_14 = arith.constant dense<0.000000e+00> : vector<256xf32>
    %15 = vector.multi_reduction <add>, %12, %cst_14 [0] : vector<128x256xf32> to vector<256xf32>
    %16 = vector.shape_cast %15 : vector<256xf32> to vector<1x256xf32>
    %cst_15 = arith.constant 7.812500e-03 : f32
    %17 = vector.broadcast %cst_15 : f32 to vector<1x256xf32>
    %18 = arith.mulf %16, %17 : vector<1x256xf32>
    %19 = arith.mulf %12, %12 : vector<128x256xf32>
    %cst_16 = arith.constant dense<0.000000e+00> : vector<256xf32>
    %20 = vector.multi_reduction <add>, %19, %cst_16 [0] : vector<128x256xf32> to vector<256xf32>
    %21 = vector.shape_cast %20 : vector<256xf32> to vector<1x256xf32>
    %cst_17 = arith.constant 7.812500e-03 : f32
    %22 = vector.broadcast %cst_17 : f32 to vector<1x256xf32>
    %23 = arith.mulf %21, %22 : vector<1x256xf32>
    %24 = arith.mulf %18, %18 : vector<1x256xf32>
    %25 = arith.subf %23, %24 : vector<1x256xf32>
    %26 = vector.broadcast %18 : vector<1x256xf32> to vector<128x256xf32>
    %27 = arith.subf %12, %26 : vector<128x256xf32>
    %cst_18 = arith.constant 9.99999974E-6 : f32
    %28 = vector.broadcast %cst_18 : f32 to vector<1x256xf32>
    %29 = arith.addf %25, %28 : vector<1x256xf32>
    %30 = math.rsqrt %29 : vector<1x256xf32>
    %31 = vector.broadcast %30 : vector<1x256xf32> to vector<128x256xf32>
    %32 = arith.mulf %27, %31 : vector<128x256xf32>
    %33 = vector.broadcast %13 : vector<1x256xf32> to vector<128x256xf32>
    %34 = arith.mulf %32, %33 : vector<128x256xf32>
    %35 = vector.broadcast %14 : vector<1x256xf32> to vector<128x256xf32>
    %36 = arith.addf %34, %35 : vector<128x256xf32>
    %cst_19 = arith.constant 0.000000e+00 : f32
    %37 = vector.broadcast %cst_19 : f32 to vector<128x256xf32>
    %38 = arith.maximumf %36, %37 : vector<128x256xf32>
    %39 = arith.truncf %38 : vector<128x256xf32> to vector<128x256xbf16>
    %c0_20 = arith.constant 0 : index
    %c0_21 = arith.constant 0 : index
    %40 = vector.load %arg7[%c0_20, %c0_21] : memref<256x256xbf16, #tpu.memory_space<vmem>>, vector<256x256xbf16>
    %cst_22 = arith.constant dense<0.000000e+00> : vector<128x256xf32>
    %41 = tpu.matmul %39, %40, %cst_22 {dimension_numbers = #tpu.dot_dimension_numbers<[1], [0], [0], [1], [0, 0, 1, 1], [], []>} : vector<128x256xbf16>, vector<256x256xbf16>, vector<128x256xf32> -> vector<128x256xf32>
    %c0_23 = arith.constant 0 : index
    %c0_24 = arith.constant 0 : index
    %42 = vector.load %arg8[%c0_23, %c0_24] : memref<1x256xf32, #tpu.memory_space<vmem>>, vector<1x256xf32>
    %c0_25 = arith.constant 0 : index
    %c0_26 = arith.constant 0 : index
    %43 = vector.load %arg9[%c0_25, %c0_26] : memref<1x256xf32, #tpu.memory_space<vmem>>, vector<1x256xf32>
    %cst_27 = arith.constant dense<0.000000e+00> : vector<256xf32>
    %44 = vector.multi_reduction <add>, %41, %cst_27 [0] : vector<128x256xf32> to vector<256xf32>
    %45 = vector.shape_cast %44 : vector<256xf32> to vector<1x256xf32>
    %cst_28 = arith.constant 7.812500e-03 : f32
    %46 = vector.broadcast %cst_28 : f32 to vector<1x256xf32>
    %47 = arith.mulf %45, %46 : vector<1x256xf32>
    %48 = arith.mulf %41, %41 : vector<128x256xf32>
    %cst_29 = arith.constant dense<0.000000e+00> : vector<256xf32>
    %49 = vector.multi_reduction <add>, %48, %cst_29 [0] : vector<128x256xf32> to vector<256xf32>
    %50 = vector.shape_cast %49 : vector<256xf32> to vector<1x256xf32>
    %cst_30 = arith.constant 7.812500e-03 : f32
    %51 = vector.broadcast %cst_30 : f32 to vector<1x256xf32>
    %52 = arith.mulf %50, %51 : vector<1x256xf32>
    %53 = arith.mulf %47, %47 : vector<1x256xf32>
    %54 = arith.subf %52, %53 : vector<1x256xf32>
    %55 = vector.broadcast %47 : vector<1x256xf32> to vector<128x256xf32>
    %56 = arith.subf %41, %55 : vector<128x256xf32>
    %cst_31 = arith.constant 9.99999974E-6 : f32
    %57 = vector.broadcast %cst_31 : f32 to vector<1x256xf32>
    %58 = arith.addf %54, %57 : vector<1x256xf32>
    %59 = math.rsqrt %58 : vector<1x256xf32>
    %60 = vector.broadcast %59 : vector<1x256xf32> to vector<128x256xf32>
    %61 = arith.mulf %56, %60 : vector<128x256xf32>
    %62 = vector.broadcast %42 : vector<1x256xf32> to vector<128x256xf32>
    %63 = arith.mulf %61, %62 : vector<128x256xf32>
    %64 = vector.broadcast %43 : vector<1x256xf32> to vector<128x256xf32>
    %65 = arith.addf %63, %64 : vector<128x256xf32>
    %cst_32 = arith.constant 0.000000e+00 : f32
    %66 = vector.broadcast %cst_32 : f32 to vector<128x256xf32>
    %67 = arith.maximumf %65, %66 : vector<128x256xf32>
    %68 = arith.truncf %67 : vector<128x256xf32> to vector<128x256xbf16>
    %c0_33 = arith.constant 0 : index
    %c0_34 = arith.constant 0 : index
    %69 = vector.load %arg10[%c0_33, %c0_34] : memref<256x256xbf16, #tpu.memory_space<vmem>>, vector<256x256xbf16>
    %cst_35 = arith.constant dense<0.000000e+00> : vector<128x256xf32>
    %70 = tpu.matmul %68, %69, %cst_35 {dimension_numbers = #tpu.dot_dimension_numbers<[1], [0], [0], [1], [0, 0, 1, 1], [], []>} : vector<128x256xbf16>, vector<256x256xbf16>, vector<128x256xf32> -> vector<128x256xf32>
    %cst_36 = arith.constant dense<0.000000e+00> : vector<256xf32>
    %71 = vector.multi_reduction <add>, %70, %cst_36 [0] : vector<128x256xf32> to vector<256xf32>
    %72 = vector.shape_cast %71 : vector<256xf32> to vector<1x256xf32>
    %cst_37 = arith.constant 7.812500e-03 : f32
    %73 = vector.broadcast %cst_37 : f32 to vector<1x256xf32>
    %74 = arith.mulf %72, %73 : vector<1x256xf32>
    %75 = arith.mulf %70, %70 : vector<128x256xf32>
    %cst_38 = arith.constant dense<0.000000e+00> : vector<256xf32>
    %76 = vector.multi_reduction <add>, %75, %cst_38 [0] : vector<128x256xf32> to vector<256xf32>
    %77 = vector.shape_cast %76 : vector<256xf32> to vector<1x256xf32>
    %cst_39 = arith.constant 7.812500e-03 : f32
    %78 = vector.broadcast %cst_39 : f32 to vector<1x256xf32>
    %79 = arith.mulf %77, %78 : vector<1x256xf32>
    %80 = arith.mulf %74, %74 : vector<1x256xf32>
    %81 = arith.subf %79, %80 : vector<1x256xf32>
    %82 = vector.broadcast %74 : vector<1x256xf32> to vector<128x256xf32>
    %83 = arith.subf %70, %82 : vector<128x256xf32>
    %cst_40 = arith.constant 9.99999974E-6 : f32
    %84 = vector.broadcast %cst_40 : f32 to vector<1x256xf32>
    %85 = arith.addf %81, %84 : vector<1x256xf32>
    %86 = math.rsqrt %85 : vector<1x256xf32>
    %87 = vector.broadcast %86 : vector<1x256xf32> to vector<128x256xf32>
    %88 = arith.mulf %83, %87 : vector<128x256xf32>
    %89 = arith.truncf %88 : vector<128x256xf32> to vector<128x256xbf16>
    %c0_41 = arith.constant 0 : index
    %c0_42 = arith.constant 0 : index
    %90 = vector.load %arg11[%c0_41, %c0_42] : memref<256x128xbf16, #tpu.memory_space<vmem>>, vector<256x128xbf16>
    %cst_43 = arith.constant dense<0.000000e+00> : vector<128x128xf32>
    %91 = tpu.matmul %89, %90, %cst_43 {dimension_numbers = #tpu.dot_dimension_numbers<[1], [0], [0], [1], [0, 0, 1, 1], [], []>} : vector<128x256xbf16>, vector<256x128xbf16>, vector<128x128xf32> -> vector<128x128xf32>
    %c0_44 = arith.constant 0 : index
    %c0_45 = arith.constant 0 : index
    %92 = vector.load %arg12[%c0_44, %c0_45] : memref<1x128xf32, #tpu.memory_space<vmem>>, vector<1x128xf32>
    %c0_46 = arith.constant 0 : index
    %c0_47 = arith.constant 0 : index
    %93 = vector.load %arg13[%c0_46, %c0_47] : memref<1x128xf32, #tpu.memory_space<vmem>>, vector<1x128xf32>
    %cst_48 = arith.constant dense<0.000000e+00> : vector<128xf32>
    %94 = vector.multi_reduction <add>, %91, %cst_48 [0] : vector<128x128xf32> to vector<128xf32>
    %95 = vector.shape_cast %94 : vector<128xf32> to vector<1x128xf32>
    %cst_49 = arith.constant 7.812500e-03 : f32
    %96 = vector.broadcast %cst_49 : f32 to vector<1x128xf32>
    %97 = arith.mulf %95, %96 : vector<1x128xf32>
    %98 = arith.mulf %91, %91 : vector<128x128xf32>
    %cst_50 = arith.constant dense<0.000000e+00> : vector<128xf32>
    %99 = vector.multi_reduction <add>, %98, %cst_50 [0] : vector<128x128xf32> to vector<128xf32>
    %100 = vector.shape_cast %99 : vector<128xf32> to vector<1x128xf32>
    %cst_51 = arith.constant 7.812500e-03 : f32
    %101 = vector.broadcast %cst_51 : f32 to vector<1x128xf32>
    %102 = arith.mulf %100, %101 : vector<1x128xf32>
    %103 = arith.mulf %97, %97 : vector<1x128xf32>
    %104 = arith.subf %102, %103 : vector<1x128xf32>
    %105 = vector.broadcast %97 : vector<1x128xf32> to vector<128x128xf32>
    %106 = arith.subf %91, %105 : vector<128x128xf32>
    %cst_52 = arith.constant 9.99999974E-6 : f32
    %107 = vector.broadcast %cst_52 : f32 to vector<1x128xf32>
    %108 = arith.addf %104, %107 : vector<1x128xf32>
    %109 = math.rsqrt %108 : vector<1x128xf32>
    %110 = vector.broadcast %109 : vector<1x128xf32> to vector<128x128xf32>
    %111 = arith.mulf %106, %110 : vector<128x128xf32>
    %112 = vector.broadcast %92 : vector<1x128xf32> to vector<128x128xf32>
    %113 = arith.mulf %111, %112 : vector<128x128xf32>
    %114 = vector.broadcast %93 : vector<1x128xf32> to vector<128x128xf32>
    %115 = arith.addf %113, %114 : vector<128x128xf32>
    %cst_53 = arith.constant 0.000000e+00 : f32
    %116 = vector.broadcast %cst_53 : f32 to vector<128x128xf32>
    %117 = arith.maximumf %115, %116 : vector<128x128xf32>
    %118 = arith.truncf %117 : vector<128x128xf32> to vector<128x128xbf16>
    %c0_54 = arith.constant 0 : index
    %c0_55 = arith.constant 0 : index
    %119 = vector.load %arg14[%c0_54, %c0_55] : memref<128x256xbf16, #tpu.memory_space<vmem>>, vector<128x256xbf16>
    %cst_56 = arith.constant dense<0.000000e+00> : vector<128x256xf32>
    %120 = tpu.matmul %118, %119, %cst_56 {dimension_numbers = #tpu.dot_dimension_numbers<[1], [0], [0], [1], [0, 0, 1, 1], [], []>} : vector<128x128xbf16>, vector<128x256xbf16>, vector<128x256xf32> -> vector<128x256xf32>
    %c0_57 = arith.constant 0 : index
    %c0_58 = arith.constant 0 : index
    %121 = vector.load %arg15[%c0_57, %c0_58] : memref<1x256xf32, #tpu.memory_space<vmem>>, vector<1x256xf32>
    %122 = vector.broadcast %121 : vector<1x256xf32> to vector<128x256xf32>
    %123 = arith.addf %120, %122 : vector<128x256xf32>
    %c0_59 = arith.constant 0 : index
    %c0_60 = arith.constant 0 : index
    %c0_61 = arith.constant 0 : index
    %124 = vector.load %arg16[%c0_59, %c0_60, %c0_61] : memref<1x128x256xf32, #tpu.memory_space<vmem>>, vector<1x128x256xf32>
    %125 = vector.shape_cast %124 : vector<1x128x256xf32> to vector<128x256xf32>
    %126 = vector.shape_cast %123 : vector<128x256xf32> to vector<1x128x256xf32>
    tpu.vector_store %arg16[%c0_59, %c0_60, %c0_61], %126 {strides = array<i32>} : memref<1x128x256xf32, #tpu.memory_space<vmem>>, vector<1x128x256xf32>,
    %c0_62 = arith.constant 0 : index
    %c0_63 = arith.constant 0 : index
    %c0_64 = arith.constant 0 : index
    %127 = vector.load %arg17[%c0_62, %c0_63, %c0_64] : memref<1x128x256xf32, #tpu.memory_space<vmem>>, vector<1x128x256xf32>
    %128 = vector.shape_cast %127 : vector<1x128x256xf32> to vector<128x256xf32>
    %129 = vector.shape_cast %88 : vector<128x256xf32> to vector<1x128x256xf32>
    tpu.vector_store %arg17[%c0_62, %c0_63, %c0_64], %129 {strides = array<i32>} : memref<1x128x256xf32, #tpu.memory_space<vmem>>, vector<1x128x256xf32>,
    return
  }
  func.func @transform_0(%arg0: i32) -> (i32, i32, i32) {
    %c0_i32 = arith.constant 0 : i32
    %c0_i32_0 = arith.constant 0 : i32
    %c0_i32_1 = arith.constant 0 : i32
    return %arg0, %c0_i32, %c0_i32_0 : i32, i32, i32
  }
  func.func @transform_1(%arg0: i32) -> (i32, i32) {
    %c0_i32 = arith.constant 0 : i32
    %c0_i32_0 = arith.constant 0 : i32
    %c0_i32_1 = arith.constant 0 : i32
    return %c0_i32, %c0_i32_0 : i32, i32
  }
  func.func @transform_2(%arg0: i32) -> (i32, i32) {
    %c0_i32 = arith.constant 0 : i32
    %c0_i32_0 = arith.constant 0 : i32
    %c0_i32_1 = arith.constant 0 : i32
    return %c0_i32, %c0_i32_0 : i32, i32
  }
  func.func @transform_3(%arg0: i32) -> (i32, i32) {
    %c0_i32 = arith.constant 0 : i32
    %c0_i32_0 = arith.constant 0 : i32
    %c0_i32_1 = arith.constant 0 : i32
    return %c0_i32, %c0_i32_0 : i32, i32
  }
  func.func @transform_4(%arg0: i32) -> (i32, i32) {
    %c0_i32 = arith.constant 0 : i32
    %c0_i32_0 = arith.constant 0 : i32
    %c0_i32_1 = arith.constant 0 : i32
    return %c0_i32, %c0_i32_0 : i32, i32
  }
  func.func @transform_5(%arg0: i32) -> (i32, i32) {
    %c0_i32 = arith.constant 0 : i32
    %c0_i32_0 = arith.constant 0 : i32
    %c0_i32_1 = arith.constant 0 : i32
    return %c0_i32, %c0_i32_0 : i32, i32
  }
  func.func @transform_6(%arg0: i32) -> (i32, i32) {
    %c0_i32 = arith.constant 0 : i32
    %c0_i32_0 = arith.constant 0 : i32
    %c0_i32_1 = arith.constant 0 : i32
    return %c0_i32, %c0_i32_0 : i32, i32
  }
  func.func @transform_7(%arg0: i32) -> (i32, i32) {
    %c0_i32 = arith.constant 0 : i32
    %c0_i32_0 = arith.constant 0 : i32
    %c0_i32_1 = arith.constant 0 : i32
    return %c0_i32, %c0_i32_0 : i32, i32
  }
  func.func @transform_8(%arg0: i32) -> (i32, i32) {
    %c0_i32 = arith.constant 0 : i32
    %c0_i32_0 = arith.constant 0 : i32
    %c0_i32_1 = arith.constant 0 : i32
    return %c0_i32, %c0_i32_0 : i32, i32
  }
  func.func @transform_9(%arg0: i32) -> (i32, i32) {
    %c0_i32 = arith.constant 0 : i32
    %c0_i32_0 = arith.constant 0 : i32
    %c0_i32_1 = arith.constant 0 : i32
    return %c0_i32, %c0_i32_0 : i32, i32
  }
  func.func @transform_10(%arg0: i32) -> (i32, i32) {
    %c0_i32 = arith.constant 0 : i32
    %c0_i32_0 = arith.constant 0 : i32
    %c0_i32_1 = arith.constant 0 : i32
    return %c0_i32, %c0_i32_0 : i32, i32
  }
  func.func @transform_11(%arg0: i32) -> (i32, i32) {
    %c0_i32 = arith.constant 0 : i32
    %c0_i32_0 = arith.constant 0 : i32
    %c0_i32_1 = arith.constant 0 : i32
    return %c0_i32, %c0_i32_0 : i32, i32
  }
  func.func @transform_12(%arg0: i32) -> (i32, i32) {
    %c0_i32 = arith.constant 0 : i32
    %c0_i32_0 = arith.constant 0 : i32
    %c0_i32_1 = arith.constant 0 : i32
    return %c0_i32, %c0_i32_0 : i32, i32
  }
  func.func @transform_13(%arg0: i32) -> (i32, i32) {
    %c0_i32 = arith.constant 0 : i32
    %c0_i32_0 = arith.constant 0 : i32
    %c0_i32_1 = arith.constant 0 : i32
    return %c0_i32, %c0_i32_0 : i32, i32
  }
  func.func @transform_14(%arg0: i32) -> (i32, i32) {
    %c0_i32 = arith.constant 0 : i32
    %c0_i32_0 = arith.constant 0 : i32
    %c0_i32_1 = arith.constant 0 : i32
    return %c0_i32, %c0_i32_0 : i32, i32
  }
  func.func @transform_15(%arg0: i32) -> (i32, i32, i32) {
    %c0_i32 = arith.constant 0 : i32
    %c0_i32_0 = arith.constant 0 : i32
    %c0_i32_1 = arith.constant 0 : i32
    return %arg0, %c0_i32, %c0_i32_0 : i32, i32, i32
  }
  func.func @transform_16(%arg0: i32) -> (i32, i32, i32) {
    %c0_i32 = arith.constant 0 : i32
    %c0_i32_0 = arith.constant 0 : i32
    %c0_i32_1 = arith.constant 0 : i32
    return %arg0, %c0_i32, %c0_i32_0 : i32, i32, i32
  }
}

</mosaic_0001>

<llo_original>
// kernel: tpu_custom_call.1
$region0: #{tpu_custom_call.1}
  #allocation0 [shape = 'u32[]', space=smem, size = 0x4, offset = 0x4, fixed_abs, tag = 'smem constant byte address 0x4 - core index']
  #allocation1 [shape = 'u32[144,128]{1,0:T(1,128)}', space=vmem, size = 0x12000, scoped, tag = 'internal scratch']
  %s0 = inlined_call_operand.hbm [shape: f32[2,128,256], index: 0, kind: input, shape index: {}]
  %s1 = inlined_call_operand.hbm [shape: bf16[256,256], index: 1, kind: input, shape index: {}]
  %s2 = inlined_call_operand.vmem [shape: f32[1,256], index: 2, kind: input, shape index: {}]
  %s3 = inlined_call_operand.hbm [shape: bf16[256,256], index: 3, kind: input, shape index: {}]
  %s4 = inlined_call_operand.vmem [shape: f32[1,256], index: 4, kind: input, shape index: {}]
  %s5 = inlined_call_operand.vmem [shape: f32[1,256], index: 5, kind: input, shape index: {}]
  %s6 = inlined_call_operand.hbm [shape: bf16[256,256], index: 6, kind: input, shape index: {}]
  %s7 = inlined_call_operand.vmem [shape: f32[1,256], index: 7, kind: input, shape index: {}]
  %s8 = inlined_call_operand.vmem [shape: f32[1,256], index: 8, kind: input, shape index: {}]
  %s9 = inlined_call_operand.hbm [shape: bf16[256,256], index: 9, kind: input, shape index: {}]
  %s10 = inlined_call_operand.hbm [shape: bf16[256,128], index: 10, kind: input, shape index: {}]
  %s11 = inlined_call_operand.vmem [shape: f32[1,128], index: 11, kind: input, shape index: {}]
  %s12 = inlined_call_operand.vmem [shape: f32[1,128], index: 12, kind: input, shape index: {}]
  %s13 = inlined_call_operand.hbm [shape: bf16[128,256], index: 13, kind: input, shape index: {}]
  %s14 = inlined_call_operand.vmem [shape: f32[1,256], index: 14, kind: input, shape index: {}]
  %s15 = inlined_call_operand.hbm [shape: f32[2,128,256], index: 15, kind: output, shape index: {0}]
  %s16 = inlined_call_operand.hbm [shape: f32[2,128,256], index: 16, kind: output, shape index: {1}]
  %17 = xla_tuple %s15, %s16
  %s18 = sld [smem:[#allocation0]]
  $region129: #{tpu_custom_call.1} parent=0
    _
  %s20 = ssub.s32 1, %s18
  %s21 = scalar_select 0, %s20, %s18
  $region1: #{tpu_custom_call.1} parent=0
    #allocation2 [shape = 'u8[262144]{0}', space=vmem, size = 0x40000, scoped, tag = 'input window, operand 0']
    #allocation3 [shape = 's32[2]{0}', space=sflag, size = 0x8, scoped, tag = 'scoped memory for tpu_custom_call.1']
    #allocation4 [shape = 's32[2]{0}', space=sflag, size = 0x8, scoped, tag = 'scoped memory for tpu_custom_call.1']
    #allocation5 [shape = 'u8[131072]{0}', space=vmem, size = 0x20000, scoped, tag = 'input window, operand 1, single buffered']
    #allocation6 [shape = 's32[1]{0}', space=sflag, size = 0x4, scoped, tag = 'scoped memory for tpu_custom_call.1']
    #allocation7 [shape = 'u8[131072]{0}', space=vmem, size = 0x20000, scoped, tag = 'input window, operand 3, single buffered']
    #allocation8 [shape = 'u8[131072]{0}', space=vmem, size = 0x20000, scoped, tag = 'input window, operand 6, single buffered']
    #allocation9 [shape = 's32[1]{0}', space=sflag, size = 0x4, scoped, tag = 'scoped memory for tpu_custom_call.1']
    #allocation10 [shape = 'u8[131072]{0}', space=vmem, size = 0x20000, scoped, tag = 'input window, operand 9, single buffered']
    #allocation11 [shape = 'u8[65536]{0}', space=vmem, size = 0x10000, scoped, tag = 'input window, operand 10, single buffered']
    #allocation12 [shape = 's32[1]{0}', space=sflag, size = 0x4, scoped, tag = 'scoped memory for tpu_custom_call.1']
    #allocation13 [shape = 'u8[65536]{0}', space=vmem, size = 0x10000, scoped, tag = 'input window, operand 13, single buffered']
    #allocation14 [shape = 'u8[262144]{0}', space=vmem, size = 0x40000, scoped, tag = 'output window, operand 0']
    #allocation15 [shape = 'u8[262144]{0}', space=vmem, size = 0x40000, scoped, tag = 'output window, operand 1']
    #allocation16 [shape = 's32[2]{0}', space=sflag, size = 0x8, scoped, tag = 'scoped memory for tpu_custom_call.1']
    %22 = vsyncpa [#allocation3], 0
    %s23 = scalar_lea.sflag [#allocation3], 1
    %24 = vsyncpa %s23, 0
    %25 = vsyncpa [#allocation6], 0
    %26 = vsyncpa [#allocation9], 0
    %27 = vsyncpa [#allocation12], 0
    %28 = vsyncpa [#allocation4], 0
    %s29 = scalar_lea.sflag [#allocation4], 1
    %30 = vsyncpa %s29, 0
    %31 = vsyncpa [#allocation16], 0
    %s32 = scalar_lea.sflag [#allocation16], 1
    %33 = vsyncpa %s32, 0
    loop: start=0, step=1, limit=4
    $region2: #{tpu_custom_call.1} parent=1 // loop_pre_header
      _
    $region3: #{tpu_custom_call.1} parent=1 // loop_header
      %s35 = sphi 0, %s39
      %p36 = scmp.ge.s32.totalorder %s35, 4
      %s45 = sphi 0, %s47
      %s48 = sphi 0, %s45
      %s49 = sphi 0, %s48
      %s65 = sphi 0, %s49
      %s69 = sphi 0, %s69
      %s71 = sphi 0, %s69
      %s72 = sphi 0, %s71
      %s86 = sphi 0, %s72
      %s90 = sphi 0, %s90
      %s92 = sphi 0, %s90
      %s93 = sphi 0, %s92
      %s107 = sphi 0, %s93
      %s111 = sphi 0, %s111
      %s113 = sphi 0, %s111
      %s114 = sphi 0, %s113
      %s128 = sphi 0, %s114
      %s132 = sphi 0, %s132
      %s134 = sphi 0, %s132
      %s135 = sphi 0, %s134
      %s149 = sphi 0, %s135
      %s153 = sphi 0, %s153
      %s155 = sphi 0, %s153
      %s156 = sphi 0, %s155
      %s170 = sphi 0, %s156
      %s174 = sphi 0, %s174
      %s176 = sphi 0, %s174
      %s177 = sphi 0, %s176
      %s191 = sphi 0, %s177
      %s195 = sphi 0, %s195
      %s197 = sphi 0, %s195
      %s198 = sphi 0, %s197
      %s212 = sphi 0, %s198
      %s216 = sphi 0, %s216
      %s218 = sphi 0, %s216
      %s219 = sphi 0, %s218
      %s233 = sphi 0, %s219
      %s237 = sphi 0, %s237
      %s239 = sphi 0, %s237
      %s240 = sphi 0, %s239
      %s254 = sphi 0, %s240
      %s258 = sphi 0, %s258
      %s260 = sphi 0, %s258
      %s261 = sphi 0, %s260
      %s275 = sphi 0, %s261
      %s279 = sphi 0, %s279
      %s281 = sphi 0, %s279
      %s282 = sphi 0, %s281
      %s296 = sphi 0, %s282
      %s300 = sphi 0, %s300
      %s302 = sphi 0, %s300
      %s303 = sphi 0, %s302
      %s317 = sphi 0, %s303
      %s321 = sphi 0, %s321
      %s323 = sphi 0, %s321
      %s324 = sphi 0, %s323
      %s338 = sphi 0, %s324
      %s342 = sphi 0, %s342
      %s344 = sphi 0, %s342
      %s345 = sphi 0, %s344
      %s359 = sphi 0, %s345
      %s365 = sphi 0, %s367
      %s368 = sphi 0, %s365
      %s369 = sphi 0, %s368
      %s385 = sphi 0, %s369
      %s391 = sphi 0, %s393
      %s394 = sphi 0, %s391
      %s395 = sphi 0, %s394
      %s411 = sphi 0, %s395
    $region4: #{tpu_custom_call.1} parent=1 // loop_header_branch
      %38 = sbr.rel (%p36) target = $region8
    $region5: #{tpu_custom_call.1} parent=1 // loop_body
      %s40 = ssub.s32 %s35, 1
      %s41 = ssub.s32 %s35, 2
      %s42 = sadd.s32 %s35, 1
      %s43 = ssub.s32 %s35, %s42
      %p44 = scmp.eq.s32.totalorder %s43, 0
      %s46 = sadd.s32 %s45, 1
      %s47 = scalar_select %p44, %s45, %s46
      %p50 = pneg %p44
      %p51 = scmp.eq.s32.totalorder %s35, 1
      %p52 = por %p50, %p51
      %p53 = scmp.ne.s32.totalorder %s45, %s48
      %p54 = scmp.eq.s32.totalorder %s35, 0
      %p55 = por %p53, %p54
      %p56 = scmp.ne.s32.totalorder %s45, %s48
      %p57 = scmp.eq.s32.totalorder %s40, 1
      %p58 = por %p56, %p57
      %p59 = scmp.ne.s32.totalorder %s48, %s49
      %p60 = scmp.eq.s32.totalorder %s40, 0
      %p61 = por %p59, %p60
      %p62 = scmp.ne.s32.totalorder %s48, %s49
      %p63 = scmp.eq.s32.totalorder %s41, 1
      %p64 = por %p62, %p63
      %p66 = scmp.ne.s32.totalorder %s49, %s65
      %p67 = scmp.eq.s32.totalorder %s41, 0
      %p68 = por %p66, %p67
      %s70 = sadd.s32 %s69, 1
      %p73 = scmp.eq.s32.totalorder %s35, 1
      %p74 = scmp.ne.s32.totalorder %s69, %s71
      %p75 = scmp.eq.s32.totalorder %s35, 0
      %p76 = por %p74, %p75
      %p77 = scmp.ne.s32.totalorder %s69, %s71
      %p78 = scmp.eq.s32.totalorder %s40, 1
      %p79 = por %p77, %p78
      %p80 = scmp.ne.s32.totalorder %s71, %s72
      %p81 = scmp.eq.s32.totalorder %s40, 0
      %p82 = por %p80, %p81
      %p83 = scmp.ne.s32.totalorder %s71, %s72
      %p84 = scmp.eq.s32.totalorder %s41, 1
      %p85 = por %p83, %p84
      %p87 = scmp.ne.s32.totalorder %s72, %s86
      %p88 = scmp.eq.s32.totalorder %s41, 0
      %p89 = por %p87, %p88
      %s91 = sadd.s32 %s90, 1
      %p94 = scmp.eq.s32.totalorder %s35, 1
      %p95 = scmp.ne.s32.totalorder %s90, %s92
      %p96 = scmp.eq.s32.totalorder %s35, 0
      %p97 = por %p95, %p96
      %p98 = scmp.ne.s32.totalorder %s90, %s92
      %p99 = scmp.eq.s32.totalorder %s40, 1
      %p100 = por %p98, %p99
      %p101 = scmp.ne.s32.totalorder %s92, %s93
      %p102 = scmp.eq.s32.totalorder %s40, 0
      %p103 = por %p101, %p102
      %p104 = scmp.ne.s32.totalorder %s92, %s93
      %p105 = scmp.eq.s32.totalorder %s41, 1
      %p106 = por %p104, %p105
      %p108 = scmp.ne.s32.totalorder %s93, %s107
      %p109 = scmp.eq.s32.totalorder %s41, 0
      %p110 = por %p108, %p109
      %s112 = sadd.s32 %s111, 1
      %p115 = scmp.eq.s32.totalorder %s35, 1
      %p116 = scmp.ne.s32.totalorder %s111, %s113
      %p117 = scmp.eq.s32.totalorder %s35, 0
      %p118 = por %p116, %p117
      %p119 = scmp.ne.s32.totalorder %s111, %s113
      %p120 = scmp.eq.s32.totalorder %s40, 1
      %p121 = por %p119, %p120
      %p122 = scmp.ne.s32.totalorder %s113, %s114
      %p123 = scmp.eq.s32.totalorder %s40, 0
      %p124 = por %p122, %p123
      %p125 = scmp.ne.s32.totalorder %s113, %s114
      %p126 = scmp.eq.s32.totalorder %s41, 1
      %p127 = por %p125, %p126
      %p129 = scmp.ne.s32.totalorder %s114, %s128
      %p130 = scmp.eq.s32.totalorder %s41, 0
      %p131 = por %p129, %p130
      %s133 = sadd.s32 %s132, 1
      %p136 = scmp.eq.s32.totalorder %s35, 1
      %p137 = scmp.ne.s32.totalorder %s132, %s134
      %p138 = scmp.eq.s32.totalorder %s35, 0
      %p139 = por %p137, %p138
      %p140 = scmp.ne.s32.totalorder %s132, %s134
      %p141 = scmp.eq.s32.totalorder %s40, 1
      %p142 = por %p140, %p141
      %p143 = scmp.ne.s32.totalorder %s134, %s135
      %p144 = scmp.eq.s32.totalorder %s40, 0
      %p145 = por %p143, %p144
      %p146 = scmp.ne.s32.totalorder %s134, %s135
      %p147 = scmp.eq.s32.totalorder %s41, 1
      %p148 = por %p146, %p147
      %p150 = scmp.ne.s32.totalorder %s135, %s149
      %p151 = scmp.eq.s32.totalorder %s41, 0
      %p152 = por %p150, %p151
      %s154 = sadd.s32 %s153, 1
      %p157 = scmp.eq.s32.totalorder %s35, 1
      %p158 = scmp.ne.s32.totalorder %s153, %s155
      %p159 = scmp.eq.s32.totalorder %s35, 0
      %p160 = por %p158, %p159
      %p161 = scmp.ne.s32.totalorder %s153, %s155
      %p162 = scmp.eq.s32.totalorder %s40, 1
      %p163 = por %p161, %p162
      %p164 = scmp.ne.s32.totalorder %s155, %s156
      %p165 = scmp.eq.s32.totalorder %s40, 0
      %p166 = por %p164, %p165
      %p167 = scmp.ne.s32.totalorder %s155, %s156
      %p168 = scmp.eq.s32.totalorder %s41, 1
      %p169 = por %p167, %p168
      %p171 = scmp.ne.s32.totalorder %s156, %s170
      %p172 = scmp.eq.s32.totalorder %s41, 0
      %p173 = por %p171, %p172
      %s175 = sadd.s32 %s174, 1
      %p178 = scmp.eq.s32.totalorder %s35, 1
      %p179 = scmp.ne.s32.totalorder %s174, %s176
      %p180 = scmp.eq.s32.totalorder %s35, 0
      %p181 = por %p179, %p180
      %p182 = scmp.ne.s32.totalorder %s174, %s176
      %p183 = scmp.eq.s32.totalorder %s40, 1
      %p184 = por %p182, %p183
      %p185 = scmp.ne.s32.totalorder %s176, %s177
      %p186 = scmp.eq.s32.totalorder %s40, 0
      %p187 = por %p185, %p186
      %p188 = scmp.ne.s32.totalorder %s176, %s177
      %p189 = scmp.eq.s32.totalorder %s41, 1
      %p190 = por %p188, %p189
      %p192 = scmp.ne.s32.totalorder %s177, %s191
      %p193 = scmp.eq.s32.totalorder %s41, 0
      %p194 = por %p192, %p193
      %s196 = sadd.s32 %s195, 1
      %p199 = scmp.eq.s32.totalorder %s35, 1
      %p200 = scmp.ne.s32.totalorder %s195, %s197
      %p201 = scmp.eq.s32.totalorder %s35, 0
      %p202 = por %p200, %p201
      %p203 = scmp.ne.s32.totalorder %s195, %s197
      %p204 = scmp.eq.s32.totalorder %s40, 1
      %p205 = por %p203, %p204
      %p206 = scmp.ne.s32.totalorder %s197, %s198
      %p207 = scmp.eq.s32.totalorder %s40, 0
      %p208 = por %p206, %p207
      %p209 = scmp.ne.s32.totalorder %s197, %s198
      %p210 = scmp.eq.s32.totalorder %s41, 1
      %p211 = por %p209, %p210
      %p213 = scmp.ne.s32.totalorder %s198, %s212
      %p214 = scmp.eq.s32.totalorder %s41, 0
      %p215 = por %p213, %p214
      %s217 = sadd.s32 %s216, 1
      %p220 = scmp.eq.s32.totalorder %s35, 1
      %p221 = scmp.ne.s32.totalorder %s216, %s218
      %p222 = scmp.eq.s32.totalorder %s35, 0
      %p223 = por %p221, %p222
      %p224 = scmp.ne.s32.totalorder %s216, %s218
      %p225 = scmp.eq.s32.totalorder %s40, 1
      %p226 = por %p224, %p225
      %p227 = scmp.ne.s32.totalorder %s218, %s219
      %p228 = scmp.eq.s32.totalorder %s40, 0
      %p229 = por %p227, %p228
      %p230 = scmp.ne.s32.totalorder %s218, %s219
      %p231 = scmp.eq.s32.totalorder %s41, 1
      %p232 = por %p230, %p231
      %p234 = scmp.ne.s32.totalorder %s219, %s233
      %p235 = scmp.eq.s32.totalorder %s41, 0
      %p236 = por %p234, %p235
      %s238 = sadd.s32 %s237, 1
      %p241 = scmp.eq.s32.totalorder %s35, 1
      %p242 = scmp.ne.s32.totalorder %s237, %s239
      %p243 = scmp.eq.s32.totalorder %s35, 0
      %p244 = por %p242, %p243
      %p245 = scmp.ne.s32.totalorder %s237, %s239
      %p246 = scmp.eq.s32.totalorder %s40, 1
      %p247 = por %p245, %p246
      %p248 = scmp.ne.s32.totalorder %s239, %s240
      %p249 = scmp.eq.s32.totalorder %s40, 0
      %p250 = por %p248, %p249
      %p251 = scmp.ne.s32.totalorder %s239, %s240
      %p252 = scmp.eq.s32.totalorder %s41, 1
      %p253 = por %p251, %p252
      %p255 = scmp.ne.s32.totalorder %s240, %s254
      %p256 = scmp.eq.s32.totalorder %s41, 0
      %p257 = por %p255, %p256
      %s259 = sadd.s32 %s258, 1
      %p262 = scmp.eq.s32.totalorder %s35, 1
      %p263 = scmp.ne.s32.totalorder %s258, %s260
      %p264 = scmp.eq.s32.totalorder %s35, 0
      %p265 = por %p263, %p264
      %p266 = scmp.ne.s32.totalorder %s258, %s260
      %p267 = scmp.eq.s32.totalorder %s40, 1
      %p268 = por %p266, %p267
      %p269 = scmp.ne.s32.totalorder %s260, %s261
      %p270 = scmp.eq.s32.totalorder %s40, 0
      %p271 = por %p269, %p270
      %p272 = scmp.ne.s32.totalorder %s260, %s261
      %p273 = scmp.eq.s32.totalorder %s41, 1
      %p274 = por %p272, %p273
      %p276 = scmp.ne.s32.totalorder %s261, %s275
      %p277 = scmp.eq.s32.totalorder %s41, 0
      %p278 = por %p276, %p277
      %s280 = sadd.s32 %s279, 1
      %p283 = scmp.eq.s32.totalorder %s35, 1
      %p284 = scmp.ne.s32.totalorder %s279, %s281
      %p285 = scmp.eq.s32.totalorder %s35, 0
      %p286 = por %p284, %p285
      %p287 = scmp.ne.s32.totalorder %s279, %s281
      %p288 = scmp.eq.s32.totalorder %s40, 1
      %p289 = por %p287, %p288
      %p290 = scmp.ne.s32.totalorder %s281, %s282
      %p291 = scmp.eq.s32.totalorder %s40, 0
      %p292 = por %p290, %p291
      %p293 = scmp.ne.s32.totalorder %s281, %s282
      %p294 = scmp.eq.s32.totalorder %s41, 1
      %p295 = por %p293, %p294
      %p297 = scmp.ne.s32.totalorder %s282, %s296
      %p298 = scmp.eq.s32.totalorder %s41, 0
      %p299 = por %p297, %p298
      %s301 = sadd.s32 %s300, 1
      %p304 = scmp.eq.s32.totalorder %s35, 1
      %p305 = scmp.ne.s32.totalorder %s300, %s302
      %p306 = scmp.eq.s32.totalorder %s35, 0
      %p307 = por %p305, %p306
      %p308 = scmp.ne.s32.totalorder %s300, %s302
      %p309 = scmp.eq.s32.totalorder %s40, 1
      %p310 = por %p308, %p309
      %p311 = scmp.ne.s32.totalorder %s302, %s303
      %p312 = scmp.eq.s32.totalorder %s40, 0
      %p313 = por %p311, %p312
      %p314 = scmp.ne.s32.totalorder %s302, %s303
      %p315 = scmp.eq.s32.totalorder %s41, 1
      %p316 = por %p314, %p315
      %p318 = scmp.ne.s32.totalorder %s303, %s317
      %p319 = scmp.eq.s32.totalorder %s41, 0
      %p320 = por %p318, %p319
      %s322 = sadd.s32 %s321, 1
      %p325 = scmp.eq.s32.totalorder %s35, 1
      %p326 = scmp.ne.s32.totalorder %s321, %s323
      %p327 = scmp.eq.s32.totalorder %s35, 0
      %p328 = por %p326, %p327
      %p329 = scmp.ne.s32.totalorder %s321, %s323
      %p330 = scmp.eq.s32.totalorder %s40, 1
      %p331 = por %p329, %p330
      %p332 = scmp.ne.s32.totalorder %s323, %s324
      %p333 = scmp.eq.s32.totalorder %s40, 0
      %p334 = por %p332, %p333
      %p335 = scmp.ne.s32.totalorder %s323, %s324
      %p336 = scmp.eq.s32.totalorder %s41, 1
      %p337 = por %p335, %p336
      %p339 = scmp.ne.s32.totalorder %s324, %s338
      %p340 = scmp.eq.s32.totalorder %s41, 0
      %p341 = por %p339, %p340
      %s343 = sadd.s32 %s342, 1
      %p346 = scmp.eq.s32.totalorder %s35, 1
      %p347 = scmp.ne.s32.totalorder %s342, %s344
      %p348 = scmp.eq.s32.totalorder %s35, 0
      %p349 = por %p347, %p348
      %p350 = scmp.ne.s32.totalorder %s342, %s344
      %p351 = scmp.eq.s32.totalorder %s40, 1
      %p352 = por %p350, %p351
      %p353 = scmp.ne.s32.totalorder %s344, %s345
      %p354 = scmp.eq.s32.totalorder %s40, 0
      %p355 = por %p353, %p354
      %p356 = scmp.ne.s32.totalorder %s344, %s345
      %p357 = scmp.eq.s32.totalorder %s41, 1
      %p358 = por %p356, %p357
      %p360 = scmp.ne.s32.totalorder %s345, %s359
      %p361 = scmp.eq.s32.totalorder %s41, 0
      %p362 = por %p360, %p361
      %s363 = ssub.s32 %s35, %s42
      %p364 = scmp.eq.s32.totalorder %s363, 0
      %s366 = sadd.s32 %s365, 1
      %s367 = scalar_select %p364, %s365, %s366
      %p370 = pneg %p364
      %p371 = scmp.eq.s32.totalorder %s35, 1
      %p372 = por %p370, %p371
      %p373 = scmp.ne.s32.totalorder %s365, %s368
      %p374 = scmp.eq.s32.totalorder %s35, 0
      %p375 = por %p373, %p374
      %p376 = scmp.ne.s32.totalorder %s365, %s368
      %p377 = scmp.eq.s32.totalorder %s40, 1
      %p378 = por %p376, %p377
      %p379 = scmp.ne.s32.totalorder %s368, %s369
      %p380 = scmp.eq.s32.totalorder %s40, 0
      %p381 = por %p379, %p380
      %p382 = scmp.ne.s32.totalorder %s368, %s369
      %p383 = scmp.eq.s32.totalorder %s41, 1
      %p384 = por %p382, %p383
      %p386 = scmp.ne.s32.totalorder %s369, %s385
      %p387 = scmp.eq.s32.totalorder %s41, 0
      %p388 = por %p386, %p387
      %s389 = ssub.s32 %s35, %s42
      %p390 = scmp.eq.s32.totalorder %s389, 0
      %s392 = sadd.s32 %s391, 1
      %s393 = scalar_select %p390, %s391, %s392
      %p396 = pneg %p390
      %p397 = scmp.eq.s32.totalorder %s35, 1
      %p398 = por %p396, %p397
      %p399 = scmp.ne.s32.totalorder %s391, %s394
      %p400 = scmp.eq.s32.totalorder %s35, 0
      %p401 = por %p399, %p400
      %p402 = scmp.ne.s32.totalorder %s391, %s394
      %p403 = scmp.eq.s32.totalorder %s40, 1
      %p404 = por %p402, %p403
      %p405 = scmp.ne.s32.totalorder %s394, %s395
      %p406 = scmp.eq.s32.totalorder %s40, 0
      %p407 = por %p405, %p406
      %p408 = scmp.ne.s32.totalorder %s394, %s395
      %p409 = scmp.eq.s32.totalorder %s41, 1
      %p410 = por %p408, %p409
      %p412 = scmp.ne.s32.totalorder %s395, %s411
      %p413 = scmp.eq.s32.totalorder %s41, 0
      %p414 = por %p412, %p413
      %p415 = scmp.le.s32.totalorder 1, %s35
      %p416 = scmp.lt.s32.totalorder %s35, 3
      %p417 = pnand %p415, %p416
      %p418 = pneg %p417
      // Predicated region
      $region9: #{tpu_custom_call.1} parent=5 // pred_check
        _
      $region10: #{tpu_custom_call.1} parent=5 // pred_check_branch
        %420 = sbr.rel (%p417) target = $region12
      $region11: #{tpu_custom_call.1} parent=5 // pred_region
        %s421 = ssub.s32 %s35, 1
        // Predicated region
        $region13: #{tpu_custom_call.1} parent=11 // pred_check
          %p422 = pneg %p82
        $region14: #{tpu_custom_call.1} parent=11 // pred_check_branch
          %424 = sbr.rel (%p422) target = $region16
        $region15: #{tpu_custom_call.1} parent=11 // pred_region
          %s426 = ssub.s32 4096, 4096
          %427 = vsyncadd [#allocation6], %s426
          %s428 = sshll.u32 [#allocation5], 4
          %s429 = int_to_ptr.vmem [resolvable:$true] %s428
          %434 = dma.hbm_to_vmem [thread:$0]  %s1, 4096, %s429, [#allocation6], 128, 128, 8
        $region16: #{tpu_custom_call.1} parent=11 // pred_fallthru
          _
        // Predicated region
        $region17: #{tpu_custom_call.1} parent=11 // pred_check
          %p435 = pneg %p103
        $region18: #{tpu_custom_call.1} parent=11 // pred_check_branch
          %437 = sbr.rel (%p435) target = $region20
        $region19: #{tpu_custom_call.1} parent=11 // pred_region
          _
        $region20: #{tpu_custom_call.1} parent=11 // pred_fallthru
          _
        // Predicated region
        $region21: #{tpu_custom_call.1} parent=11 // pred_check
          %p438 = pneg %p124
        $region22: #{tpu_custom_call.1} parent=11 // pred_check_branch
          %440 = sbr.rel (%p438) target = $region24
        $region23: #{tpu_custom_call.1} parent=11 // pred_region
          %s442 = ssub.s32 4096, 4096
          %443 = vsyncadd [#allocation6], %s442
          %s444 = sshll.u32 [#allocation7], 4
          %s445 = int_to_ptr.vmem [resolvable:$true] %s444
          %450 = dma.hbm_to_vmem [thread:$0]  %s3, 4096, %s445, [#allocation6], 128, 128, 8
        $region24: #{tpu_custom_call.1} parent=11 // pred_fallthru
          _
        // Predicated region
        $region25: #{tpu_custom_call.1} parent=11 // pred_check
          %p451 = pneg %p145
        $region26: #{tpu_custom_call.1} parent=11 // pred_check_branch
          %453 = sbr.rel (%p451) target = $region28
        $region27: #{tpu_custom_call.1} parent=11 // pred_region
          _
        $region28: #{tpu_custom_call.1} parent=11 // pred_fallthru
          _
        // Predicated region
        $region29: #{tpu_custom_call.1} parent=11 // pred_check
          %p454 = pneg %p166
        $region30: #{tpu_custom_call.1} parent=11 // pred_check_branch
          %456 = sbr.rel (%p454) target = $region32
        $region31: #{tpu_custom_call.1} parent=11 // pred_region
          _
        $region32: #{tpu_custom_call.1} parent=11 // pred_fallthru
          _
        // Predicated region
        $region33: #{tpu_custom_call.1} parent=11 // pred_check
          %p457 = pneg %p187
        $region34: #{tpu_custom_call.1} parent=11 // pred_check_branch
          %459 = sbr.rel (%p457) target = $region36
        $region35: #{tpu_custom_call.1} parent=11 // pred_region
          %s461 = ssub.s32 4096, 4096
          %462 = vsyncadd [#allocation9], %s461
          %s463 = sshll.u32 [#allocation8], 4
          %s464 = int_to_ptr.vmem [resolvable:$true] %s463
          %469 = dma.hbm_to_vmem [thread:$0]  %s6, 4096, %s464, [#allocation9], 128, 128, 8
        $region36: #{tpu_custom_call.1} parent=11 // pred_fallthru
          _
        // Predicated region
        $region37: #{tpu_custom_call.1} parent=11 // pred_check
          %p470 = pneg %p208
        $region38: #{tpu_custom_call.1} parent=11 // pred_check_branch
          %472 = sbr.rel (%p470) target = $region40
        $region39: #{tpu_custom_call.1} parent=11 // pred_region
          _
        $region40: #{tpu_custom_call.1} parent=11 // pred_fallthru
          _
        // Predicated region
        $region41: #{tpu_custom_call.1} parent=11 // pred_check
          %p473 = pneg %p229
        $region42: #{tpu_custom_call.1} parent=11 // pred_check_branch
          %475 = sbr.rel (%p473) target = $region44
        $region43: #{tpu_custom_call.1} parent=11 // pred_region
          _
        $region44: #{tpu_custom_call.1} parent=11 // pred_fallthru
          _
        // Predicated region
        $region45: #{tpu_custom_call.1} parent=11 // pred_check
          %p476 = pneg %p250
        $region46: #{tpu_custom_call.1} parent=11 // pred_check_branch
          %478 = sbr.rel (%p476) target = $region48
        $region47: #{tpu_custom_call.1} parent=11 // pred_region
          %s480 = ssub.s32 4096, 4096
          %481 = vsyncadd [#allocation9], %s480
          %s482 = sshll.u32 [#allocation10], 4
          %s483 = int_to_ptr.vmem [resolvable:$true] %s482
          %488 = dma.hbm_to_vmem [thread:$0]  %s9, 4096, %s483, [#allocation9], 128, 128, 8
        $region48: #{tpu_custom_call.1} parent=11 // pred_fallthru
          _
        // Predicated region
        $region49: #{tpu_custom_call.1} parent=11 // pred_check
          %p489 = pneg %p271
        $region50: #{tpu_custom_call.1} parent=11 // pred_check_branch
          %491 = sbr.rel (%p489) target = $region52
        $region51: #{tpu_custom_call.1} parent=11 // pred_region
          %s493 = ssub.s32 2048, 2048
          %494 = vsyncadd [#allocation12], %s493
          %s495 = sshll.u32 [#allocation11], 4
          %s496 = int_to_ptr.vmem [resolvable:$true] %s495
          %501 = dma.hbm_to_vmem [thread:$0]  %s10, 2048, %s496, [#allocation12], 64, 64, 4
        $region52: #{tpu_custom_call.1} parent=11 // pred_fallthru
          _
        // Predicated region
        $region53: #{tpu_custom_call.1} parent=11 // pred_check
          %p502 = pneg %p292
        $region54: #{tpu_custom_call.1} parent=11 // pred_check_branch
          %504 = sbr.rel (%p502) target = $region56
        $region55: #{tpu_custom_call.1} parent=11 // pred_region
          _
        $region56: #{tpu_custom_call.1} parent=11 // pred_fallthru
          _
        // Predicated region
        $region57: #{tpu_custom_call.1} parent=11 // pred_check
          %p505 = pneg %p313
        $region58: #{tpu_custom_call.1} parent=11 // pred_check_branch
          %507 = sbr.rel (%p505) target = $region60
        $region59: #{tpu_custom_call.1} parent=11 // pred_region
          _
        $region60: #{tpu_custom_call.1} parent=11 // pred_fallthru
          _
        // Predicated region
        $region61: #{tpu_custom_call.1} parent=11 // pred_check
          %p508 = pneg %p334
        $region62: #{tpu_custom_call.1} parent=11 // pred_check_branch
          %510 = sbr.rel (%p508) target = $region64
        $region63: #{tpu_custom_call.1} parent=11 // pred_region
          %s512 = ssub.s32 2048, 2048
          %513 = vsyncadd [#allocation12], %s512
          %s514 = sshll.u32 [#allocation13], 4
          %s515 = int_to_ptr.vmem [resolvable:$true] %s514
          %520 = dma.hbm_to_vmem [thread:$0]  %s13, 2048, %s515, [#allocation12], 128, 128, 8
        $region64: #{tpu_custom_call.1} parent=11 // pred_fallthru
          _
        // Predicated region
        $region65: #{tpu_custom_call.1} parent=11 // pred_check
          %p521 = pneg %p355
        $region66: #{tpu_custom_call.1} parent=11 // pred_check_branch
          %523 = sbr.rel (%p521) target = $region68
        $region67: #{tpu_custom_call.1} parent=11 // pred_region
          _
        $region68: #{tpu_custom_call.1} parent=11 // pred_fallthru
          _
      $region12: #{tpu_custom_call.1} parent=5 // pred_fallthru
        _
      %p524 = scmp.lt.s32.totalorder %s35, 2
      // Predicated region
      $region69: #{tpu_custom_call.1} parent=5 // pred_check
        %p525 = pneg %p524
      $region70: #{tpu_custom_call.1} parent=5 // pred_check_branch
        %527 = sbr.rel (%p525) target = $region72
      $region71: #{tpu_custom_call.1} parent=5 // pred_region
        // Predicated region
        $region73: #{tpu_custom_call.1} parent=71 // pred_check
          %p528 = pneg %p55
        $region74: #{tpu_custom_call.1} parent=71 // pred_check_branch
          %530 = sbr.rel (%p528) target = $region76
        $region75: #{tpu_custom_call.1} parent=71 // pred_region
          %s531 = sand.u32 %s45, 1
          %s532 = scalar_lea.sflag [#allocation3], %s531
          %s533 = sand.u32 %s45, 1
          %s534 = smul.addr %s533, 256
          %s535 = scalar_lea.vmem [#allocation2], %s534
          %s537 = ssub.s32 4096, 4096
          %538 = vsyncadd %s532, %s537
          %s539 = smul.addr %s35, 32
          %s540 = smul.addr %s539, 128
          %s541 = scalar_lea.hbm %s0, %s540
          %s542 = sshll.u32 %s535, 4
          %s543 = int_to_ptr.vmem [resolvable:$true] %s542
          %548 = dma.hbm_to_vmem [thread:$0]  %s541, 4096, %s543, %s532, 256, 256, 16
        $region76: #{tpu_custom_call.1} parent=71 // pred_fallthru
          _
      $region72: #{tpu_custom_call.1} parent=5 // pred_fallthru
        _
      %p549 = scmp.le.s32.totalorder 1, %s35
      %p550 = scmp.lt.s32.totalorder %s35, 3
      %p551 = pnand %p549, %p550
      %p552 = pneg %p551
      // Predicated region
      $region77: #{tpu_custom_call.1} parent=5 // pred_check
        _
      $region78: #{tpu_custom_call.1} parent=5 // pred_check_branch
        %554 = sbr.rel (%p551) target = $region80
      $region79: #{tpu_custom_call.1} parent=5 // pred_region
        %s555 = ssub.s32 %s35, 1
        %s556 = sand.u32 %s48, 1
        %s557 = scalar_lea.sflag [#allocation3], %s556
        %s558 = sand.u32 %s48, 1
        %s559 = smul.addr %s558, 256
        %s560 = scalar_lea.vmem [#allocation2], %s559
        // Predicated region
        $region81: #{tpu_custom_call.1} parent=79 // pred_check
          %p561 = pneg %p61
        $region82: #{tpu_custom_call.1} parent=79 // pred_check_branch
          %563 = sbr.rel (%p561) target = $region84
        $region83: #{tpu_custom_call.1} parent=79 // pred_region
          %564 = dma.done %s557, 4096
        $region84: #{tpu_custom_call.1} parent=79 // pred_fallthru
          _
        // Predicated region
        $region85: #{tpu_custom_call.1} parent=79 // pred_check
          %p565 = pneg %p82
        $region86: #{tpu_custom_call.1} parent=79 // pred_check_branch
          %567 = sbr.rel (%p565) target = $region88
        $region87: #{tpu_custom_call.1} parent=79 // pred_region
          %568 = dma.done [#allocation6], 4096
        $region88: #{tpu_custom_call.1} parent=79 // pred_fallthru
          _
        // Predicated region
        $region89: #{tpu_custom_call.1} parent=79 // pred_check
          %p569 = pneg %p124
        $region90: #{tpu_custom_call.1} parent=79 // pred_check_branch
          %571 = sbr.rel (%p569) target = $region92
        $region91: #{tpu_custom_call.1} parent=79 // pred_region
          %572 = dma.done [#allocation6], 4096
        $region92: #{tpu_custom_call.1} parent=79 // pred_fallthru
          _
        // Predicated region
        $region93: #{tpu_custom_call.1} parent=79 // pred_check
          %p573 = pneg %p187
        $region94: #{tpu_custom_call.1} parent=79 // pred_check_branch
          %575 = sbr.rel (%p573) target = $region96
        $region95: #{tpu_custom_call.1} parent=79 // pred_region
          %576 = dma.done [#allocation9], 4096
        $region96: #{tpu_custom_call.1} parent=79 // pred_fallthru
          _
        // Predicated region
        $region97: #{tpu_custom_call.1} parent=79 // pred_check
          %p577 = pneg %p250
        $region98: #{tpu_custom_call.1} parent=79 // pred_check_branch
          %579 = sbr.rel (%p577) target = $region100
        $region99: #{tpu_custom_call.1} parent=79 // pred_region
          %580 = dma.done [#allocation9], 4096
        $region100: #{tpu_custom_call.1} parent=79 // pred_fallthru
          _
        // Predicated region
        $region101: #{tpu_custom_call.1} parent=79 // pred_check
          %p581 = pneg %p271
        $region102: #{tpu_custom_call.1} parent=79 // pred_check_branch
          %583 = sbr.rel (%p581) target = $region104
        $region103: #{tpu_custom_call.1} parent=79 // pred_region
          %584 = dma.done [#allocation12], 2048
        $region104: #{tpu_custom_call.1} parent=79 // pred_fallthru
          _
        // Predicated region
        $region105: #{tpu_custom_call.1} parent=79 // pred_check
          %p585 = pneg %p334
        $region106: #{tpu_custom_call.1} parent=79 // pred_check_branch
          %587 = sbr.rel (%p585) target = $region108
        $region107: #{tpu_custom_call.1} parent=79 // pred_region
          %588 = dma.done [#allocation12], 2048
        $region108: #{tpu_custom_call.1} parent=79 // pred_fallthru
          _
        %s589 = sand.u32 %s48, 1
        %s590 = scalar_lea.sflag [#allocation3], %s589
        %s591 = sand.u32 %s48, 1
        %s592 = smul.addr %s591, 256
        %s593 = scalar_lea.vmem [#allocation2], %s592
        %p594 = pneg %p61
        %p595 = pneg %p58
        %p596 = pneg %p82
        %p597 = pneg %p79
        %p598 = pneg %p103
        %p599 = pneg %p100
        %p600 = pneg %p124
        %p601 = pneg %p121
        %p602 = pneg %p145
        %p603 = pneg %p142
        %p604 = pneg %p166
        %p605 = pneg %p163
        %p606 = pneg %p187
        %p607 = pneg %p184
        %p608 = pneg %p208
        %p609 = pneg %p205
        %p610 = pneg %p229
        %p611 = pneg %p226
        %p612 = pneg %p250
        %p613 = pneg %p247
        %p614 = pneg %p271
        %p615 = pneg %p268
        %p616 = pneg %p292
        %p617 = pneg %p289
        %p618 = pneg %p313
        %p619 = pneg %p310
        %p620 = pneg %p334
        %p621 = pneg %p331
        %p622 = pneg %p355
        %p623 = pneg %p352
        %p624 = pneg %p381
        %p625 = pneg %p378
        %s626 = sand.u32 %s368, 1
        %s627 = scalar_lea.sflag [#allocation4], %s626
        %s628 = sand.u32 %s368, 1
        %s629 = smul.addr %s628, 256
        %s630 = scalar_lea.vmem [#allocation14], %s629
        %p631 = pneg %p407
        %p632 = pneg %p404
        %s633 = sand.u32 %s394, 1
        %s634 = scalar_lea.sflag [#allocation16], %s633
        %s635 = sand.u32 %s394, 1
        %s636 = smul.addr %s635, 256
        %s637 = scalar_lea.vmem [#allocation15], %s636
        %v639 = vld [vmem:[%s560] sm:$0xff]
        %v640 = vld [vmem:[%s560 + $0x8] sm:$0xff]
        %v641 = vld [vmem:[%s560 + $0x10] sm:$0xff]
        %v642 = vld [vmem:[%s560 + $0x18] sm:$0xff]
        %v643 = vld [vmem:[%s560 + $0x20] sm:$0xff]
        %v644 = vld [vmem:[%s560 + $0x28] sm:$0xff]
        %v645 = vld [vmem:[%s560 + $0x30] sm:$0xff]
        %v646 = vld [vmem:[%s560 + $0x38] sm:$0xff]
        %v647 = vld [vmem:[%s560 + $0x40] sm:$0xff]
        %v648 = vld [vmem:[%s560 + $0x48] sm:$0xff]
        %v649 = vld [vmem:[%s560 + $0x50] sm:$0xff]
        %v650 = vld [vmem:[%s560 + $0x58] sm:$0xff]
        %v651 = vld [vmem:[%s560 + $0x60] sm:$0xff]
        %v652 = vld [vmem:[%s560 + $0x68] sm:$0xff]
        %v653 = vld [vmem:[%s560 + $0x70] sm:$0xff]
        %v654 = vld [vmem:[%s560 + $0x78] sm:$0xff]
        %v655 = vld [vmem:[%s560 + $0x80] sm:$0xff]
        %v656 = vld [vmem:[%s560 + $0x88] sm:$0xff]
        %v657 = vld [vmem:[%s560 + $0x90] sm:$0xff]
        %v658 = vld [vmem:[%s560 + $0x98] sm:$0xff]
        %v659 = vld [vmem:[%s560 + $0xa0] sm:$0xff]
        %v660 = vld [vmem:[%s560 + $0xa8] sm:$0xff]
        %v661 = vld [vmem:[%s560 + $0xb0] sm:$0xff]
        %v662 = vld [vmem:[%s560 + $0xb8] sm:$0xff]
        %v663 = vld [vmem:[%s560 + $0xc0] sm:$0xff]
        %v664 = vld [vmem:[%s560 + $0xc8] sm:$0xff]
        %v665 = vld [vmem:[%s560 + $0xd0] sm:$0xff]
        %v666 = vld [vmem:[%s560 + $0xd8] sm:$0xff]
        %v667 = vld [vmem:[%s560 + $0xe0] sm:$0xff]
        %v668 = vld [vmem:[%s560 + $0xe8] sm:$0xff]
        %v669 = vld [vmem:[%s560 + $0xf0] sm:$0xff]
        %v670 = vld [vmem:[%s560 + $0xf8] sm:$0xff]
        %v671 = vpack.c.bf16 %v641, %v639
        %v672 = vpack.c.bf16 %v642, %v640
        %v673 = vpack.c.bf16 %v645, %v643
        %v674 = vpack.c.bf16 %v646, %v644
        %v675 = vpack.c.bf16 %v649, %v647
        %v676 = vpack.c.bf16 %v650, %v648
        %v677 = vpack.c.bf16 %v653, %v651
        %v678 = vpack.c.bf16 %v654, %v652
        %v679 = vpack.c.bf16 %v657, %v655
        %v680 = vpack.c.bf16 %v658, %v656
        %v681 = vpack.c.bf16 %v661, %v659
        %v682 = vpack.c.bf16 %v662, %v660
        %v683 = vpack.c.bf16 %v665, %v663
        %v684 = vpack.c.bf16 %v666, %v664
        %v685 = vpack.c.bf16 %v669, %v667
        %v686 = vpack.c.bf16 %v670, %v668
        %v687 = vld [vmem:[#allocation5] sm:$0xff]
        %v688 = vld [vmem:[#allocation5 + $0x8] sm:$0xff]
        %v689 = vld [vmem:[#allocation5 + $0x10] sm:$0xff]
        %v690 = vld [vmem:[#allocation5 + $0x18] sm:$0xff]
        %v691 = vld [vmem:[#allocation5 + $0x20] sm:$0xff]
        %v692 = vld [vmem:[#allocation5 + $0x28] sm:$0xff]
        %v693 = vld [vmem:[#allocation5 + $0x30] sm:$0xff]
        %v694 = vld [vmem:[#allocation5 + $0x38] sm:$0xff]
        %v695 = vld [vmem:[#allocation5 + $0x40] sm:$0xff]
        %v696 = vld [vmem:[#allocation5 + $0x48] sm:$0xff]
        %v697 = vld [vmem:[#allocation5 + $0x50] sm:$0xff]
        %v698 = vld [vmem:[#allocation5 + $0x58] sm:$0xff]
        %v699 = vld [vmem:[#allocation5 + $0x60] sm:$0xff]
        %v700 = vld [vmem:[#allocation5 + $0x68] sm:$0xff]
        %v701 = vld [vmem:[#allocation5 + $0x70] sm:$0xff]
        %v702 = vld [vmem:[#allocation5 + $0x78] sm:$0xff]
        %v703 = vld [vmem:[#allocation5 + $0x80] sm:$0xff]
        %v704 = vld [vmem:[#allocation5 + $0x88] sm:$0xff]
        %v705 = vld [vmem:[#allocation5 + $0x90] sm:$0xff]
        %v706 = vld [vmem:[#allocation5 + $0x98] sm:$0xff]
        %v707 = vld [vmem:[#allocation5 + $0xa0] sm:$0xff]
        %v708 = vld [vmem:[#allocation5 + $0xa8] sm:$0xff]
        %v709 = vld [vmem:[#allocation5 + $0xb0] sm:$0xff]
        %v710 = vld [vmem:[#allocation5 + $0xb8] sm:$0xff]
        %v711 = vld [vmem:[#allocation5 + $0xc0] sm:$0xff]
        %v712 = vld [vmem:[#allocation5 + $0xc8] sm:$0xff]
        %v713 = vld [vmem:[#allocation5 + $0xd0] sm:$0xff]
        %v714 = vld [vmem:[#allocation5 + $0xd8] sm:$0xff]
        %v715 = vld [vmem:[#allocation5 + $0xe0] sm:$0xff]
        %v716 = vld [vmem:[#allocation5 + $0xe8] sm:$0xff]
        %v717 = vld [vmem:[#allocation5 + $0xf0] sm:$0xff]
        %v718 = vld [vmem:[#allocation5 + $0xf8] sm:$0xff]
        %v719 = vld [vmem:[%s2] sm:$0x3]
        %v721 = vlaneseq
        %v722 = vshrl.u32 %v721, 7
        %v723 = vsub.s32 0, %v722
        %v724 = vrot.slane %v719, %v723
        %v725 = vlaneseq
        %v726 = vshrl.u32 %v725, 7
        %v727 = vsub.s32 1, %v726
        %v728 = vrot.slane %v719, %v727
        %v763 = vunpack.c.l.b16 %v687
        %v764 = vunpack.c.h.b16 %v687
        %v765 = vunpack.c.l.b16 %v688
        %v766 = vunpack.c.h.b16 %v688
        %v767 = vunpack.c.l.b16 %v689
        %v768 = vunpack.c.h.b16 %v689
        %v769 = vunpack.c.l.b16 %v690
        %v770 = vunpack.c.h.b16 %v690
        %v771 = vunpack.c.l.b16 %v691
        %v772 = vunpack.c.h.b16 %v691
        %v773 = vunpack.c.l.b16 %v692
        %v774 = vunpack.c.h.b16 %v692
        %v775 = vunpack.c.l.b16 %v693
        %v776 = vunpack.c.h.b16 %v693
        %v777 = vunpack.c.l.b16 %v694
        %v778 = vunpack.c.h.b16 %v694
        %v779 = vunpack.c.l.b16 %v695
        %v780 = vunpack.c.h.b16 %v695
        %v781 = vunpack.c.l.b16 %v696
        %v782 = vunpack.c.h.b16 %v696
        %v783 = vunpack.c.l.b16 %v697
        %v784 = vunpack.c.h.b16 %v697
        %v785 = vunpack.c.l.b16 %v698
        %v786 = vunpack.c.h.b16 %v698
        %v787 = vunpack.c.l.b16 %v699
        %v788 = vunpack.c.h.b16 %v699
        %v789 = vunpack.c.l.b16 %v700
        %v790 = vunpack.c.h.b16 %v700
        %v791 = vunpack.c.l.b16 %v701
        %v792 = vunpack.c.h.b16 %v701
        %v793 = vunpack.c.l.b16 %v702
        %v794 = vunpack.c.h.b16 %v702
        %v795 = vunpack.c.l.b16 %v703
        %v796 = vunpack.c.h.b16 %v703
        %v797 = vunpack.c.l.b16 %v704
        %v798 = vunpack.c.h.b16 %v704
        %v799 = vunpack.c.l.b16 %v705
        %v800 = vunpack.c.h.b16 %v705
        %v801 = vunpack.c.l.b16 %v706
        %v802 = vunpack.c.h.b16 %v706
        %v803 = vunpack.c.l.b16 %v707
        %v804 = vunpack.c.h.b16 %v707
        %v805 = vunpack.c.l.b16 %v708
        %v806 = vunpack.c.h.b16 %v708
        %v807 = vunpack.c.l.b16 %v709
        %v808 = vunpack.c.h.b16 %v709
        %v809 = vunpack.c.l.b16 %v710
        %v810 = vunpack.c.h.b16 %v710
        %v811 = vunpack.c.l.b16 %v711
        %v812 = vunpack.c.h.b16 %v711
        %v813 = vunpack.c.l.b16 %v712
        %v814 = vunpack.c.h.b16 %v712
        %v815 = vunpack.c.l.b16 %v713
        %v816 = vunpack.c.h.b16 %v713
        %v817 = vunpack.c.l.b16 %v714
        %v818 = vunpack.c.h.b16 %v714
        %v819 = vunpack.c.l.b16 %v715
        %v820 = vunpack.c.h.b16 %v715
        %v821 = vunpack.c.l.b16 %v716
        %v822 = vunpack.c.h.b16 %v716
        %v823 = vunpack.c.l.b16 %v717
        %v824 = vunpack.c.h.b16 %v717
        %v825 = vunpack.c.l.b16 %v718
        %v826 = vunpack.c.h.b16 %v718
        %v827 = vpack.c.b16 %v765, %v763
        %v828 = vpack.c.b16 %v766, %v764
        %v829 = vpack.c.b16 %v769, %v767
        %v830 = vpack.c.b16 %v770, %v768
        %v831 = vpack.c.b16 %v773, %v771
        %v832 = vpack.c.b16 %v774, %v772
        %v833 = vpack.c.b16 %v777, %v775
        %v834 = vpack.c.b16 %v778, %v776
        %v835 = vpack.c.b16 %v781, %v779
        %v836 = vpack.c.b16 %v782, %v780
        %v837 = vpack.c.b16 %v785, %v783
        %v838 = vpack.c.b16 %v786, %v784
        %v839 = vpack.c.b16 %v789, %v787
        %v840 = vpack.c.b16 %v790, %v788
        %v841 = vpack.c.b16 %v793, %v791
        %v842 = vpack.c.b16 %v794, %v792
        %v843 = vpack.c.b16 %v797, %v795
        %v844 = vpack.c.b16 %v798, %v796
        %v845 = vpack.c.b16 %v801, %v799
        %v846 = vpack.c.b16 %v802, %v800
        %v847 = vpack.c.b16 %v805, %v803
        %v848 = vpack.c.b16 %v806, %v804
        %v849 = vpack.c.b16 %v809, %v807
        %v850 = vpack.c.b16 %v810, %v808
        %v851 = vpack.c.b16 %v813, %v811
        %v852 = vpack.c.b16 %v814, %v812
        %v853 = vpack.c.b16 %v817, %v815
        %v854 = vpack.c.b16 %v818, %v816
        %v855 = vpack.c.b16 %v821, %v819
        %v856 = vpack.c.b16 %v822, %v820
        %v857 = vpack.c.b16 %v825, %v823
        %v858 = vpack.c.b16 %v826, %v824
        %891 = vmatprep.subr.bf16.mxu0 %v828
        %892 = vmatpush1.bf16.msra.mxu0 %v827
        %893 = vmatprep.subr.bf16.mxu0 %v830
        %894 = vmatpush1.bf16.msra.mxu0 %v829
        %895 = vmatprep.subr.bf16.mxu0 %v832
        %896 = vmatpush1.bf16.msra.mxu0 %v831
        %897 = vmatprep.subr.bf16.mxu0 %v834
        %898 = vmatpush1.bf16.msra.mxu0 %v833
        %899 = vmatprep.subr.bf16.mxu0 %v836
        %900 = vmatpush1.bf16.msra.mxu0 %v835
        %901 = vmatprep.subr.bf16.mxu0 %v838
        %902 = vmatpush1.bf16.msra.mxu0 %v837
        %903 = vmatprep.subr.bf16.mxu0 %v840
        %904 = vmatpush1.bf16.msra.mxu0 %v839
        %905 = vmatprep.subr.bf16.mxu0 %v842
        %906 = vmatpush1.bf16.msra.mxu0 %v841
        %907 = vmatprep.subr.bf16.mxu0 %v844
        %908 = vmatpush1.bf16.msra.mxu0 %v843
        %909 = vmatprep.subr.bf16.mxu0 %v846
        %910 = vmatpush1.bf16.msra.mxu0 %v845
        %911 = vmatprep.subr.bf16.mxu0 %v848
        %912 = vmatpush1.bf16.msra.mxu0 %v847
        %913 = vmatprep.subr.bf16.mxu0 %v850
        %914 = vmatpush1.bf16.msra.mxu0 %v849
        %915 = vmatprep.subr.bf16.mxu0 %v852
        %916 = vmatpush1.bf16.msra.mxu0 %v851
        %917 = vmatprep.subr.bf16.mxu0 %v854
        %918 = vmatpush1.bf16.msra.mxu0 %v853
        %919 = vmatprep.subr.bf16.mxu0 %v856
        %920 = vmatpush1.bf16.msra.mxu0 %v855
        %921 = vmatprep.subr.bf16.mxu0 %v858
        %922 = vmatpush1.bf16.msra.mxu0 %v857
        %923 = vmatprep.mubr.bf16.mxu0 %v672
        %924 = vmatmul.mubr.bf16.gmra.mrb[0].mxu0 %v671
        %v925 = vpop.f32.mrb[0].mxu0
        %v926 = vadd.f32 %v724, %v925
        %v927 = vpop.f32.mrb[0].mxu0
        %v928 = vadd.f32 %v728, %v927
        %v929 = vpop.f32.mrb[0].mxu0
        %v930 = vadd.f32 %v724, %v929
        %v931 = vpop.f32.mrb[0].mxu0
        %v932 = vadd.f32 %v728, %v931
        %933 = vmatprep.mubr.bf16.mxu0 %v674
        %934 = vmatmul.mubr.bf16.gmra.mrb[0].mxu0 %v673
        %v935 = vpop.f32.mrb[0].mxu0
        %v936 = vadd.f32 %v724, %v935
        %v937 = vpop.f32.mrb[0].mxu0
        %v938 = vadd.f32 %v728, %v937
        %v939 = vpop.f32.mrb[0].mxu0
        %v940 = vadd.f32 %v724, %v939
        %v941 = vpop.f32.mrb[0].mxu0
        %v942 = vadd.f32 %v728, %v941
        %943 = vmatprep.mubr.bf16.mxu0 %v676
        %944 = vmatmul.mubr.bf16.gmra.mrb[0].mxu0 %v675
        %v945 = vpop.f32.mrb[0].mxu0
        %v946 = vadd.f32 %v724, %v945
        %v947 = vpop.f32.mrb[0].mxu0
        %v948 = vadd.f32 %v728, %v947
        %v949 = vpop.f32.mrb[0].mxu0
        %v950 = vadd.f32 %v724, %v949
        %v951 = vpop.f32.mrb[0].mxu0
        %v952 = vadd.f32 %v728, %v951
        %953 = vmatprep.mubr.bf16.mxu0 %v678
        %954 = vmatmul.mubr.bf16.gmra.mrb[0].mxu0 %v677
        %v955 = vpop.f32.mrb[0].mxu0
        %v956 = vadd.f32 %v724, %v955
        %v957 = vpop.f32.mrb[0].mxu0
        %v958 = vadd.f32 %v728, %v957
        %v959 = vpop.f32.mrb[0].mxu0
        %v960 = vadd.f32 %v724, %v959
        %v961 = vpop.f32.mrb[0].mxu0
        %v962 = vadd.f32 %v728, %v961
        %963 = vmatprep.mubr.bf16.mxu0 %v680
        %964 = vmatmul.mubr.bf16.gmra.mrb[0].mxu0 %v679
        %v965 = vpop.f32.mrb[0].mxu0
        %v966 = vadd.f32 %v724, %v965
        %v967 = vpop.f32.mrb[0].mxu0
        %v968 = vadd.f32 %v728, %v967
        %v969 = vpop.f32.mrb[0].mxu0
        %v970 = vadd.f32 %v724, %v969
        %v971 = vpop.f32.mrb[0].mxu0
        %v972 = vadd.f32 %v728, %v971
        %973 = vmatprep.mubr.bf16.mxu0 %v682
        %974 = vmatmul.mubr.bf16.gmra.mrb[0].mxu0 %v681
        %v975 = vpop.f32.mrb[0].mxu0
        %v976 = vadd.f32 %v724, %v975
        %v977 = vpop.f32.mrb[0].mxu0
        %v978 = vadd.f32 %v728, %v977
        %v979 = vpop.f32.mrb[0].mxu0
        %v980 = vadd.f32 %v724, %v979
        %v981 = vpop.f32.mrb[0].mxu0
        %v982 = vadd.f32 %v728, %v981
        %983 = vmatprep.mubr.bf16.mxu0 %v684
        %984 = vmatmul.mubr.bf16.gmra.mrb[0].mxu0 %v683
        %v985 = vpop.f32.mrb[0].mxu0
        %v986 = vadd.f32 %v724, %v985
        %v987 = vpop.f32.mrb[0].mxu0
        %v988 = vadd.f32 %v728, %v987
        %v989 = vpop.f32.mrb[0].mxu0
        %v990 = vadd.f32 %v724, %v989
        %v991 = vpop.f32.mrb[0].mxu0
        %v992 = vadd.f32 %v728, %v991
        %993 = vmatprep.mubr.bf16.mxu0 %v686
        %994 = vmatmul.mubr.bf16.gmra.mrb[0].mxu0 %v685
        %v995 = vpop.f32.mrb[0].mxu0
        %v996 = vadd.f32 %v724, %v995
        %v997 = vpop.f32.mrb[0].mxu0
        %v998 = vadd.f32 %v728, %v997
        %v999 = vpop.f32.mrb[0].mxu0
        %v1000 = vadd.f32 %v724, %v999
        %v1001 = vpop.f32.mrb[0].mxu0
        %v1002 = vadd.f32 %v728, %v1001
        %1003 = vdwg.mxu0
        %v1004 = vmax.f32 %v926, 0.0
        %v1005 = vmax.f32 %v928, 0.0
        %v1006 = vmax.f32 %v930, 0.0
        %v1007 = vmax.f32 %v932, 0.0
        %v1008 = vmax.f32 %v936, 0.0
        %v1009 = vmax.f32 %v938, 0.0
        %v1010 = vmax.f32 %v940, 0.0
        %v1011 = vmax.f32 %v942, 0.0
        %v1012 = vmax.f32 %v946, 0.0
        %v1013 = vmax.f32 %v948, 0.0
        %v1014 = vmax.f32 %v950, 0.0
        %v1015 = vmax.f32 %v952, 0.0
        %v1016 = vmax.f32 %v956, 0.0
        %v1017 = vmax.f32 %v958, 0.0
        %v1018 = vmax.f32 %v960, 0.0
        %v1019 = vmax.f32 %v962, 0.0
        %v1020 = vmax.f32 %v966, 0.0
        %v1021 = vmax.f32 %v968, 0.0
        %v1022 = vmax.f32 %v970, 0.0
        %v1023 = vmax.f32 %v972, 0.0
        %v1024 = vmax.f32 %v976, 0.0
        %v1025 = vmax.f32 %v978, 0.0
        %v1026 = vmax.f32 %v980, 0.0
        %v1027 = vmax.f32 %v982, 0.0
        %v1028 = vmax.f32 %v986, 0.0
        %v1029 = vmax.f32 %v988, 0.0
        %v1030 = vmax.f32 %v990, 0.0
        %v1031 = vmax.f32 %v992, 0.0
        %v1032 = vmax.f32 %v996, 0.0
        %v1033 = vmax.f32 %v998, 0.0
        %v1034 = vmax.f32 %v1000, 0.0
        %v1035 = vmax.f32 %v1002, 0.0
        %v1036 = vpack.c.bf16 %v1006, %v1004
        %v1037 = vpack.c.bf16 %v1007, %v1005
        %v1038 = vpack.c.bf16 %v1010, %v1008
        %v1039 = vpack.c.bf16 %v1011, %v1009
        %v1040 = vpack.c.bf16 %v1014, %v1012
        %v1041 = vpack.c.bf16 %v1015, %v1013
        %v1042 = vpack.c.bf16 %v1018, %v1016
        %v1043 = vpack.c.bf16 %v1019, %v1017
        %v1044 = vpack.c.bf16 %v1022, %v1020
        %v1045 = vpack.c.bf16 %v1023, %v1021
        %v1046 = vpack.c.bf16 %v1026, %v1024
        %v1047 = vpack.c.bf16 %v1027, %v1025
        %v1048 = vpack.c.bf16 %v1030, %v1028
        %v1049 = vpack.c.bf16 %v1031, %v1029
        %v1050 = vpack.c.bf16 %v1034, %v1032
        %v1051 = vpack.c.bf16 %v1035, %v1033
        %v1052 = vld [vmem:[#allocation7] sm:$0xff]
        %v1053 = vld [vmem:[#allocation7 + $0x8] sm:$0xff]
        %v1054 = vld [vmem:[#allocation7 + $0x10] sm:$0xff]
        %v1055 = vld [vmem:[#allocation7 + $0x18] sm:$0xff]
        %v1056 = vld [vmem:[#allocation7 + $0x20] sm:$0xff]
        %v1057 = vld [vmem:[#allocation7 + $0x28] sm:$0xff]
        %v1058 = vld [vmem:[#allocation7 + $0x30] sm:$0xff]
        %v1059 = vld [vmem:[#allocation7 + $0x38] sm:$0xff]
        %v1060 = vld [vmem:[#allocation7 + $0x40] sm:$0xff]
        %v1061 = vld [vmem:[#allocation7 + $0x48] sm:$0xff]
        %v1062 = vld [vmem:[#allocation7 + $0x50] sm:$0xff]
        %v1063 = vld [vmem:[#allocation7 + $0x58] sm:$0xff]
        %v1064 = vld [vmem:[#allocation7 + $0x60] sm:$0xff]
        %v1065 = vld [vmem:[#allocation7 + $0x68] sm:$0xff]
        %v1066 = vld [vmem:[#allocation7 + $0x70] sm:$0xff]
        %v1067 = vld [vmem:[#allocation7 + $0x78] sm:$0xff]
        %v1068 = vld [vmem:[#allocation7 + $0x80] sm:$0xff]
        %v1069 = vld [vmem:[#allocation7 + $0x88] sm:$0xff]
        %v1070 = vld [vmem:[#allocation7 + $0x90] sm:$0xff]
        %v1071 = vld [vmem:[#allocation7 + $0x98] sm:$0xff]
        %v1072 = vld [vmem:[#allocation7 + $0xa0] sm:$0xff]
        %v1073 = vld [vmem:[#allocation7 + $0xa8] sm:$0xff]
        %v1074 = vld [vmem:[#allocation7 + $0xb0] sm:$0xff]
        %v1075 = vld [vmem:[#allocation7 + $0xb8] sm:$0xff]
        %v1076 = vld [vmem:[#allocation7 + $0xc0] sm:$0xff]
        %v1077 = vld [vmem:[#allocation7 + $0xc8] sm:$0xff]
        %v1078 = vld [vmem:[#allocation7 + $0xd0] sm:$0xff]
        %v1079 = vld [vmem:[#allocation7 + $0xd8] sm:$0xff]
        %v1080 = vld [vmem:[#allocation7 + $0xe0] sm:$0xff]
        %v1081 = vld [vmem:[#allocation7 + $0xe8] sm:$0xff]
        %v1082 = vld [vmem:[#allocation7 + $0xf0] sm:$0xff]
        %v1083 = vld [vmem:[#allocation7 + $0xf8] sm:$0xff]
        %v1116 = vunpack.c.l.b16 %v1052
        %v1117 = vunpack.c.h.b16 %v1052
        %v1118 = vunpack.c.l.b16 %v1053
        %v1119 = vunpack.c.h.b16 %v1053
        %v1120 = vunpack.c.l.b16 %v1054
        %v1121 = vunpack.c.h.b16 %v1054
        %v1122 = vunpack.c.l.b16 %v1055
        %v1123 = vunpack.c.h.b16 %v1055
        %v1124 = vunpack.c.l.b16 %v1056
        %v1125 = vunpack.c.h.b16 %v1056
        %v1126 = vunpack.c.l.b16 %v1057
        %v1127 = vunpack.c.h.b16 %v1057
        %v1128 = vunpack.c.l.b16 %v1058
        %v1129 = vunpack.c.h.b16 %v1058
        %v1130 = vunpack.c.l.b16 %v1059
        %v1131 = vunpack.c.h.b16 %v1059
        %v1132 = vunpack.c.l.b16 %v1060
        %v1133 = vunpack.c.h.b16 %v1060
        %v1134 = vunpack.c.l.b16 %v1061
        %v1135 = vunpack.c.h.b16 %v1061
        %v1136 = vunpack.c.l.b16 %v1062
        %v1137 = vunpack.c.h.b16 %v1062
        %v1138 = vunpack.c.l.b16 %v1063
        %v1139 = vunpack.c.h.b16 %v1063
        %v1140 = vunpack.c.l.b16 %v1064
        %v1141 = vunpack.c.h.b16 %v1064
        %v1142 = vunpack.c.l.b16 %v1065
        %v1143 = vunpack.c.h.b16 %v1065
        %v1144 = vunpack.c.l.b16 %v1066
        %v1145 = vunpack.c.h.b16 %v1066
        %v1146 = vunpack.c.l.b16 %v1067
        %v1147 = vunpack.c.h.b16 %v1067
        %v1148 = vunpack.c.l.b16 %v1068
        %v1149 = vunpack.c.h.b16 %v1068
        %v1150 = vunpack.c.l.b16 %v1069
        %v1151 = vunpack.c.h.b16 %v1069
        %v1152 = vunpack.c.l.b16 %v1070
        %v1153 = vunpack.c.h.b16 %v1070
        %v1154 = vunpack.c.l.b16 %v1071
        %v1155 = vunpack.c.h.b16 %v1071
        %v1156 = vunpack.c.l.b16 %v1072
        %v1157 = vunpack.c.h.b16 %v1072
        %v1158 = vunpack.c.l.b16 %v1073
        %v1159 = vunpack.c.h.b16 %v1073
        %v1160 = vunpack.c.l.b16 %v1074
        %v1161 = vunpack.c.h.b16 %v1074
        %v1162 = vunpack.c.l.b16 %v1075
        %v1163 = vunpack.c.h.b16 %v1075
        %v1164 = vunpack.c.l.b16 %v1076
        %v1165 = vunpack.c.h.b16 %v1076
        %v1166 = vunpack.c.l.b16 %v1077
        %v1167 = vunpack.c.h.b16 %v1077
        %v1168 = vunpack.c.l.b16 %v1078
        %v1169 = vunpack.c.h.b16 %v1078
        %v1170 = vunpack.c.l.b16 %v1079
        %v1171 = vunpack.c.h.b16 %v1079
        %v1172 = vunpack.c.l.b16 %v1080
        %v1173 = vunpack.c.h.b16 %v1080
        %v1174 = vunpack.c.l.b16 %v1081
        %v1175 = vunpack.c.h.b16 %v1081
        %v1176 = vunpack.c.l.b16 %v1082
        %v1177 = vunpack.c.h.b16 %v1082
        %v1178 = vunpack.c.l.b16 %v1083
        %v1179 = vunpack.c.h.b16 %v1083
        %v1180 = vpack.c.b16 %v1118, %v1116
        %v1181 = vpack.c.b16 %v1119, %v1117
        %v1182 = vpack.c.b16 %v1122, %v1120
        %v1183 = vpack.c.b16 %v1123, %v1121
        %v1184 = vpack.c.b16 %v1126, %v1124
        %v1185 = vpack.c.b16 %v1127, %v1125
        %v1186 = vpack.c.b16 %v1130, %v1128
        %v1187 = vpack.c.b16 %v1131, %v1129
        %v1188 = vpack.c.b16 %v1134, %v1132
        %v1189 = vpack.c.b16 %v1135, %v1133
        %v1190 = vpack.c.b16 %v1138, %v1136
        %v1191 = vpack.c.b16 %v1139, %v1137
        %v1192 = vpack.c.b16 %v1142, %v1140
        %v1193 = vpack.c.b16 %v1143, %v1141
        %v1194 = vpack.c.b16 %v1146, %v1144
        %v1195 = vpack.c.b16 %v1147, %v1145
        %v1196 = vpack.c.b16 %v1150, %v1148
        %v1197 = vpack.c.b16 %v1151, %v1149
        %v1198 = vpack.c.b16 %v1154, %v1152
        %v1199 = vpack.c.b16 %v1155, %v1153
        %v1200 = vpack.c.b16 %v1158, %v1156
        %v1201 = vpack.c.b16 %v1159, %v1157
        %v1202 = vpack.c.b16 %v1162, %v1160
        %v1203 = vpack.c.b16 %v1163, %v1161
        %v1204 = vpack.c.b16 %v1166, %v1164
        %v1205 = vpack.c.b16 %v1167, %v1165
        %v1206 = vpack.c.b16 %v1170, %v1168
        %v1207 = vpack.c.b16 %v1171, %v1169
        %v1208 = vpack.c.b16 %v1174, %v1172
        %v1209 = vpack.c.b16 %v1175, %v1173
        %v1210 = vpack.c.b16 %v1178, %v1176
        %v1211 = vpack.c.b16 %v1179, %v1177
        %1244 = vmatprep.subr.bf16.mxu0 %v1181
        %1245 = vmatpush1.bf16.msra.mxu0 %v1180
        %1246 = vmatprep.subr.bf16.mxu0 %v1183
        %1247 = vmatpush1.bf16.msra.mxu0 %v1182
        %1248 = vmatprep.subr.bf16.mxu0 %v1185
        %1249 = vmatpush1.bf16.msra.mxu0 %v1184
        %1250 = vmatprep.subr.bf16.mxu0 %v1187
        %1251 = vmatpush1.bf16.msra.mxu0 %v1186
        %1252 = vmatprep.subr.bf16.mxu0 %v1189
        %1253 = vmatpush1.bf16.msra.mxu0 %v1188
        %1254 = vmatprep.subr.bf16.mxu0 %v1191
        %1255 = vmatpush1.bf16.msra.mxu0 %v1190
        %1256 = vmatprep.subr.bf16.mxu0 %v1193
        %1257 = vmatpush1.bf16.msra.mxu0 %v1192
        %1258 = vmatprep.subr.bf16.mxu0 %v1195
        %1259 = vmatpush1.bf16.msra.mxu0 %v1194
        %1260 = vmatprep.subr.bf16.mxu0 %v1197
        %1261 = vmatpush1.bf16.msra.mxu0 %v1196
        %1262 = vmatprep.subr.bf16.mxu0 %v1199
        %1263 = vmatpush1.bf16.msra.mxu0 %v1198
        %1264 = vmatprep.subr.bf16.mxu0 %v1201
        %1265 = vmatpush1.bf16.msra.mxu0 %v1200
        %1266 = vmatprep.subr.bf16.mxu0 %v1203
        %1267 = vmatpush1.bf16.msra.mxu0 %v1202
        %1268 = vmatprep.subr.bf16.mxu0 %v1205
        %1269 = vmatpush1.bf16.msra.mxu0 %v1204
        %1270 = vmatprep.subr.bf16.mxu0 %v1207
        %1271 = vmatpush1.bf16.msra.mxu0 %v1206
        %1272 = vmatprep.subr.bf16.mxu0 %v1209
        %1273 = vmatpush1.bf16.msra.mxu0 %v1208
        %1274 = vmatprep.subr.bf16.mxu0 %v1211
        %1275 = vmatpush1.bf16.msra.mxu0 %v1210
        %1276 = vmatprep.mubr.bf16.mxu0 %v1037
        %1277 = vmatmul.mubr.bf16.gmra.mrb[0].mxu0 %v1036
        %v1278 = vpop.f32.mrb[0].mxu0
        %v1279 = vadd.f32 0.0, %v1278
        %v1280 = vpop.f32.mrb[0].mxu0
        %v1281 = vadd.f32 0.0, %v1280
        %v1282 = vpop.f32.mrb[0].mxu0
        %v1283 = vadd.f32 0.0, %v1282
        %v1284 = vpop.f32.mrb[0].mxu0
        %v1285 = vadd.f32 0.0, %v1284
        %1286 = vmatprep.mubr.bf16.mxu0 %v1039
        %1287 = vmatmul.mubr.bf16.gmra.mrb[0].mxu0 %v1038
        %v1288 = vpop.f32.mrb[0].mxu0
        %v1289 = vadd.f32 0.0, %v1288
        %v1290 = vpop.f32.mrb[0].mxu0
        %v1291 = vadd.f32 0.0, %v1290
        %v1292 = vpop.f32.mrb[0].mxu0
        %v1293 = vadd.f32 0.0, %v1292
        %v1294 = vpop.f32.mrb[0].mxu0
        %v1295 = vadd.f32 0.0, %v1294
        %1296 = vmatprep.mubr.bf16.mxu0 %v1041
        %1297 = vmatmul.mubr.bf16.gmra.mrb[0].mxu0 %v1040
        %v1298 = vpop.f32.mrb[0].mxu0
        %v1299 = vadd.f32 0.0, %v1298
        %v1300 = vpop.f32.mrb[0].mxu0
        %v1301 = vadd.f32 0.0, %v1300
        %v1302 = vpop.f32.mrb[0].mxu0
        %v1303 = vadd.f32 0.0, %v1302
        %v1304 = vpop.f32.mrb[0].mxu0
        %v1305 = vadd.f32 0.0, %v1304
        %1306 = vmatprep.mubr.bf16.mxu0 %v1043
        %1307 = vmatmul.mubr.bf16.gmra.mrb[0].mxu0 %v1042
        %v1308 = vpop.f32.mrb[0].mxu0
        %v1309 = vadd.f32 0.0, %v1308
        %v1310 = vpop.f32.mrb[0].mxu0
        %v1311 = vadd.f32 0.0, %v1310
        %v1312 = vpop.f32.mrb[0].mxu0
        %v1313 = vadd.f32 0.0, %v1312
        %v1314 = vpop.f32.mrb[0].mxu0
        %v1315 = vadd.f32 0.0, %v1314
        %1316 = vmatprep.mubr.bf16.mxu0 %v1045
        %1317 = vmatmul.mubr.bf16.gmra.mrb[0].mxu0 %v1044
        %v1318 = vpop.f32.mrb[0].mxu0
        %v1319 = vadd.f32 0.0, %v1318
        %v1320 = vpop.f32.mrb[0].mxu0
        %v1321 = vadd.f32 0.0, %v1320
        %v1322 = vpop.f32.mrb[0].mxu0
        %v1323 = vadd.f32 0.0, %v1322
        %v1324 = vpop.f32.mrb[0].mxu0
        %v1325 = vadd.f32 0.0, %v1324
        %1326 = vmatprep.mubr.bf16.mxu0 %v1047
        %1327 = vmatmul.mubr.bf16.gmra.mrb[0].mxu0 %v1046
        %v1328 = vpop.f32.mrb[0].mxu0
        %v1329 = vadd.f32 0.0, %v1328
        %v1330 = vpop.f32.mrb[0].mxu0
        %v1331 = vadd.f32 0.0, %v1330
        %v1332 = vpop.f32.mrb[0].mxu0
        %v1333 = vadd.f32 0.0, %v1332
        %v1334 = vpop.f32.mrb[0].mxu0
        %v1335 = vadd.f32 0.0, %v1334
        %1336 = vmatprep.mubr.bf16.mxu0 %v1049
        %1337 = vmatmul.mubr.bf16.gmra.mrb[0].mxu0 %v1048
        %v1338 = vpop.f32.mrb[0].mxu0
        %v1339 = vadd.f32 0.0, %v1338
        %v1340 = vpop.f32.mrb[0].mxu0
        %v1341 = vadd.f32 0.0, %v1340
        %v1342 = vpop.f32.mrb[0].mxu0
        %v1343 = vadd.f32 0.0, %v1342
        %v1344 = vpop.f32.mrb[0].mxu0
        %v1345 = vadd.f32 0.0, %v1344
        %1346 = vmatprep.mubr.bf16.mxu0 %v1051
        %1347 = vmatmul.mubr.bf16.gmra.mrb[0].mxu0 %v1050
        %v1348 = vpop.f32.mrb[0].mxu0
        %v1349 = vadd.f32 0.0, %v1348
        %v1350 = vpop.f32.mrb[0].mxu0
        %v1351 = vadd.f32 0.0, %v1350
        %v1352 = vpop.f32.mrb[0].mxu0
        %v1353 = vadd.f32 0.0, %v1352
        %v1354 = vpop.f32.mrb[0].mxu0
        %v1355 = vadd.f32 0.0, %v1354
        %1356 = vdwg.mxu0
        %v1357 = vld [vmem:[%s4] sm:$0x3]
        %v1358 = vld [vmem:[%s5] sm:$0x3]
        %v1359 = vadd.f32 %v1279, %v1283
        %v1360 = vadd.f32 %v1359, %v1289
        %v1361 = vadd.f32 %v1360, %v1293
        %v1362 = vadd.f32 %v1361, %v1299
        %v1363 = vadd.f32 %v1362, %v1303
        %v1364 = vadd.f32 %v1363, %v1309
        %v1365 = vadd.f32 %v1364, %v1313
        %v1366 = vadd.f32 %v1365, %v1319
        %v1367 = vadd.f32 %v1366, %v1323
        %v1368 = vadd.f32 %v1367, %v1329
        %v1369 = vadd.f32 %v1368, %v1333
        %v1370 = vadd.f32 %v1369, %v1339
        %v1371 = vadd.f32 %v1370, %v1343
        %v1372 = vadd.f32 %v1371, %v1349
        %v1373 = vadd.f32 %v1372, %v1353
        %v1374 = vrot.slane %v1373, 4
        %v1375 = vadd.f32 %v1373, %v1374
        %v1376 = vrot.slane %v1375, 2
        %v1377 = vadd.f32 %v1375, %v1376
        %v1378 = vrot.slane %v1377, 1
        %v1379 = vadd.f32 %v1377, %v1378
        %v1380 = vadd.f32 %v1281, %v1285
        %v1381 = vadd.f32 %v1380, %v1291
        %v1382 = vadd.f32 %v1381, %v1295
        %v1383 = vadd.f32 %v1382, %v1301
        %v1384 = vadd.f32 %v1383, %v1305
        %v1385 = vadd.f32 %v1384, %v1311
        %v1386 = vadd.f32 %v1385, %v1315
        %v1387 = vadd.f32 %v1386, %v1321
        %v1388 = vadd.f32 %v1387, %v1325
        %v1389 = vadd.f32 %v1388, %v1331
        %v1390 = vadd.f32 %v1389, %v1335
        %v1391 = vadd.f32 %v1390, %v1341
        %v1392 = vadd.f32 %v1391, %v1345
        %v1393 = vadd.f32 %v1392, %v1351
        %v1394 = vadd.f32 %v1393, %v1355
        %v1395 = vrot.slane %v1394, 4
        %v1396 = vadd.f32 %v1394, %v1395
        %v1397 = vrot.slane %v1396, 2
        %v1398 = vadd.f32 %v1396, %v1397
        %v1399 = vrot.slane %v1398, 1
        %v1400 = vadd.f32 %v1398, %v1399
        %v1401 = vmul.f32 %v1379, 0.0078125
        %v1402 = vmul.f32 %v1400, 0.0078125
        %v1403 = vmul.f32 %v1279, %v1279
        %v1404 = vmul.f32 %v1281, %v1281
        %v1405 = vmul.f32 %v1283, %v1283
        %v1406 = vmul.f32 %v1285, %v1285
        %v1407 = vmul.f32 %v1289, %v1289
        %v1408 = vmul.f32 %v1291, %v1291
        %v1409 = vmul.f32 %v1293, %v1293
        %v1410 = vmul.f32 %v1295, %v1295
        %v1411 = vmul.f32 %v1299, %v1299
        %v1412 = vmul.f32 %v1301, %v1301
        %v1413 = vmul.f32 %v1303, %v1303
        %v1414 = vmul.f32 %v1305, %v1305
        %v1415 = vmul.f32 %v1309, %v1309
        %v1416 = vmul.f32 %v1311, %v1311
        %v1417 = vmul.f32 %v1313, %v1313
        %v1418 = vmul.f32 %v1315, %v1315
        %v1419 = vmul.f32 %v1319, %v1319
        %v1420 = vmul.f32 %v1321, %v1321
        %v1421 = vmul.f32 %v1323, %v1323
        %v1422 = vmul.f32 %v1325, %v1325
        %v1423 = vmul.f32 %v1329, %v1329
        %v1424 = vmul.f32 %v1331, %v1331
        %v1425 = vmul.f32 %v1333, %v1333
        %v1426 = vmul.f32 %v1335, %v1335
        %v1427 = vmul.f32 %v1339, %v1339
        %v1428 = vmul.f32 %v1341, %v1341
        %v1429 = vmul.f32 %v1343, %v1343
        %v1430 = vmul.f32 %v1345, %v1345
        %v1431 = vmul.f32 %v1349, %v1349
        %v1432 = vmul.f32 %v1351, %v1351
        %v1433 = vmul.f32 %v1353, %v1353
        %v1434 = vmul.f32 %v1355, %v1355
        %v1435 = vadd.f32 %v1403, %v1405
        %v1436 = vadd.f32 %v1435, %v1407
        %v1437 = vadd.f32 %v1436, %v1409
        %v1438 = vadd.f32 %v1437, %v1411
        %v1439 = vadd.f32 %v1438, %v1413
        %v1440 = vadd.f32 %v1439, %v1415
        %v1441 = vadd.f32 %v1440, %v1417
        %v1442 = vadd.f32 %v1441, %v1419
        %v1443 = vadd.f32 %v1442, %v1421
        %v1444 = vadd.f32 %v1443, %v1423
        %v1445 = vadd.f32 %v1444, %v1425
        %v1446 = vadd.f32 %v1445, %v1427
        %v1447 = vadd.f32 %v1446, %v1429
        %v1448 = vadd.f32 %v1447, %v1431
        %v1449 = vadd.f32 %v1448, %v1433
        %v1450 = vrot.slane %v1449, 4
        %v1451 = vadd.f32 %v1449, %v1450
        %v1452 = vrot.slane %v1451, 2
        %v1453 = vadd.f32 %v1451, %v1452
        %v1454 = vrot.slane %v1453, 1
        %v1455 = vadd.f32 %v1453, %v1454
        %v1456 = vadd.f32 %v1404, %v1406
        %v1457 = vadd.f32 %v1456, %v1408
        %v1458 = vadd.f32 %v1457, %v1410
        %v1459 = vadd.f32 %v1458, %v1412
        %v1460 = vadd.f32 %v1459, %v1414
        %v1461 = vadd.f32 %v1460, %v1416
        %v1462 = vadd.f32 %v1461, %v1418
        %v1463 = vadd.f32 %v1462, %v1420
        %v1464 = vadd.f32 %v1463, %v1422
        %v1465 = vadd.f32 %v1464, %v1424
        %v1466 = vadd.f32 %v1465, %v1426
        %v1467 = vadd.f32 %v1466, %v1428
        %v1468 = vadd.f32 %v1467, %v1430
        %v1469 = vadd.f32 %v1468, %v1432
        %v1470 = vadd.f32 %v1469, %v1434
        %v1471 = vrot.slane %v1470, 4
        %v1472 = vadd.f32 %v1470, %v1471
        %v1473 = vrot.slane %v1472, 2
        %v1474 = vadd.f32 %v1472, %v1473
        %v1475 = vrot.slane %v1474, 1
        %v1476 = vadd.f32 %v1474, %v1475
        %v1477 = vmul.f32 %v1455, 0.0078125
        %v1478 = vmul.f32 %v1476, 0.0078125
        %v1479 = vmul.f32 %v1401, %v1401
        %v1480 = vmul.f32 %v1402, %v1402
        %v1481 = vsub.f32 %v1477, %v1479
        %v1482 = vsub.f32 %v1478, %v1480
        %v1483 = vsub.f32 %v1279, %v1401
        %v1484 = vsub.f32 %v1281, %v1402
        %v1485 = vsub.f32 %v1283, %v1401
        %v1486 = vsub.f32 %v1285, %v1402
        %v1487 = vsub.f32 %v1289, %v1401
        %v1488 = vsub.f32 %v1291, %v1402
        %v1489 = vsub.f32 %v1293, %v1401
        %v1490 = vsub.f32 %v1295, %v1402
        %v1491 = vsub.f32 %v1299, %v1401
        %v1492 = vsub.f32 %v1301, %v1402
        %v1493 = vsub.f32 %v1303, %v1401
        %v1494 = vsub.f32 %v1305, %v1402
        %v1495 = vsub.f32 %v1309, %v1401
        %v1496 = vsub.f32 %v1311, %v1402
        %v1497 = vsub.f32 %v1313, %v1401
        %v1498 = vsub.f32 %v1315, %v1402
        %v1499 = vsub.f32 %v1319, %v1401
        %v1500 = vsub.f32 %v1321, %v1402
        %v1501 = vsub.f32 %v1323, %v1401
        %v1502 = vsub.f32 %v1325, %v1402
        %v1503 = vsub.f32 %v1329, %v1401
        %v1504 = vsub.f32 %v1331, %v1402
        %v1505 = vsub.f32 %v1333, %v1401
        %v1506 = vsub.f32 %v1335, %v1402
        %v1507 = vsub.f32 %v1339, %v1401
        %v1508 = vsub.f32 %v1341, %v1402
        %v1509 = vsub.f32 %v1343, %v1401
        %v1510 = vsub.f32 %v1345, %v1402
        %v1511 = vsub.f32 %v1349, %v1401
        %v1512 = vsub.f32 %v1351, %v1402
        %v1513 = vsub.f32 %v1353, %v1401
        %v1514 = vsub.f32 %v1355, %v1402
        %v1515 = vadd.f32 %v1481, 1e-05
        %v1516 = vadd.f32 %v1482, 1e-05
        %v1517 = vrsqrt.pop %v1515
        %v1518 = vrsqrt.pop %v1516
        %v1519 = vmul.f32 %v1483, %v1517
        %v1520 = vmul.f32 %v1484, %v1518
        %v1521 = vmul.f32 %v1485, %v1517
        %v1522 = vmul.f32 %v1486, %v1518
        %v1523 = vmul.f32 %v1487, %v1517
        %v1524 = vmul.f32 %v1488, %v1518
        %v1525 = vmul.f32 %v1489, %v1517
        %v1526 = vmul.f32 %v1490, %v1518
        %v1527 = vmul.f32 %v1491, %v1517
        %v1528 = vmul.f32 %v1492, %v1518
        %v1529 = vmul.f32 %v1493, %v1517
        %v1530 = vmul.f32 %v1494, %v1518
        %v1531 = vmul.f32 %v1495, %v1517
        %v1532 = vmul.f32 %v1496, %v1518
        %v1533 = vmul.f32 %v1497, %v1517
        %v1534 = vmul.f32 %v1498, %v1518
        %v1535 = vmul.f32 %v1499, %v1517
        %v1536 = vmul.f32 %v1500, %v1518
        %v1537 = vmul.f32 %v1501, %v1517
        %v1538 = vmul.f32 %v1502, %v1518
        %v1539 = vmul.f32 %v1503, %v1517
        %v1540 = vmul.f32 %v1504, %v1518
        %v1541 = vmul.f32 %v1505, %v1517
        %v1542 = vmul.f32 %v1506, %v1518
        %v1543 = vmul.f32 %v1507, %v1517
        %v1544 = vmul.f32 %v1508, %v1518
        %v1545 = vmul.f32 %v1509, %v1517
        %v1546 = vmul.f32 %v1510, %v1518
        %v1547 = vmul.f32 %v1511, %v1517
        %v1548 = vmul.f32 %v1512, %v1518
        %v1549 = vmul.f32 %v1513, %v1517
        %v1550 = vmul.f32 %v1514, %v1518
        %v1552 = vlaneseq
        %v1553 = vshrl.u32 %v1552, 7
        %v1554 = vsub.s32 0, %v1553
        %v1555 = vrot.slane %v1357, %v1554
        %v1556 = vlaneseq
        %v1557 = vshrl.u32 %v1556, 7
        %v1558 = vsub.s32 1, %v1557
        %v1559 = vrot.slane %v1357, %v1558
        %v1562 = vmul.f32 %v1519, %v1555
        %v1563 = vmul.f32 %v1520, %v1559
        %v1564 = vmul.f32 %v1521, %v1555
        %v1565 = vmul.f32 %v1522, %v1559
        %v1566 = vmul.f32 %v1523, %v1555
        %v1567 = vmul.f32 %v1524, %v1559
        %v1568 = vmul.f32 %v1525, %v1555
        %v1569 = vmul.f32 %v1526, %v1559
        %v1570 = vmul.f32 %v1527, %v1555
        %v1571 = vmul.f32 %v1528, %v1559
        %v1572 = vmul.f32 %v1529, %v1555
        %v1573 = vmul.f32 %v1530, %v1559
        %v1574 = vmul.f32 %v1531, %v1555
        %v1575 = vmul.f32 %v1532, %v1559
        %v1576 = vmul.f32 %v1533, %v1555
        %v1577 = vmul.f32 %v1534, %v1559
        %v1578 = vmul.f32 %v1535, %v1555
        %v1579 = vmul.f32 %v1536, %v1559
        %v1580 = vmul.f32 %v1537, %v1555
        %v1581 = vmul.f32 %v1538, %v1559
        %v1582 = vmul.f32 %v1539, %v1555
        %v1583 = vmul.f32 %v1540, %v1559
        %v1584 = vmul.f32 %v1541, %v1555
        %v1585 = vmul.f32 %v1542, %v1559
        %v1586 = vmul.f32 %v1543, %v1555
        %v1587 = vmul.f32 %v1544, %v1559
        %v1588 = vmul.f32 %v1545, %v1555
        %v1589 = vmul.f32 %v1546, %v1559
        %v1590 = vmul.f32 %v1547, %v1555
        %v1591 = vmul.f32 %v1548, %v1559
        %v1592 = vmul.f32 %v1549, %v1555
        %v1593 = vmul.f32 %v1550, %v1559
        %v1595 = vlaneseq
        %v1596 = vshrl.u32 %v1595, 7
        %v1597 = vsub.s32 0, %v1596
        %v1598 = vrot.slane %v1358, %v1597
        %v1599 = vlaneseq
        %v1600 = vshrl.u32 %v1599, 7
        %v1601 = vsub.s32 1, %v1600
        %v1602 = vrot.slane %v1358, %v1601
        %v1605 = vadd.f32 %v1562, %v1598
        %v1606 = vadd.f32 %v1563, %v1602
        %v1607 = vadd.f32 %v1564, %v1598
        %v1608 = vadd.f32 %v1565, %v1602
        %v1609 = vadd.f32 %v1566, %v1598
        %v1610 = vadd.f32 %v1567, %v1602
        %v1611 = vadd.f32 %v1568, %v1598
        %v1612 = vadd.f32 %v1569, %v1602
        %v1613 = vadd.f32 %v1570, %v1598
        %v1614 = vadd.f32 %v1571, %v1602
        %v1615 = vadd.f32 %v1572, %v1598
        %v1616 = vadd.f32 %v1573, %v1602
        %v1617 = vadd.f32 %v1574, %v1598
        %v1618 = vadd.f32 %v1575, %v1602
        %v1619 = vadd.f32 %v1576, %v1598
        %v1620 = vadd.f32 %v1577, %v1602
        %v1621 = vadd.f32 %v1578, %v1598
        %v1622 = vadd.f32 %v1579, %v1602
        %v1623 = vadd.f32 %v1580, %v1598
        %v1624 = vadd.f32 %v1581, %v1602
        %v1625 = vadd.f32 %v1582, %v1598
        %v1626 = vadd.f32 %v1583, %v1602
        %v1627 = vadd.f32 %v1584, %v1598
        %v1628 = vadd.f32 %v1585, %v1602
        %v1629 = vadd.f32 %v1586, %v1598
        %v1630 = vadd.f32 %v1587, %v1602
        %v1631 = vadd.f32 %v1588, %v1598
        %v1632 = vadd.f32 %v1589, %v1602
        %v1633 = vadd.f32 %v1590, %v1598
        %v1634 = vadd.f32 %v1591, %v1602
        %v1635 = vadd.f32 %v1592, %v1598
        %v1636 = vadd.f32 %v1593, %v1602
        %v1637 = vmax.f32 %v1605, 0.0
        %v1638 = vmax.f32 %v1606, 0.0
        %v1639 = vmax.f32 %v1607, 0.0
        %v1640 = vmax.f32 %v1608, 0.0
        %v1641 = vmax.f32 %v1609, 0.0
        %v1642 = vmax.f32 %v1610, 0.0
        %v1643 = vmax.f32 %v1611, 0.0
        %v1644 = vmax.f32 %v1612, 0.0
        %v1645 = vmax.f32 %v1613, 0.0
        %v1646 = vmax.f32 %v1614, 0.0
        %v1647 = vmax.f32 %v1615, 0.0
        %v1648 = vmax.f32 %v1616, 0.0
        %v1649 = vmax.f32 %v1617, 0.0
        %v1650 = vmax.f32 %v1618, 0.0
        %v1651 = vmax.f32 %v1619, 0.0
        %v1652 = vmax.f32 %v1620, 0.0
        %v1653 = vmax.f32 %v1621, 0.0
        %v1654 = vmax.f32 %v1622, 0.0
        %v1655 = vmax.f32 %v1623, 0.0
        %v1656 = vmax.f32 %v1624, 0.0
        %v1657 = vmax.f32 %v1625, 0.0
        %v1658 = vmax.f32 %v1626, 0.0
        %v1659 = vmax.f32 %v1627, 0.0
        %v1660 = vmax.f32 %v1628, 0.0
        %v1661 = vmax.f32 %v1629, 0.0
        %v1662 = vmax.f32 %v1630, 0.0
        %v1663 = vmax.f32 %v1631, 0.0
        %v1664 = vmax.f32 %v1632, 0.0
        %v1665 = vmax.f32 %v1633, 0.0
        %v1666 = vmax.f32 %v1634, 0.0
        %v1667 = vmax.f32 %v1635, 0.0
        %v1668 = vmax.f32 %v1636, 0.0
        %v1669 = vpack.c.bf16 %v1639, %v1637
        %v1670 = vpack.c.bf16 %v1640, %v1638
        %v1671 = vpack.c.bf16 %v1643, %v1641
        %v1672 = vpack.c.bf16 %v1644, %v1642
        %v1673 = vpack.c.bf16 %v1647, %v1645
        %v1674 = vpack.c.bf16 %v1648, %v1646
        %v1675 = vpack.c.bf16 %v1651, %v1649
        %v1676 = vpack.c.bf16 %v1652, %v1650
        %v1677 = vpack.c.bf16 %v1655, %v1653
        %v1678 = vpack.c.bf16 %v1656, %v1654
        %v1679 = vpack.c.bf16 %v1659, %v1657
        %v1680 = vpack.c.bf16 %v1660, %v1658
        %v1681 = vpack.c.bf16 %v1663, %v1661
        %v1682 = vpack.c.bf16 %v1664, %v1662
        %v1683 = vpack.c.bf16 %v1667, %v1665
        %v1684 = vpack.c.bf16 %v1668, %v1666
        %v1685 = vld [vmem:[#allocation8] sm:$0xff]
        %v1686 = vld [vmem:[#allocation8 + $0x8] sm:$0xff]
        %v1687 = vld [vmem:[#allocation8 + $0x10] sm:$0xff]
        %v1688 = vld [vmem:[#allocation8 + $0x18] sm:$0xff]
        %v1689 = vld [vmem:[#allocation8 + $0x20] sm:$0xff]
        %v1690 = vld [vmem:[#allocation8 + $0x28] sm:$0xff]
        %v1691 = vld [vmem:[#allocation8 + $0x30] sm:$0xff]
        %v1692 = vld [vmem:[#allocation8 + $0x38] sm:$0xff]
        %v1693 = vld [vmem:[#allocation8 + $0x40] sm:$0xff]
        %v1694 = vld [vmem:[#allocation8 + $0x48] sm:$0xff]
        %v1695 = vld [vmem:[#allocation8 + $0x50] sm:$0xff]
        %v1696 = vld [vmem:[#allocation8 + $0x58] sm:$0xff]
        %v1697 = vld [vmem:[#allocation8 + $0x60] sm:$0xff]
        %v1698 = vld [vmem:[#allocation8 + $0x68] sm:$0xff]
        %v1699 = vld [vmem:[#allocation8 + $0x70] sm:$0xff]
        %v1700 = vld [vmem:[#allocation8 + $0x78] sm:$0xff]
        %v1701 = vld [vmem:[#allocation8 + $0x80] sm:$0xff]
        %v1702 = vld [vmem:[#allocation8 + $0x88] sm:$0xff]
        %v1703 = vld [vmem:[#allocation8 + $0x90] sm:$0xff]
        %v1704 = vld [vmem:[#allocation8 + $0x98] sm:$0xff]
        %v1705 = vld [vmem:[#allocation8 + $0xa0] sm:$0xff]
        %v1706 = vld [vmem:[#allocation8 + $0xa8] sm:$0xff]
        %v1707 = vld [vmem:[#allocation8 + $0xb0] sm:$0xff]
        %v1708 = vld [vmem:[#allocation8 + $0xb8] sm:$0xff]
        %v1709 = vld [vmem:[#allocation8 + $0xc0] sm:$0xff]
        %v1710 = vld [vmem:[#allocation8 + $0xc8] sm:$0xff]
        %v1711 = vld [vmem:[#allocation8 + $0xd0] sm:$0xff]
        %v1712 = vld [vmem:[#allocation8 + $0xd8] sm:$0xff]
        %v1713 = vld [vmem:[#allocation8 + $0xe0] sm:$0xff]
        %v1714 = vld [vmem:[#allocation8 + $0xe8] sm:$0xff]
        %v1715 = vld [vmem:[#allocation8 + $0xf0] sm:$0xff]
        %v1716 = vld [vmem:[#allocation8 + $0xf8] sm:$0xff]
        %v1749 = vunpack.c.l.b16 %v1685
        %v1750 = vunpack.c.h.b16 %v1685
        %v1751 = vunpack.c.l.b16 %v1686
        %v1752 = vunpack.c.h.b16 %v1686
        %v1753 = vunpack.c.l.b16 %v1687
        %v1754 = vunpack.c.h.b16 %v1687
        %v1755 = vunpack.c.l.b16 %v1688
        %v1756 = vunpack.c.h.b16 %v1688
        %v1757 = vunpack.c.l.b16 %v1689
        %v1758 = vunpack.c.h.b16 %v1689
        %v1759 = vunpack.c.l.b16 %v1690
        %v1760 = vunpack.c.h.b16 %v1690
        %v1761 = vunpack.c.l.b16 %v1691
        %v1762 = vunpack.c.h.b16 %v1691
        %v1763 = vunpack.c.l.b16 %v1692
        %v1764 = vunpack.c.h.b16 %v1692
        %v1765 = vunpack.c.l.b16 %v1693
        %v1766 = vunpack.c.h.b16 %v1693
        %v1767 = vunpack.c.l.b16 %v1694
        %v1768 = vunpack.c.h.b16 %v1694
        %v1769 = vunpack.c.l.b16 %v1695
        %v1770 = vunpack.c.h.b16 %v1695
        %v1771 = vunpack.c.l.b16 %v1696
        %v1772 = vunpack.c.h.b16 %v1696
        %v1773 = vunpack.c.l.b16 %v1697
        %v1774 = vunpack.c.h.b16 %v1697
        %v1775 = vunpack.c.l.b16 %v1698
        %v1776 = vunpack.c.h.b16 %v1698
        %v1777 = vunpack.c.l.b16 %v1699
        %v1778 = vunpack.c.h.b16 %v1699
        %v1779 = vunpack.c.l.b16 %v1700
        %v1780 = vunpack.c.h.b16 %v1700
        %v1781 = vunpack.c.l.b16 %v1701
        %v1782 = vunpack.c.h.b16 %v1701
        %v1783 = vunpack.c.l.b16 %v1702
        %v1784 = vunpack.c.h.b16 %v1702
        %v1785 = vunpack.c.l.b16 %v1703
        %v1786 = vunpack.c.h.b16 %v1703
        %v1787 = vunpack.c.l.b16 %v1704
        %v1788 = vunpack.c.h.b16 %v1704
        %v1789 = vunpack.c.l.b16 %v1705
        %v1790 = vunpack.c.h.b16 %v1705
        %v1791 = vunpack.c.l.b16 %v1706
        %v1792 = vunpack.c.h.b16 %v1706
        %v1793 = vunpack.c.l.b16 %v1707
        %v1794 = vunpack.c.h.b16 %v1707
        %v1795 = vunpack.c.l.b16 %v1708
        %v1796 = vunpack.c.h.b16 %v1708
        %v1797 = vunpack.c.l.b16 %v1709
        %v1798 = vunpack.c.h.b16 %v1709
        %v1799 = vunpack.c.l.b16 %v1710
        %v1800 = vunpack.c.h.b16 %v1710
        %v1801 = vunpack.c.l.b16 %v1711
        %v1802 = vunpack.c.h.b16 %v1711
        %v1803 = vunpack.c.l.b16 %v1712
        %v1804 = vunpack.c.h.b16 %v1712
        %v1805 = vunpack.c.l.b16 %v1713
        %v1806 = vunpack.c.h.b16 %v1713
        %v1807 = vunpack.c.l.b16 %v1714
        %v1808 = vunpack.c.h.b16 %v1714
        %v1809 = vunpack.c.l.b16 %v1715
        %v1810 = vunpack.c.h.b16 %v1715
        %v1811 = vunpack.c.l.b16 %v1716
        %v1812 = vunpack.c.h.b16 %v1716
        %v1813 = vpack.c.b16 %v1751, %v1749
        %v1814 = vpack.c.b16 %v1752, %v1750
        %v1815 = vpack.c.b16 %v1755, %v1753
        %v1816 = vpack.c.b16 %v1756, %v1754
        %v1817 = vpack.c.b16 %v1759, %v1757
        %v1818 = vpack.c.b16 %v1760, %v1758
        %v1819 = vpack.c.b16 %v1763, %v1761
        %v1820 = vpack.c.b16 %v1764, %v1762
        %v1821 = vpack.c.b16 %v1767, %v1765
        %v1822 = vpack.c.b16 %v1768, %v1766
        %v1823 = vpack.c.b16 %v1771, %v1769
        %v1824 = vpack.c.b16 %v1772, %v1770
        %v1825 = vpack.c.b16 %v1775, %v1773
        %v1826 = vpack.c.b16 %v1776, %v1774
        %v1827 = vpack.c.b16 %v1779, %v1777
        %v1828 = vpack.c.b16 %v1780, %v1778
        %v1829 = vpack.c.b16 %v1783, %v1781
        %v1830 = vpack.c.b16 %v1784, %v1782
        %v1831 = vpack.c.b16 %v1787, %v1785
        %v1832 = vpack.c.b16 %v1788, %v1786
        %v1833 = vpack.c.b16 %v1791, %v1789
        %v1834 = vpack.c.b16 %v1792, %v1790
        %v1835 = vpack.c.b16 %v1795, %v1793
        %v1836 = vpack.c.b16 %v1796, %v1794
        %v1837 = vpack.c.b16 %v1799, %v1797
        %v1838 = vpack.c.b16 %v1800, %v1798
        %v1839 = vpack.c.b16 %v1803, %v1801
        %v1840 = vpack.c.b16 %v1804, %v1802
        %v1841 = vpack.c.b16 %v1807, %v1805
        %v1842 = vpack.c.b16 %v1808, %v1806
        %v1843 = vpack.c.b16 %v1811, %v1809
        %v1844 = vpack.c.b16 %v1812, %v1810
        %1877 = vmatprep.subr.bf16.mxu0 %v1814
        %1878 = vmatpush1.bf16.msra.mxu0 %v1813
        %1879 = vmatprep.subr.bf16.mxu0 %v1816
        %1880 = vmatpush1.bf16.msra.mxu0 %v1815
        %1881 = vmatprep.subr.bf16.mxu0 %v1818
        %1882 = vmatpush1.bf16.msra.mxu0 %v1817
        %1883 = vmatprep.subr.bf16.mxu0 %v1820
        %1884 = vmatpush1.bf16.msra.mxu0 %v1819
        %1885 = vmatprep.subr.bf16.mxu0 %v1822
        %1886 = vmatpush1.bf16.msra.mxu0 %v1821
        %1887 = vmatprep.subr.bf16.mxu0 %v1824
        %1888 = vmatpush1.bf16.msra.mxu0 %v1823
        %1889 = vmatprep.subr.bf16.mxu0 %v1826
        %1890 = vmatpush1.bf16.msra.mxu0 %v1825
        %1891 = vmatprep.subr.bf16.mxu0 %v1828
        %1892 = vmatpush1.bf16.msra.mxu0 %v1827
        %1893 = vmatprep.subr.bf16.mxu0 %v1830
        %1894 = vmatpush1.bf16.msra.mxu0 %v1829
        %1895 = vmatprep.subr.bf16.mxu0 %v1832
        %1896 = vmatpush1.bf16.msra.mxu0 %v1831
        %1897 = vmatprep.subr.bf16.mxu0 %v1834
        %1898 = vmatpush1.bf16.msra.mxu0 %v1833
        %1899 = vmatprep.subr.bf16.mxu0 %v1836
        %1900 = vmatpush1.bf16.msra.mxu0 %v1835
        %1901 = vmatprep.subr.bf16.mxu0 %v1838
        %1902 = vmatpush1.bf16.msra.mxu0 %v1837
        %1903 = vmatprep.subr.bf16.mxu0 %v1840
        %1904 = vmatpush1.bf16.msra.mxu0 %v1839
        %1905 = vmatprep.subr.bf16.mxu0 %v1842
        %1906 = vmatpush1.bf16.msra.mxu0 %v1841
        %1907 = vmatprep.subr.bf16.mxu0 %v1844
        %1908 = vmatpush1.bf16.msra.mxu0 %v1843
        %1909 = vmatprep.mubr.bf16.mxu0 %v1670
        %1910 = vmatmul.mubr.bf16.gmra.mrb[0].mxu0 %v1669
        %v1911 = vpop.f32.mrb[0].mxu0
        %v1912 = vadd.f32 0.0, %v1911
        %v1913 = vpop.f32.mrb[0].mxu0
        %v1914 = vadd.f32 0.0, %v1913
        %v1915 = vpop.f32.mrb[0].mxu0
        %v1916 = vadd.f32 0.0, %v1915
        %v1917 = vpop.f32.mrb[0].mxu0
        %v1918 = vadd.f32 0.0, %v1917
        %1919 = vmatprep.mubr.bf16.mxu0 %v1672
        %1920 = vmatmul.mubr.bf16.gmra.mrb[0].mxu0 %v1671
        %v1921 = vpop.f32.mrb[0].mxu0
        %v1922 = vadd.f32 0.0, %v1921
        %v1923 = vpop.f32.mrb[0].mxu0
        %v1924 = vadd.f32 0.0, %v1923
        %v1925 = vpop.f32.mrb[0].mxu0
        %v1926 = vadd.f32 0.0, %v1925
        %v1927 = vpop.f32.mrb[0].mxu0
        %v1928 = vadd.f32 0.0, %v1927
        %1929 = vmatprep.mubr.bf16.mxu0 %v1674
        %1930 = vmatmul.mubr.bf16.gmra.mrb[0].mxu0 %v1673
        %v1931 = vpop.f32.mrb[0].mxu0
        %v1932 = vadd.f32 0.0, %v1931
        %v1933 = vpop.f32.mrb[0].mxu0
        %v1934 = vadd.f32 0.0, %v1933
        %v1935 = vpop.f32.mrb[0].mxu0
        %v1936 = vadd.f32 0.0, %v1935
        %v1937 = vpop.f32.mrb[0].mxu0
        %v1938 = vadd.f32 0.0, %v1937
        %1939 = vmatprep.mubr.bf16.mxu0 %v1676
        %1940 = vmatmul.mubr.bf16.gmra.mrb[0].mxu0 %v1675
        %v1941 = vpop.f32.mrb[0].mxu0
        %v1942 = vadd.f32 0.0, %v1941
        %v1943 = vpop.f32.mrb[0].mxu0
        %v1944 = vadd.f32 0.0, %v1943
        %v1945 = vpop.f32.mrb[0].mxu0
        %v1946 = vadd.f32 0.0, %v1945
        %v1947 = vpop.f32.mrb[0].mxu0
        %v1948 = vadd.f32 0.0, %v1947
        %1949 = vmatprep.mubr.bf16.mxu0 %v1678
        %1950 = vmatmul.mubr.bf16.gmra.mrb[0].mxu0 %v1677
        %v1951 = vpop.f32.mrb[0].mxu0
        %v1952 = vadd.f32 0.0, %v1951
        %v1953 = vpop.f32.mrb[0].mxu0
        %v1954 = vadd.f32 0.0, %v1953
        %v1955 = vpop.f32.mrb[0].mxu0
        %v1956 = vadd.f32 0.0, %v1955
        %v1957 = vpop.f32.mrb[0].mxu0
        %v1958 = vadd.f32 0.0, %v1957
        %1959 = vmatprep.mubr.bf16.mxu0 %v1680
        %1960 = vmatmul.mubr.bf16.gmra.mrb[0].mxu0 %v1679
        %v1961 = vpop.f32.mrb[0].mxu0
        %v1962 = vadd.f32 0.0, %v1961
        %v1963 = vpop.f32.mrb[0].mxu0
        %v1964 = vadd.f32 0.0, %v1963
        %v1965 = vpop.f32.mrb[0].mxu0
        %v1966 = vadd.f32 0.0, %v1965
        %v1967 = vpop.f32.mrb[0].mxu0
        %v1968 = vadd.f32 0.0, %v1967
        %1969 = vmatprep.mubr.bf16.mxu0 %v1682
        %1970 = vmatmul.mubr.bf16.gmra.mrb[0].mxu0 %v1681
        %v1971 = vpop.f32.mrb[0].mxu0
        %v1972 = vadd.f32 0.0, %v1971
        %v1973 = vpop.f32.mrb[0].mxu0
        %v1974 = vadd.f32 0.0, %v1973
        %v1975 = vpop.f32.mrb[0].mxu0
        %v1976 = vadd.f32 0.0, %v1975
        %v1977 = vpop.f32.mrb[0].mxu0
        %v1978 = vadd.f32 0.0, %v1977
        %1979 = vmatprep.mubr.bf16.mxu0 %v1684
        %1980 = vmatmul.mubr.bf16.gmra.mrb[0].mxu0 %v1683
        %v1981 = vpop.f32.mrb[0].mxu0
        %v1982 = vadd.f32 0.0, %v1981
        %v1983 = vpop.f32.mrb[0].mxu0
        %v1984 = vadd.f32 0.0, %v1983
        %v1985 = vpop.f32.mrb[0].mxu0
        %v1986 = vadd.f32 0.0, %v1985
        %v1987 = vpop.f32.mrb[0].mxu0
        %v1988 = vadd.f32 0.0, %v1987
        %1989 = vdwg.mxu0
        %v1990 = vld [vmem:[%s7] sm:$0x3]
        %v1991 = vld [vmem:[%s8] sm:$0x3]
        %v1992 = vadd.f32 %v1912, %v1916
        %v1993 = vadd.f32 %v1992, %v1922
        %v1994 = vadd.f32 %v1993, %v1926
        %v1995 = vadd.f32 %v1994, %v1932
        %v1996 = vadd.f32 %v1995, %v1936
        %v1997 = vadd.f32 %v1996, %v1942
        %v1998 = vadd.f32 %v1997, %v1946
        %v1999 = vadd.f32 %v1998, %v1952
        %v2000 = vadd.f32 %v1999, %v1956
        %v2001 = vadd.f32 %v2000, %v1962
        %v2002 = vadd.f32 %v2001, %v1966
        %v2003 = vadd.f32 %v2002, %v1972
        %v2004 = vadd.f32 %v2003, %v1976
        %v2005 = vadd.f32 %v2004, %v1982
        %v2006 = vadd.f32 %v2005, %v1986
        %v2007 = vrot.slane %v2006, 4
        %v2008 = vadd.f32 %v2006, %v2007
        %v2009 = vrot.slane %v2008, 2
        %v2010 = vadd.f32 %v2008, %v2009
        %v2011 = vrot.slane %v2010, 1
        %v2012 = vadd.f32 %v2010, %v2011
        %v2013 = vadd.f32 %v1914, %v1918
        %v2014 = vadd.f32 %v2013, %v1924
        %v2015 = vadd.f32 %v2014, %v1928
        %v2016 = vadd.f32 %v2015, %v1934
        %v2017 = vadd.f32 %v2016, %v1938
        %v2018 = vadd.f32 %v2017, %v1944
        %v2019 = vadd.f32 %v2018, %v1948
        %v2020 = vadd.f32 %v2019, %v1954
        %v2021 = vadd.f32 %v2020, %v1958
        %v2022 = vadd.f32 %v2021, %v1964
        %v2023 = vadd.f32 %v2022, %v1968
        %v2024 = vadd.f32 %v2023, %v1974
        %v2025 = vadd.f32 %v2024, %v1978
        %v2026 = vadd.f32 %v2025, %v1984
        %v2027 = vadd.f32 %v2026, %v1988
        %v2028 = vrot.slane %v2027, 4
        %v2029 = vadd.f32 %v2027, %v2028
        %v2030 = vrot.slane %v2029, 2
        %v2031 = vadd.f32 %v2029, %v2030
        %v2032 = vrot.slane %v2031, 1
        %v2033 = vadd.f32 %v2031, %v2032
        %v2034 = vmul.f32 %v2012, 0.0078125
        %v2035 = vmul.f32 %v2033, 0.0078125
        %v2036 = vmul.f32 %v1912, %v1912
        %v2037 = vmul.f32 %v1914, %v1914
        %v2038 = vmul.f32 %v1916, %v1916
        %v2039 = vmul.f32 %v1918, %v1918
        %v2040 = vmul.f32 %v1922, %v1922
        %v2041 = vmul.f32 %v1924, %v1924
        %v2042 = vmul.f32 %v1926, %v1926
        %v2043 = vmul.f32 %v1928, %v1928
        %v2044 = vmul.f32 %v1932, %v1932
        %v2045 = vmul.f32 %v1934, %v1934
        %v2046 = vmul.f32 %v1936, %v1936
        %v2047 = vmul.f32 %v1938, %v1938
        %v2048 = vmul.f32 %v1942, %v1942
        %v2049 = vmul.f32 %v1944, %v1944
        %v2050 = vmul.f32 %v1946, %v1946
        %v2051 = vmul.f32 %v1948, %v1948
        %v2052 = vmul.f32 %v1952, %v1952
        %v2053 = vmul.f32 %v1954, %v1954
        %v2054 = vmul.f32 %v1956, %v1956
        %v2055 = vmul.f32 %v1958, %v1958
        %v2056 = vmul.f32 %v1962, %v1962
        %v2057 = vmul.f32 %v1964, %v1964
        %v2058 = vmul.f32 %v1966, %v1966
        %v2059 = vmul.f32 %v1968, %v1968
        %v2060 = vmul.f32 %v1972, %v1972
        %v2061 = vmul.f32 %v1974, %v1974
        %v2062 = vmul.f32 %v1976, %v1976
        %v2063 = vmul.f32 %v1978, %v1978
        %v2064 = vmul.f32 %v1982, %v1982
        %v2065 = vmul.f32 %v1984, %v1984
        %v2066 = vmul.f32 %v1986, %v1986
        %v2067 = vmul.f32 %v1988, %v1988
        %v2068 = vadd.f32 %v2036, %v2038
        %v2069 = vadd.f32 %v2068, %v2040
        %v2070 = vadd.f32 %v2069, %v2042
        %v2071 = vadd.f32 %v2070, %v2044
        %v2072 = vadd.f32 %v2071, %v2046
        %v2073 = vadd.f32 %v2072, %v2048
        %v2074 = vadd.f32 %v2073, %v2050
        %v2075 = vadd.f32 %v2074, %v2052
        %v2076 = vadd.f32 %v2075, %v2054
        %v2077 = vadd.f32 %v2076, %v2056
        %v2078 = vadd.f32 %v2077, %v2058
        %v2079 = vadd.f32 %v2078, %v2060
        %v2080 = vadd.f32 %v2079, %v2062
        %v2081 = vadd.f32 %v2080, %v2064
        %v2082 = vadd.f32 %v2081, %v2066
        %v2083 = vrot.slane %v2082, 4
        %v2084 = vadd.f32 %v2082, %v2083
        %v2085 = vrot.slane %v2084, 2
        %v2086 = vadd.f32 %v2084, %v2085
        %v2087 = vrot.slane %v2086, 1
        %v2088 = vadd.f32 %v2086, %v2087
        %v2089 = vadd.f32 %v2037, %v2039
        %v2090 = vadd.f32 %v2089, %v2041
        %v2091 = vadd.f32 %v2090, %v2043
        %v2092 = vadd.f32 %v2091, %v2045
        %v2093 = vadd.f32 %v2092, %v2047
        %v2094 = vadd.f32 %v2093, %v2049
        %v2095 = vadd.f32 %v2094, %v2051
        %v2096 = vadd.f32 %v2095, %v2053
        %v2097 = vadd.f32 %v2096, %v2055
        %v2098 = vadd.f32 %v2097, %v2057
        %v2099 = vadd.f32 %v2098, %v2059
        %v2100 = vadd.f32 %v2099, %v2061
        %v2101 = vadd.f32 %v2100, %v2063
        %v2102 = vadd.f32 %v2101, %v2065
        %v2103 = vadd.f32 %v2102, %v2067
        %v2104 = vrot.slane %v2103, 4
        %v2105 = vadd.f32 %v2103, %v2104
        %v2106 = vrot.slane %v2105, 2
        %v2107 = vadd.f32 %v2105, %v2106
        %v2108 = vrot.slane %v2107, 1
        %v2109 = vadd.f32 %v2107, %v2108
        %v2110 = vmul.f32 %v2088, 0.0078125
        %v2111 = vmul.f32 %v2109, 0.0078125
        %v2112 = vmul.f32 %v2034, %v2034
        %v2113 = vmul.f32 %v2035, %v2035
        %v2114 = vsub.f32 %v2110, %v2112
        %v2115 = vsub.f32 %v2111, %v2113
        %v2116 = vsub.f32 %v1912, %v2034
        %v2117 = vsub.f32 %v1914, %v2035
        %v2118 = vsub.f32 %v1916, %v2034
        %v2119 = vsub.f32 %v1918, %v2035
        %v2120 = vsub.f32 %v1922, %v2034
        %v2121 = vsub.f32 %v1924, %v2035
        %v2122 = vsub.f32 %v1926, %v2034
        %v2123 = vsub.f32 %v1928, %v2035
        %v2124 = vsub.f32 %v1932, %v2034
        %v2125 = vsub.f32 %v1934, %v2035
        %v2126 = vsub.f32 %v1936, %v2034
        %v2127 = vsub.f32 %v1938, %v2035
        %v2128 = vsub.f32 %v1942, %v2034
        %v2129 = vsub.f32 %v1944, %v2035
        %v2130 = vsub.f32 %v1946, %v2034
        %v2131 = vsub.f32 %v1948, %v2035
        %v2132 = vsub.f32 %v1952, %v2034
        %v2133 = vsub.f32 %v1954, %v2035
        %v2134 = vsub.f32 %v1956, %v2034
        %v2135 = vsub.f32 %v1958, %v2035
        %v2136 = vsub.f32 %v1962, %v2034
        %v2137 = vsub.f32 %v1964, %v2035
        %v2138 = vsub.f32 %v1966, %v2034
        %v2139 = vsub.f32 %v1968, %v2035
        %v2140 = vsub.f32 %v1972, %v2034
        %v2141 = vsub.f32 %v1974, %v2035
        %v2142 = vsub.f32 %v1976, %v2034
        %v2143 = vsub.f32 %v1978, %v2035
        %v2144 = vsub.f32 %v1982, %v2034
        %v2145 = vsub.f32 %v1984, %v2035
        %v2146 = vsub.f32 %v1986, %v2034
        %v2147 = vsub.f32 %v1988, %v2035
        %v2148 = vadd.f32 %v2114, 1e-05
        %v2149 = vadd.f32 %v2115, 1e-05
        %v2150 = vrsqrt.pop %v2148
        %v2151 = vrsqrt.pop %v2149
        %v2152 = vmul.f32 %v2116, %v2150
        %v2153 = vmul.f32 %v2117, %v2151
        %v2154 = vmul.f32 %v2118, %v2150
        %v2155 = vmul.f32 %v2119, %v2151
        %v2156 = vmul.f32 %v2120, %v2150
        %v2157 = vmul.f32 %v2121, %v2151
        %v2158 = vmul.f32 %v2122, %v2150
        %v2159 = vmul.f32 %v2123, %v2151
        %v2160 = vmul.f32 %v2124, %v2150
        %v2161 = vmul.f32 %v2125, %v2151
        %v2162 = vmul.f32 %v2126, %v2150
        %v2163 = vmul.f32 %v2127, %v2151
        %v2164 = vmul.f32 %v2128, %v2150
        %v2165 = vmul.f32 %v2129, %v2151
        %v2166 = vmul.f32 %v2130, %v2150
        %v2167 = vmul.f32 %v2131, %v2151
        %v2168 = vmul.f32 %v2132, %v2150
        %v2169 = vmul.f32 %v2133, %v2151
        %v2170 = vmul.f32 %v2134, %v2150
        %v2171 = vmul.f32 %v2135, %v2151
        %v2172 = vmul.f32 %v2136, %v2150
        %v2173 = vmul.f32 %v2137, %v2151
        %v2174 = vmul.f32 %v2138, %v2150
        %v2175 = vmul.f32 %v2139, %v2151
        %v2176 = vmul.f32 %v2140, %v2150
        %v2177 = vmul.f32 %v2141, %v2151
        %v2178 = vmul.f32 %v2142, %v2150
        %v2179 = vmul.f32 %v2143, %v2151
        %v2180 = vmul.f32 %v2144, %v2150
        %v2181 = vmul.f32 %v2145, %v2151
        %v2182 = vmul.f32 %v2146, %v2150
        %v2183 = vmul.f32 %v2147, %v2151
        %v2185 = vlaneseq
        %v2186 = vshrl.u32 %v2185, 7
        %v2187 = vsub.s32 0, %v2186
        %v2188 = vrot.slane %v1990, %v2187
        %v2189 = vlaneseq
        %v2190 = vshrl.u32 %v2189, 7
        %v2191 = vsub.s32 1, %v2190
        %v2192 = vrot.slane %v1990, %v2191
        %v2195 = vmul.f32 %v2152, %v2188
        %v2196 = vmul.f32 %v2153, %v2192
        %v2197 = vmul.f32 %v2154, %v2188
        %v2198 = vmul.f32 %v2155, %v2192
        %v2199 = vmul.f32 %v2156, %v2188
        %v2200 = vmul.f32 %v2157, %v2192
        %v2201 = vmul.f32 %v2158, %v2188
        %v2202 = vmul.f32 %v2159, %v2192
        %v2203 = vmul.f32 %v2160, %v2188
        %v2204 = vmul.f32 %v2161, %v2192
        %v2205 = vmul.f32 %v2162, %v2188
        %v2206 = vmul.f32 %v2163, %v2192
        %v2207 = vmul.f32 %v2164, %v2188
        %v2208 = vmul.f32 %v2165, %v2192
        %v2209 = vmul.f32 %v2166, %v2188
        %v2210 = vmul.f32 %v2167, %v2192
        %v2211 = vmul.f32 %v2168, %v2188
        %v2212 = vmul.f32 %v2169, %v2192
        %v2213 = vmul.f32 %v2170, %v2188
        %v2214 = vmul.f32 %v2171, %v2192
        %v2215 = vmul.f32 %v2172, %v2188
        %v2216 = vmul.f32 %v2173, %v2192
        %v2217 = vmul.f32 %v2174, %v2188
        %v2218 = vmul.f32 %v2175, %v2192
        %v2219 = vmul.f32 %v2176, %v2188
        %v2220 = vmul.f32 %v2177, %v2192
        %v2221 = vmul.f32 %v2178, %v2188
        %v2222 = vmul.f32 %v2179, %v2192
        %v2223 = vmul.f32 %v2180, %v2188
        %v2224 = vmul.f32 %v2181, %v2192
        %v2225 = vmul.f32 %v2182, %v2188
        %v2226 = vmul.f32 %v2183, %v2192
        %v2228 = vlaneseq
        %v2229 = vshrl.u32 %v2228, 7
        %v2230 = vsub.s32 0, %v2229
        %v2231 = vrot.slane %v1991, %v2230
        %v2232 = vlaneseq
        %v2233 = vshrl.u32 %v2232, 7
        %v2234 = vsub.s32 1, %v2233
        %v2235 = vrot.slane %v1991, %v2234
        %v2238 = vadd.f32 %v2195, %v2231
        %v2239 = vadd.f32 %v2196, %v2235
        %v2240 = vadd.f32 %v2197, %v2231
        %v2241 = vadd.f32 %v2198, %v2235
        %v2242 = vadd.f32 %v2199, %v2231
        %v2243 = vadd.f32 %v2200, %v2235
        %v2244 = vadd.f32 %v2201, %v2231
        %v2245 = vadd.f32 %v2202, %v2235
        %v2246 = vadd.f32 %v2203, %v2231
        %v2247 = vadd.f32 %v2204, %v2235
        %v2248 = vadd.f32 %v2205, %v2231
        %v2249 = vadd.f32 %v2206, %v2235
        %v2250 = vadd.f32 %v2207, %v2231
        %v2251 = vadd.f32 %v2208, %v2235
        %v2252 = vadd.f32 %v2209, %v2231
        %v2253 = vadd.f32 %v2210, %v2235
        %v2254 = vadd.f32 %v2211, %v2231
        %v2255 = vadd.f32 %v2212, %v2235
        %v2256 = vadd.f32 %v2213, %v2231
        %v2257 = vadd.f32 %v2214, %v2235
        %v2258 = vadd.f32 %v2215, %v2231
        %v2259 = vadd.f32 %v2216, %v2235
        %v2260 = vadd.f32 %v2217, %v2231
        %v2261 = vadd.f32 %v2218, %v2235
        %v2262 = vadd.f32 %v2219, %v2231
        %v2263 = vadd.f32 %v2220, %v2235
        %v2264 = vadd.f32 %v2221, %v2231
        %v2265 = vadd.f32 %v2222, %v2235
        %v2266 = vadd.f32 %v2223, %v2231
        %v2267 = vadd.f32 %v2224, %v2235
        %v2268 = vadd.f32 %v2225, %v2231
        %v2269 = vadd.f32 %v2226, %v2235
        %v2270 = vmax.f32 %v2238, 0.0
        %v2271 = vmax.f32 %v2239, 0.0
        %v2272 = vmax.f32 %v2240, 0.0
        %v2273 = vmax.f32 %v2241, 0.0
        %v2274 = vmax.f32 %v2242, 0.0
        %v2275 = vmax.f32 %v2243, 0.0
        %v2276 = vmax.f32 %v2244, 0.0
        %v2277 = vmax.f32 %v2245, 0.0
        %v2278 = vmax.f32 %v2246, 0.0
        %v2279 = vmax.f32 %v2247, 0.0
        %v2280 = vmax.f32 %v2248, 0.0
        %v2281 = vmax.f32 %v2249, 0.0
        %v2282 = vmax.f32 %v2250, 0.0
        %v2283 = vmax.f32 %v2251, 0.0
        %v2284 = vmax.f32 %v2252, 0.0
        %v2285 = vmax.f32 %v2253, 0.0
        %v2286 = vmax.f32 %v2254, 0.0
        %v2287 = vmax.f32 %v2255, 0.0
        %v2288 = vmax.f32 %v2256, 0.0
        %v2289 = vmax.f32 %v2257, 0.0
        %v2290 = vmax.f32 %v2258, 0.0
        %v2291 = vmax.f32 %v2259, 0.0
        %v2292 = vmax.f32 %v2260, 0.0
        %v2293 = vmax.f32 %v2261, 0.0
        %v2294 = vmax.f32 %v2262, 0.0
        %v2295 = vmax.f32 %v2263, 0.0
        %v2296 = vmax.f32 %v2264, 0.0
        %v2297 = vmax.f32 %v2265, 0.0
        %v2298 = vmax.f32 %v2266, 0.0
        %v2299 = vmax.f32 %v2267, 0.0
        %v2300 = vmax.f32 %v2268, 0.0
        %v2301 = vmax.f32 %v2269, 0.0
        %v2302 = vpack.c.bf16 %v2272, %v2270
        %v2303 = vpack.c.bf16 %v2273, %v2271
        %v2304 = vpack.c.bf16 %v2276, %v2274
        %v2305 = vpack.c.bf16 %v2277, %v2275
        %v2306 = vpack.c.bf16 %v2280, %v2278
        %v2307 = vpack.c.bf16 %v2281, %v2279
        %v2308 = vpack.c.bf16 %v2284, %v2282
        %v2309 = vpack.c.bf16 %v2285, %v2283
        %v2310 = vpack.c.bf16 %v2288, %v2286
        %v2311 = vpack.c.bf16 %v2289, %v2287
        %v2312 = vpack.c.bf16 %v2292, %v2290
        %v2313 = vpack.c.bf16 %v2293, %v2291
        %v2314 = vpack.c.bf16 %v2296, %v2294
        %v2315 = vpack.c.bf16 %v2297, %v2295
        %v2316 = vpack.c.bf16 %v2300, %v2298
        %v2317 = vpack.c.bf16 %v2301, %v2299
        %v2318 = vld [vmem:[#allocation10] sm:$0xff]
        %v2319 = vld [vmem:[#allocation10 + $0x8] sm:$0xff]
        %v2320 = vld [vmem:[#allocation10 + $0x10] sm:$0xff]
        %v2321 = vld [vmem:[#allocation10 + $0x18] sm:$0xff]
        %v2322 = vld [vmem:[#allocation10 + $0x20] sm:$0xff]
        %v2323 = vld [vmem:[#allocation10 + $0x28] sm:$0xff]
        %v2324 = vld [vmem:[#allocation10 + $0x30] sm:$0xff]
        %v2325 = vld [vmem:[#allocation10 + $0x38] sm:$0xff]
        %v2326 = vld [vmem:[#allocation10 + $0x40] sm:$0xff]
        %v2327 = vld [vmem:[#allocation10 + $0x48] sm:$0xff]
        %v2328 = vld [vmem:[#allocation10 + $0x50] sm:$0xff]
        %v2329 = vld [vmem:[#allocation10 + $0x58] sm:$0xff]
        %v2330 = vld [vmem:[#allocation10 + $0x60] sm:$0xff]
        %v2331 = vld [vmem:[#allocation10 + $0x68] sm:$0xff]
        %v2332 = vld [vmem:[#allocation10 + $0x70] sm:$0xff]
        %v2333 = vld [vmem:[#allocation10 + $0x78] sm:$0xff]
        %v2334 = vld [vmem:[#allocation10 + $0x80] sm:$0xff]
        %v2335 = vld [vmem:[#allocation10 + $0x88] sm:$0xff]
        %v2336 = vld [vmem:[#allocation10 + $0x90] sm:$0xff]
        %v2337 = vld [vmem:[#allocation10 + $0x98] sm:$0xff]
        %v2338 = vld [vmem:[#allocation10 + $0xa0] sm:$0xff]
        %v2339 = vld [vmem:[#allocation10 + $0xa8] sm:$0xff]
        %v2340 = vld [vmem:[#allocation10 + $0xb0] sm:$0xff]
        %v2341 = vld [vmem:[#allocation10 + $0xb8] sm:$0xff]
        %v2342 = vld [vmem:[#allocation10 + $0xc0] sm:$0xff]
        %v2343 = vld [vmem:[#allocation10 + $0xc8] sm:$0xff]
        %v2344 = vld [vmem:[#allocation10 + $0xd0] sm:$0xff]
        %v2345 = vld [vmem:[#allocation10 + $0xd8] sm:$0xff]
        %v2346 = vld [vmem:[#allocation10 + $0xe0] sm:$0xff]
        %v2347 = vld [vmem:[#allocation10 + $0xe8] sm:$0xff]
        %v2348 = vld [vmem:[#allocation10 + $0xf0] sm:$0xff]
        %v2349 = vld [vmem:[#allocation10 + $0xf8] sm:$0xff]
        %v2382 = vunpack.c.l.b16 %v2318
        %v2383 = vunpack.c.h.b16 %v2318
        %v2384 = vunpack.c.l.b16 %v2319
        %v2385 = vunpack.c.h.b16 %v2319
        %v2386 = vunpack.c.l.b16 %v2320
        %v2387 = vunpack.c.h.b16 %v2320
        %v2388 = vunpack.c.l.b16 %v2321
        %v2389 = vunpack.c.h.b16 %v2321
        %v2390 = vunpack.c.l.b16 %v2322
        %v2391 = vunpack.c.h.b16 %v2322
        %v2392 = vunpack.c.l.b16 %v2323
        %v2393 = vunpack.c.h.b16 %v2323
        %v2394 = vunpack.c.l.b16 %v2324
        %v2395 = vunpack.c.h.b16 %v2324
        %v2396 = vunpack.c.l.b16 %v2325
        %v2397 = vunpack.c.h.b16 %v2325
        %v2398 = vunpack.c.l.b16 %v2326
        %v2399 = vunpack.c.h.b16 %v2326
        %v2400 = vunpack.c.l.b16 %v2327
        %v2401 = vunpack.c.h.b16 %v2327
        %v2402 = vunpack.c.l.b16 %v2328
        %v2403 = vunpack.c.h.b16 %v2328
        %v2404 = vunpack.c.l.b16 %v2329
        %v2405 = vunpack.c.h.b16 %v2329
        %v2406 = vunpack.c.l.b16 %v2330
        %v2407 = vunpack.c.h.b16 %v2330
        %v2408 = vunpack.c.l.b16 %v2331
        %v2409 = vunpack.c.h.b16 %v2331
        %v2410 = vunpack.c.l.b16 %v2332
        %v2411 = vunpack.c.h.b16 %v2332
        %v2412 = vunpack.c.l.b16 %v2333
        %v2413 = vunpack.c.h.b16 %v2333
        %v2414 = vunpack.c.l.b16 %v2334
        %v2415 = vunpack.c.h.b16 %v2334
        %v2416 = vunpack.c.l.b16 %v2335
        %v2417 = vunpack.c.h.b16 %v2335
        %v2418 = vunpack.c.l.b16 %v2336
        %v2419 = vunpack.c.h.b16 %v2336
        %v2420 = vunpack.c.l.b16 %v2337
        %v2421 = vunpack.c.h.b16 %v2337
        %v2422 = vunpack.c.l.b16 %v2338
        %v2423 = vunpack.c.h.b16 %v2338
        %v2424 = vunpack.c.l.b16 %v2339
        %v2425 = vunpack.c.h.b16 %v2339
        %v2426 = vunpack.c.l.b16 %v2340
        %v2427 = vunpack.c.h.b16 %v2340
        %v2428 = vunpack.c.l.b16 %v2341
        %v2429 = vunpack.c.h.b16 %v2341
        %v2430 = vunpack.c.l.b16 %v2342
        %v2431 = vunpack.c.h.b16 %v2342
        %v2432 = vunpack.c.l.b16 %v2343
        %v2433 = vunpack.c.h.b16 %v2343
        %v2434 = vunpack.c.l.b16 %v2344
        %v2435 = vunpack.c.h.b16 %v2344
        %v2436 = vunpack.c.l.b16 %v2345
        %v2437 = vunpack.c.h.b16 %v2345
        %v2438 = vunpack.c.l.b16 %v2346
        %v2439 = vunpack.c.h.b16 %v2346
        %v2440 = vunpack.c.l.b16 %v2347
        %v2441 = vunpack.c.h.b16 %v2347
        %v2442 = vunpack.c.l.b16 %v2348
        %v2443 = vunpack.c.h.b16 %v2348
        %v2444 = vunpack.c.l.b16 %v2349
        %v2445 = vunpack.c.h.b16 %v2349
        %v2446 = vpack.c.b16 %v2384, %v2382
        %v2447 = vpack.c.b16 %v2385, %v2383
        %v2448 = vpack.c.b16 %v2388, %v2386
        %v2449 = vpack.c.b16 %v2389, %v2387
        %v2450 = vpack.c.b16 %v2392, %v2390
        %v2451 = vpack.c.b16 %v2393, %v2391
        %v2452 = vpack.c.b16 %v2396, %v2394
        %v2453 = vpack.c.b16 %v2397, %v2395
        %v2454 = vpack.c.b16 %v2400, %v2398
        %v2455 = vpack.c.b16 %v2401, %v2399
        %v2456 = vpack.c.b16 %v2404, %v2402
        %v2457 = vpack.c.b16 %v2405, %v2403
        %v2458 = vpack.c.b16 %v2408, %v2406
        %v2459 = vpack.c.b16 %v2409, %v2407
        %v2460 = vpack.c.b16 %v2412, %v2410
        %v2461 = vpack.c.b16 %v2413, %v2411
        %v2462 = vpack.c.b16 %v2416, %v2414
        %v2463 = vpack.c.b16 %v2417, %v2415
        %v2464 = vpack.c.b16 %v2420, %v2418
        %v2465 = vpack.c.b16 %v2421, %v2419
        %v2466 = vpack.c.b16 %v2424, %v2422
        %v2467 = vpack.c.b16 %v2425, %v2423
        %v2468 = vpack.c.b16 %v2428, %v2426
        %v2469 = vpack.c.b16 %v2429, %v2427
        %v2470 = vpack.c.b16 %v2432, %v2430
        %v2471 = vpack.c.b16 %v2433, %v2431
        %v2472 = vpack.c.b16 %v2436, %v2434
        %v2473 = vpack.c.b16 %v2437, %v2435
        %v2474 = vpack.c.b16 %v2440, %v2438
        %v2475 = vpack.c.b16 %v2441, %v2439
        %v2476 = vpack.c.b16 %v2444, %v2442
        %v2477 = vpack.c.b16 %v2445, %v2443
        %2510 = vmatprep.subr.bf16.mxu0 %v2447
        %2511 = vmatpush1.bf16.msra.mxu0 %v2446
        %2512 = vmatprep.subr.bf16.mxu0 %v2449
        %2513 = vmatpush1.bf16.msra.mxu0 %v2448
        %2514 = vmatprep.subr.bf16.mxu0 %v2451
        %2515 = vmatpush1.bf16.msra.mxu0 %v2450
        %2516 = vmatprep.subr.bf16.mxu0 %v2453
        %2517 = vmatpush1.bf16.msra.mxu0 %v2452
        %2518 = vmatprep.subr.bf16.mxu0 %v2455
        %2519 = vmatpush1.bf16.msra.mxu0 %v2454
        %2520 = vmatprep.subr.bf16.mxu0 %v2457
        %2521 = vmatpush1.bf16.msra.mxu0 %v2456
        %2522 = vmatprep.subr.bf16.mxu0 %v2459
        %2523 = vmatpush1.bf16.msra.mxu0 %v2458
        %2524 = vmatprep.subr.bf16.mxu0 %v2461
        %2525 = vmatpush1.bf16.msra.mxu0 %v2460
        %2526 = vmatprep.subr.bf16.mxu0 %v2463
        %2527 = vmatpush1.bf16.msra.mxu0 %v2462
        %2528 = vmatprep.subr.bf16.mxu0 %v2465
        %2529 = vmatpush1.bf16.msra.mxu0 %v2464
        %2530 = vmatprep.subr.bf16.mxu0 %v2467
        %2531 = vmatpush1.bf16.msra.mxu0 %v2466
        %2532 = vmatprep.subr.bf16.mxu0 %v2469
        %2533 = vmatpush1.bf16.msra.mxu0 %v2468
        %2534 = vmatprep.subr.bf16.mxu0 %v2471
        %2535 = vmatpush1.bf16.msra.mxu0 %v2470
        %2536 = vmatprep.subr.bf16.mxu0 %v2473
        %2537 = vmatpush1.bf16.msra.mxu0 %v2472
        %2538 = vmatprep.subr.bf16.mxu0 %v2475
        %2539 = vmatpush1.bf16.msra.mxu0 %v2474
        %2540 = vmatprep.subr.bf16.mxu0 %v2477
        %2541 = vmatpush1.bf16.msra.mxu0 %v2476
        %2542 = vmatprep.mubr.bf16.mxu0 %v2303
        %2543 = vmatmul.mubr.bf16.gmra.mrb[0].mxu0 %v2302
        %v2544 = vpop.f32.mrb[0].mxu0
        %v2545 = vadd.f32 0.0, %v2544
        %v2546 = vpop.f32.mrb[0].mxu0
        %v2547 = vadd.f32 0.0, %v2546
        %v2548 = vpop.f32.mrb[0].mxu0
        %v2549 = vadd.f32 0.0, %v2548
        %v2550 = vpop.f32.mrb[0].mxu0
        %v2551 = vadd.f32 0.0, %v2550
        %2552 = vmatprep.mubr.bf16.mxu0 %v2305
        %2553 = vmatmul.mubr.bf16.gmra.mrb[0].mxu0 %v2304
        %v2554 = vpop.f32.mrb[0].mxu0
        %v2555 = vadd.f32 0.0, %v2554
        %v2556 = vpop.f32.mrb[0].mxu0
        %v2557 = vadd.f32 0.0, %v2556
        %v2558 = vpop.f32.mrb[0].mxu0
        %v2559 = vadd.f32 0.0, %v2558
        %v2560 = vpop.f32.mrb[0].mxu0
        %v2561 = vadd.f32 0.0, %v2560
        %2562 = vmatprep.mubr.bf16.mxu0 %v2307
        %2563 = vmatmul.mubr.bf16.gmra.mrb[0].mxu0 %v2306
        %v2564 = vpop.f32.mrb[0].mxu0
        %v2565 = vadd.f32 0.0, %v2564
        %v2566 = vpop.f32.mrb[0].mxu0
        %v2567 = vadd.f32 0.0, %v2566
        %v2568 = vpop.f32.mrb[0].mxu0
        %v2569 = vadd.f32 0.0, %v2568
        %v2570 = vpop.f32.mrb[0].mxu0
        %v2571 = vadd.f32 0.0, %v2570
        %2572 = vmatprep.mubr.bf16.mxu0 %v2309
        %2573 = vmatmul.mubr.bf16.gmra.mrb[0].mxu0 %v2308
        %v2574 = vpop.f32.mrb[0].mxu0
        %v2575 = vadd.f32 0.0, %v2574
        %v2576 = vpop.f32.mrb[0].mxu0
        %v2577 = vadd.f32 0.0, %v2576
        %v2578 = vpop.f32.mrb[0].mxu0
        %v2579 = vadd.f32 0.0, %v2578
        %v2580 = vpop.f32.mrb[0].mxu0
        %v2581 = vadd.f32 0.0, %v2580
        %2582 = vmatprep.mubr.bf16.mxu0 %v2311
        %2583 = vmatmul.mubr.bf16.gmra.mrb[0].mxu0 %v2310
        %v2584 = vpop.f32.mrb[0].mxu0
        %v2585 = vadd.f32 0.0, %v2584
        %v2586 = vpop.f32.mrb[0].mxu0
        %v2587 = vadd.f32 0.0, %v2586
        %v2588 = vpop.f32.mrb[0].mxu0
        %v2589 = vadd.f32 0.0, %v2588
        %v2590 = vpop.f32.mrb[0].mxu0
        %v2591 = vadd.f32 0.0, %v2590
        %2592 = vmatprep.mubr.bf16.mxu0 %v2313
        %2593 = vmatmul.mubr.bf16.gmra.mrb[0].mxu0 %v2312
        %v2594 = vpop.f32.mrb[0].mxu0
        %v2595 = vadd.f32 0.0, %v2594
        %v2596 = vpop.f32.mrb[0].mxu0
        %v2597 = vadd.f32 0.0, %v2596
        %v2598 = vpop.f32.mrb[0].mxu0
        %v2599 = vadd.f32 0.0, %v2598
        %v2600 = vpop.f32.mrb[0].mxu0
        %v2601 = vadd.f32 0.0, %v2600
        %2602 = vmatprep.mubr.bf16.mxu0 %v2315
        %2603 = vmatmul.mubr.bf16.gmra.mrb[0].mxu0 %v2314
        %v2604 = vpop.f32.mrb[0].mxu0
        %v2605 = vadd.f32 0.0, %v2604
        %v2606 = vpop.f32.mrb[0].mxu0
        %v2607 = vadd.f32 0.0, %v2606
        %v2608 = vpop.f32.mrb[0].mxu0
        %v2609 = vadd.f32 0.0, %v2608
        %v2610 = vpop.f32.mrb[0].mxu0
        %v2611 = vadd.f32 0.0, %v2610
        %2612 = vmatprep.mubr.bf16.mxu0 %v2317
        %2613 = vmatmul.mubr.bf16.gmra.mrb[0].mxu0 %v2316
        %v2614 = vpop.f32.mrb[0].mxu0
        %v2615 = vadd.f32 0.0, %v2614
        %v2616 = vpop.f32.mrb[0].mxu0
        %v2617 = vadd.f32 0.0, %v2616
        %v2618 = vpop.f32.mrb[0].mxu0
        %v2619 = vadd.f32 0.0, %v2618
        %v2620 = vpop.f32.mrb[0].mxu0
        %v2621 = vadd.f32 0.0, %v2620
        %2622 = vdwg.mxu0
        %v2623 = vadd.f32 %v2545, %v2549
        %v2624 = vadd.f32 %v2623, %v2555
        %v2625 = vadd.f32 %v2624, %v2559
        %v2626 = vadd.f32 %v2625, %v2565
        %v2627 = vadd.f32 %v2626, %v2569
        %v2628 = vadd.f32 %v2627, %v2575
        %v2629 = vadd.f32 %v2628, %v2579
        %v2630 = vadd.f32 %v2629, %v2585
        %v2631 = vadd.f32 %v2630, %v2589
        %v2632 = vadd.f32 %v2631, %v2595
        %v2633 = vadd.f32 %v2632, %v2599
        %v2634 = vadd.f32 %v2633, %v2605
        %v2635 = vadd.f32 %v2634, %v2609
        %v2636 = vadd.f32 %v2635, %v2615
        %v2637 = vadd.f32 %v2636, %v2619
        %v2638 = vrot.slane %v2637, 4
        %v2639 = vadd.f32 %v2637, %v2638
        %v2640 = vrot.slane %v2639, 2
        %v2641 = vadd.f32 %v2639, %v2640
        %v2642 = vrot.slane %v2641, 1
        %v2643 = vadd.f32 %v2641, %v2642
        %v2644 = vadd.f32 %v2547, %v2551
        %v2645 = vadd.f32 %v2644, %v2557
        %v2646 = vadd.f32 %v2645, %v2561
        %v2647 = vadd.f32 %v2646, %v2567
        %v2648 = vadd.f32 %v2647, %v2571
        %v2649 = vadd.f32 %v2648, %v2577
        %v2650 = vadd.f32 %v2649, %v2581
        %v2651 = vadd.f32 %v2650, %v2587
        %v2652 = vadd.f32 %v2651, %v2591
        %v2653 = vadd.f32 %v2652, %v2597
        %v2654 = vadd.f32 %v2653, %v2601
        %v2655 = vadd.f32 %v2654, %v2607
        %v2656 = vadd.f32 %v2655, %v2611
        %v2657 = vadd.f32 %v2656, %v2617
        %v2658 = vadd.f32 %v2657, %v2621
        %v2659 = vrot.slane %v2658, 4
        %v2660 = vadd.f32 %v2658, %v2659
        %v2661 = vrot.slane %v2660, 2
        %v2662 = vadd.f32 %v2660, %v2661
        %v2663 = vrot.slane %v2662, 1
        %v2664 = vadd.f32 %v2662, %v2663
        %v2665 = vmul.f32 %v2643, 0.0078125
        %v2666 = vmul.f32 %v2664, 0.0078125
        %v2667 = vmul.f32 %v2545, %v2545
        %v2668 = vmul.f32 %v2547, %v2547
        %v2669 = vmul.f32 %v2549, %v2549
        %v2670 = vmul.f32 %v2551, %v2551
        %v2671 = vmul.f32 %v2555, %v2555
        %v2672 = vmul.f32 %v2557, %v2557
        %v2673 = vmul.f32 %v2559, %v2559
        %v2674 = vmul.f32 %v2561, %v2561
        %v2675 = vmul.f32 %v2565, %v2565
        %v2676 = vmul.f32 %v2567, %v2567
        %v2677 = vmul.f32 %v2569, %v2569
        %v2678 = vmul.f32 %v2571, %v2571
        %v2679 = vmul.f32 %v2575, %v2575
        %v2680 = vmul.f32 %v2577, %v2577
        %v2681 = vmul.f32 %v2579, %v2579
        %v2682 = vmul.f32 %v2581, %v2581
        %v2683 = vmul.f32 %v2585, %v2585
        %v2684 = vmul.f32 %v2587, %v2587
        %v2685 = vmul.f32 %v2589, %v2589
        %v2686 = vmul.f32 %v2591, %v2591
        %v2687 = vmul.f32 %v2595, %v2595
        %v2688 = vmul.f32 %v2597, %v2597
        %v2689 = vmul.f32 %v2599, %v2599
        %v2690 = vmul.f32 %v2601, %v2601
        %v2691 = vmul.f32 %v2605, %v2605
        %v2692 = vmul.f32 %v2607, %v2607
        %v2693 = vmul.f32 %v2609, %v2609
        %v2694 = vmul.f32 %v2611, %v2611
        %v2695 = vmul.f32 %v2615, %v2615
        %v2696 = vmul.f32 %v2617, %v2617
        %v2697 = vmul.f32 %v2619, %v2619
        %v2698 = vmul.f32 %v2621, %v2621
        %v2699 = vadd.f32 %v2667, %v2669
        %v2700 = vadd.f32 %v2699, %v2671
        %v2701 = vadd.f32 %v2700, %v2673
        %v2702 = vadd.f32 %v2701, %v2675
        %v2703 = vadd.f32 %v2702, %v2677
        %v2704 = vadd.f32 %v2703, %v2679
        %v2705 = vadd.f32 %v2704, %v2681
        %v2706 = vadd.f32 %v2705, %v2683
        %v2707 = vadd.f32 %v2706, %v2685
        %v2708 = vadd.f32 %v2707, %v2687
        %v2709 = vadd.f32 %v2708, %v2689
        %v2710 = vadd.f32 %v2709, %v2691
        %v2711 = vadd.f32 %v2710, %v2693
        %v2712 = vadd.f32 %v2711, %v2695
        %v2713 = vadd.f32 %v2712, %v2697
        %v2714 = vrot.slane %v2713, 4
        %v2715 = vadd.f32 %v2713, %v2714
        %v2716 = vrot.slane %v2715, 2
        %v2717 = vadd.f32 %v2715, %v2716
        %v2718 = vrot.slane %v2717, 1
        %v2719 = vadd.f32 %v2717, %v2718
        %v2720 = vadd.f32 %v2668, %v2670
        %v2721 = vadd.f32 %v2720, %v2672
        %v2722 = vadd.f32 %v2721, %v2674
        %v2723 = vadd.f32 %v2722, %v2676
        %v2724 = vadd.f32 %v2723, %v2678
        %v2725 = vadd.f32 %v2724, %v2680
        %v2726 = vadd.f32 %v2725, %v2682
        %v2727 = vadd.f32 %v2726, %v2684
        %v2728 = vadd.f32 %v2727, %v2686
        %v2729 = vadd.f32 %v2728, %v2688
        %v2730 = vadd.f32 %v2729, %v2690
        %v2731 = vadd.f32 %v2730, %v2692
        %v2732 = vadd.f32 %v2731, %v2694
        %v2733 = vadd.f32 %v2732, %v2696
        %v2734 = vadd.f32 %v2733, %v2698
        %v2735 = vrot.slane %v2734, 4
        %v2736 = vadd.f32 %v2734, %v2735
        %v2737 = vrot.slane %v2736, 2
        %v2738 = vadd.f32 %v2736, %v2737
        %v2739 = vrot.slane %v2738, 1
        %v2740 = vadd.f32 %v2738, %v2739
        %v2741 = vmul.f32 %v2719, 0.0078125
        %v2742 = vmul.f32 %v2740, 0.0078125
        %v2743 = vmul.f32 %v2665, %v2665
        %v2744 = vmul.f32 %v2666, %v2666
        %v2745 = vsub.f32 %v2741, %v2743
        %v2746 = vsub.f32 %v2742, %v2744
        %v2747 = vsub.f32 %v2545, %v2665
        %v2748 = vsub.f32 %v2547, %v2666
        %v2749 = vsub.f32 %v2549, %v2665
        %v2750 = vsub.f32 %v2551, %v2666
        %v2751 = vsub.f32 %v2555, %v2665
        %v2752 = vsub.f32 %v2557, %v2666
        %v2753 = vsub.f32 %v2559, %v2665
        %v2754 = vsub.f32 %v2561, %v2666
        %v2755 = vsub.f32 %v2565, %v2665
        %v2756 = vsub.f32 %v2567, %v2666
        %v2757 = vsub.f32 %v2569, %v2665
        %v2758 = vsub.f32 %v2571, %v2666
        %v2759 = vsub.f32 %v2575, %v2665
        %v2760 = vsub.f32 %v2577, %v2666
        %v2761 = vsub.f32 %v2579, %v2665
        %v2762 = vsub.f32 %v2581, %v2666
        %v2763 = vsub.f32 %v2585, %v2665
        %v2764 = vsub.f32 %v2587, %v2666
        %v2765 = vsub.f32 %v2589, %v2665
        %v2766 = vsub.f32 %v2591, %v2666
        %v2767 = vsub.f32 %v2595, %v2665
        %v2768 = vsub.f32 %v2597, %v2666
        %v2769 = vsub.f32 %v2599, %v2665
        %v2770 = vsub.f32 %v2601, %v2666
        %v2771 = vsub.f32 %v2605, %v2665
        %v2772 = vsub.f32 %v2607, %v2666
        %v2773 = vsub.f32 %v2609, %v2665
        %v2774 = vsub.f32 %v2611, %v2666
        %v2775 = vsub.f32 %v2615, %v2665
        %v2776 = vsub.f32 %v2617, %v2666
        %v2777 = vsub.f32 %v2619, %v2665
        %v2778 = vsub.f32 %v2621, %v2666
        %v2779 = vadd.f32 %v2745, 1e-05
        %v2780 = vadd.f32 %v2746, 1e-05
        %v2781 = vrsqrt.pop %v2779
        %v2782 = vrsqrt.pop %v2780
        %v2783 = vmul.f32 %v2747, %v2781
        %v2784 = vmul.f32 %v2748, %v2782
        %v2785 = vmul.f32 %v2749, %v2781
        %v2786 = vmul.f32 %v2750, %v2782
        %v2787 = vmul.f32 %v2751, %v2781
        %v2788 = vmul.f32 %v2752, %v2782
        %v2789 = vmul.f32 %v2753, %v2781
        %v2790 = vmul.f32 %v2754, %v2782
        %v2791 = vmul.f32 %v2755, %v2781
        %v2792 = vmul.f32 %v2756, %v2782
        %v2793 = vmul.f32 %v2757, %v2781
        %v2794 = vmul.f32 %v2758, %v2782
        %v2795 = vmul.f32 %v2759, %v2781
        %v2796 = vmul.f32 %v2760, %v2782
        %v2797 = vmul.f32 %v2761, %v2781
        %v2798 = vmul.f32 %v2762, %v2782
        %v2799 = vmul.f32 %v2763, %v2781
        %v2800 = vmul.f32 %v2764, %v2782
        %v2801 = vmul.f32 %v2765, %v2781
        %v2802 = vmul.f32 %v2766, %v2782
        %v2803 = vmul.f32 %v2767, %v2781
        %v2804 = vmul.f32 %v2768, %v2782
        %v2805 = vmul.f32 %v2769, %v2781
        %v2806 = vmul.f32 %v2770, %v2782
        %v2807 = vmul.f32 %v2771, %v2781
        %v2808 = vmul.f32 %v2772, %v2782
        %v2809 = vmul.f32 %v2773, %v2781
        %v2810 = vmul.f32 %v2774, %v2782
        %v2811 = vmul.f32 %v2775, %v2781
        %v2812 = vmul.f32 %v2776, %v2782
        %v2813 = vmul.f32 %v2777, %v2781
        %v2814 = vmul.f32 %v2778, %v2782
        %v2815 = vpack.c.bf16 %v2785, %v2783
        %v2816 = vpack.c.bf16 %v2786, %v2784
        %v2817 = vpack.c.bf16 %v2789, %v2787
        %v2818 = vpack.c.bf16 %v2790, %v2788
        %v2819 = vpack.c.bf16 %v2793, %v2791
        %v2820 = vpack.c.bf16 %v2794, %v2792
        %v2821 = vpack.c.bf16 %v2797, %v2795
        %v2822 = vpack.c.bf16 %v2798, %v2796
        %v2823 = vpack.c.bf16 %v2801, %v2799
        %v2824 = vpack.c.bf16 %v2802, %v2800
        %v2825 = vpack.c.bf16 %v2805, %v2803
        %v2826 = vpack.c.bf16 %v2806, %v2804
        %v2827 = vpack.c.bf16 %v2809, %v2807
        %v2828 = vpack.c.bf16 %v2810, %v2808
        %v2829 = vpack.c.bf16 %v2813, %v2811
        %v2830 = vpack.c.bf16 %v2814, %v2812
        %v2831 = vld [vmem:[#allocation11] sm:$0xf]
        %v2832 = vld [vmem:[#allocation11 + $0x4] sm:$0xf]
        %v2833 = vld [vmem:[#allocation11 + $0x8] sm:$0xf]
        %v2834 = vld [vmem:[#allocation11 + $0xc] sm:$0xf]
        %v2835 = vld [vmem:[#allocation11 + $0x10] sm:$0xf]
        %v2836 = vld [vmem:[#allocation11 + $0x14] sm:$0xf]
        %v2837 = vld [vmem:[#allocation11 + $0x18] sm:$0xf]
        %v2838 = vld [vmem:[#allocation11 + $0x1c] sm:$0xf]
        %v2839 = vld [vmem:[#allocation11 + $0x20] sm:$0xf]
        %v2840 = vld [vmem:[#allocation11 + $0x24] sm:$0xf]
        %v2841 = vld [vmem:[#allocation11 + $0x28] sm:$0xf]
        %v2842 = vld [vmem:[#allocation11 + $0x2c] sm:$0xf]
        %v2843 = vld [vmem:[#allocation11 + $0x30] sm:$0xf]
        %v2844 = vld [vmem:[#allocation11 + $0x34] sm:$0xf]
        %v2845 = vld [vmem:[#allocation11 + $0x38] sm:$0xf]
        %v2846 = vld [vmem:[#allocation11 + $0x3c] sm:$0xf]
        %v2847 = vld [vmem:[#allocation11 + $0x40] sm:$0xf]
        %v2848 = vld [vmem:[#allocation11 + $0x44] sm:$0xf]
        %v2849 = vld [vmem:[#allocation11 + $0x48] sm:$0xf]
        %v2850 = vld [vmem:[#allocation11 + $0x4c] sm:$0xf]
        %v2851 = vld [vmem:[#allocation11 + $0x50] sm:$0xf]
        %v2852 = vld [vmem:[#allocation11 + $0x54] sm:$0xf]
        %v2853 = vld [vmem:[#allocation11 + $0x58] sm:$0xf]
        %v2854 = vld [vmem:[#allocation11 + $0x5c] sm:$0xf]
        %v2855 = vld [vmem:[#allocation11 + $0x60] sm:$0xf]
        %v2856 = vld [vmem:[#allocation11 + $0x64] sm:$0xf]
        %v2857 = vld [vmem:[#allocation11 + $0x68] sm:$0xf]
        %v2858 = vld [vmem:[#allocation11 + $0x6c] sm:$0xf]
        %v2859 = vld [vmem:[#allocation11 + $0x70] sm:$0xf]
        %v2860 = vld [vmem:[#allocation11 + $0x74] sm:$0xf]
        %v2861 = vld [vmem:[#allocation11 + $0x78] sm:$0xf]
        %v2862 = vld [vmem:[#allocation11 + $0x7c] sm:$0xf]
        %v2895 = vunpack.c.l.b16 %v2831
        %v2896 = vunpack.c.l.b16 %v2832
        %v2897 = vunpack.c.l.b16 %v2833
        %v2898 = vunpack.c.l.b16 %v2834
        %v2899 = vunpack.c.l.b16 %v2835
        %v2900 = vunpack.c.l.b16 %v2836
        %v2901 = vunpack.c.l.b16 %v2837
        %v2902 = vunpack.c.l.b16 %v2838
        %v2903 = vunpack.c.l.b16 %v2839
        %v2904 = vunpack.c.l.b16 %v2840
        %v2905 = vunpack.c.l.b16 %v2841
        %v2906 = vunpack.c.l.b16 %v2842
        %v2907 = vunpack.c.l.b16 %v2843
        %v2908 = vunpack.c.l.b16 %v2844
        %v2909 = vunpack.c.l.b16 %v2845
        %v2910 = vunpack.c.l.b16 %v2846
        %v2911 = vunpack.c.l.b16 %v2847
        %v2912 = vunpack.c.l.b16 %v2848
        %v2913 = vunpack.c.l.b16 %v2849
        %v2914 = vunpack.c.l.b16 %v2850
        %v2915 = vunpack.c.l.b16 %v2851
        %v2916 = vunpack.c.l.b16 %v2852
        %v2917 = vunpack.c.l.b16 %v2853
        %v2918 = vunpack.c.l.b16 %v2854
        %v2919 = vunpack.c.l.b16 %v2855
        %v2920 = vunpack.c.l.b16 %v2856
        %v2921 = vunpack.c.l.b16 %v2857
        %v2922 = vunpack.c.l.b16 %v2858
        %v2923 = vunpack.c.l.b16 %v2859
        %v2924 = vunpack.c.l.b16 %v2860
        %v2925 = vunpack.c.l.b16 %v2861
        %v2926 = vunpack.c.l.b16 %v2862
        %v2927 = vpack.c.b16 %v2896, %v2895
        %v2928 = vpack.c.b16 %v2898, %v2897
        %v2929 = vpack.c.b16 %v2900, %v2899
        %v2930 = vpack.c.b16 %v2902, %v2901
        %v2931 = vpack.c.b16 %v2904, %v2903
        %v2932 = vpack.c.b16 %v2906, %v2905
        %v2933 = vpack.c.b16 %v2908, %v2907
        %v2934 = vpack.c.b16 %v2910, %v2909
        %v2935 = vpack.c.b16 %v2912, %v2911
        %v2936 = vpack.c.b16 %v2914, %v2913
        %v2937 = vpack.c.b16 %v2916, %v2915
        %v2938 = vpack.c.b16 %v2918, %v2917
        %v2939 = vpack.c.b16 %v2920, %v2919
        %v2940 = vpack.c.b16 %v2922, %v2921
        %v2941 = vpack.c.b16 %v2924, %v2923
        %v2942 = vpack.c.b16 %v2926, %v2925
        %2959 = vmatprep.subr.bf16.mxu0 0
        %2960 = vmatpush1.bf16.msra.mxu0 %v2927
        %2961 = vmatprep.subr.bf16.mxu0 0
        %2962 = vmatpush1.bf16.msra.mxu0 %v2928
        %2963 = vmatprep.subr.bf16.mxu0 0
        %2964 = vmatpush1.bf16.msra.mxu0 %v2929
        %2965 = vmatprep.subr.bf16.mxu0 0
        %2966 = vmatpush1.bf16.msra.mxu0 %v2930
        %2967 = vmatprep.subr.bf16.mxu0 0
        %2968 = vmatpush1.bf16.msra.mxu0 %v2931
        %2969 = vmatprep.subr.bf16.mxu0 0
        %2970 = vmatpush1.bf16.msra.mxu0 %v2932
        %2971 = vmatprep.subr.bf16.mxu0 0
        %2972 = vmatpush1.bf16.msra.mxu0 %v2933
        %2973 = vmatprep.subr.bf16.mxu0 0
        %2974 = vmatpush1.bf16.msra.mxu0 %v2934
        %2975 = vmatprep.subr.bf16.mxu0 0
        %2976 = vmatpush1.bf16.msra.mxu0 %v2935
        %2977 = vmatprep.subr.bf16.mxu0 0
        %2978 = vmatpush1.bf16.msra.mxu0 %v2936
        %2979 = vmatprep.subr.bf16.mxu0 0
        %2980 = vmatpush1.bf16.msra.mxu0 %v2937
        %2981 = vmatprep.subr.bf16.mxu0 0
        %2982 = vmatpush1.bf16.msra.mxu0 %v2938
        %2983 = vmatprep.subr.bf16.mxu0 0
        %2984 = vmatpush1.bf16.msra.mxu0 %v2939
        %2985 = vmatprep.subr.bf16.mxu0 0
        %2986 = vmatpush1.bf16.msra.mxu0 %v2940
        %2987 = vmatprep.subr.bf16.mxu0 0
        %2988 = vmatpush1.bf16.msra.mxu0 %v2941
        %2989 = vmatprep.subr.bf16.mxu0 0
        %2990 = vmatpush1.bf16.msra.mxu0 %v2942
        %2991 = vmatprep.mubr.bf16.mxu0 %v2816
        %2992 = vmatmul.mubr.bf16.gmra.mrb[0].mxu0 %v2815
        %v2993 = vpop.f32.mrb[0].mxu0
        %v2994 = vadd.f32 0.0, %v2993
        %v2995 = vpop.f32.mrb[0].mxu0
        %v2996 = vpop.f32.mrb[0].mxu0
        %v2997 = vadd.f32 0.0, %v2996
        %v2998 = vpop.f32.mrb[0].mxu0
        %2999 = vmatprep.mubr.bf16.mxu0 %v2818
        %3000 = vmatmul.mubr.bf16.gmra.mrb[0].mxu0 %v2817
        %v3001 = vpop.f32.mrb[0].mxu0
        %v3002 = vadd.f32 0.0, %v3001
        %v3003 = vpop.f32.mrb[0].mxu0
        %v3004 = vpop.f32.mrb[0].mxu0
        %v3005 = vadd.f32 0.0, %v3004
        %v3006 = vpop.f32.mrb[0].mxu0
        %3007 = vmatprep.mubr.bf16.mxu0 %v2820
        %3008 = vmatmul.mubr.bf16.gmra.mrb[0].mxu0 %v2819
        %v3009 = vpop.f32.mrb[0].mxu0
        %v3010 = vadd.f32 0.0, %v3009
        %v3011 = vpop.f32.mrb[0].mxu0
        %v3012 = vpop.f32.mrb[0].mxu0
        %v3013 = vadd.f32 0.0, %v3012
        %v3014 = vpop.f32.mrb[0].mxu0
        %3015 = vmatprep.mubr.bf16.mxu0 %v2822
        %3016 = vmatmul.mubr.bf16.gmra.mrb[0].mxu0 %v2821
        %v3017 = vpop.f32.mrb[0].mxu0
        %v3018 = vadd.f32 0.0, %v3017
        %v3019 = vpop.f32.mrb[0].mxu0
        %v3020 = vpop.f32.mrb[0].mxu0
        %v3021 = vadd.f32 0.0, %v3020
        %v3022 = vpop.f32.mrb[0].mxu0
        %3023 = vmatprep.mubr.bf16.mxu0 %v2824
        %3024 = vmatmul.mubr.bf16.gmra.mrb[0].mxu0 %v2823
        %v3025 = vpop.f32.mrb[0].mxu0
        %v3026 = vadd.f32 0.0, %v3025
        %v3027 = vpop.f32.mrb[0].mxu0
        %v3028 = vpop.f32.mrb[0].mxu0
        %v3029 = vadd.f32 0.0, %v3028
        %v3030 = vpop.f32.mrb[0].mxu0
        %3031 = vmatprep.mubr.bf16.mxu0 %v2826
        %3032 = vmatmul.mubr.bf16.gmra.mrb[0].mxu0 %v2825
        %v3033 = vpop.f32.mrb[0].mxu0
        %v3034 = vadd.f32 0.0, %v3033
        %v3035 = vpop.f32.mrb[0].mxu0
        %v3036 = vpop.f32.mrb[0].mxu0
        %v3037 = vadd.f32 0.0, %v3036
        %v3038 = vpop.f32.mrb[0].mxu0
        %3039 = vmatprep.mubr.bf16.mxu0 %v2828
        %3040 = vmatmul.mubr.bf16.gmra.mrb[0].mxu0 %v2827
        %v3041 = vpop.f32.mrb[0].mxu0
        %v3042 = vadd.f32 0.0, %v3041
        %v3043 = vpop.f32.mrb[0].mxu0
        %v3044 = vpop.f32.mrb[0].mxu0
        %v3045 = vadd.f32 0.0, %v3044
        %v3046 = vpop.f32.mrb[0].mxu0
        %3047 = vmatprep.mubr.bf16.mxu0 %v2830
        %3048 = vmatmul.mubr.bf16.gmra.mrb[0].mxu0 %v2829
        %v3049 = vpop.f32.mrb[0].mxu0
        %v3050 = vadd.f32 0.0, %v3049
        %v3051 = vpop.f32.mrb[0].mxu0
        %v3052 = vpop.f32.mrb[0].mxu0
        %v3053 = vadd.f32 0.0, %v3052
        %v3054 = vpop.f32.mrb[0].mxu0
        %3055 = vdwg.mxu0
        %v3056 = vld [vmem:[%s11] sm:$0x1]
        %v3057 = vld [vmem:[%s12] sm:$0x1]
        %v3058 = vadd.f32 %v2994, %v2997
        %v3059 = vadd.f32 %v3058, %v3002
        %v3060 = vadd.f32 %v3059, %v3005
        %v3061 = vadd.f32 %v3060, %v3010
        %v3062 = vadd.f32 %v3061, %v3013
        %v3063 = vadd.f32 %v3062, %v3018
        %v3064 = vadd.f32 %v3063, %v3021
        %v3065 = vadd.f32 %v3064, %v3026
        %v3066 = vadd.f32 %v3065, %v3029
        %v3067 = vadd.f32 %v3066, %v3034
        %v3068 = vadd.f32 %v3067, %v3037
        %v3069 = vadd.f32 %v3068, %v3042
        %v3070 = vadd.f32 %v3069, %v3045
        %v3071 = vadd.f32 %v3070, %v3050
        %v3072 = vadd.f32 %v3071, %v3053
        %v3073 = vrot.slane %v3072, 4
        %v3074 = vadd.f32 %v3072, %v3073
        %v3075 = vrot.slane %v3074, 2
        %v3076 = vadd.f32 %v3074, %v3075
        %v3077 = vrot.slane %v3076, 1
        %v3078 = vadd.f32 %v3076, %v3077
        %v3079 = vmul.f32 %v3078, 0.0078125
        %v3080 = vmul.f32 %v2994, %v2994
        %v3081 = vmul.f32 %v2997, %v2997
        %v3082 = vmul.f32 %v3002, %v3002
        %v3083 = vmul.f32 %v3005, %v3005
        %v3084 = vmul.f32 %v3010, %v3010
        %v3085 = vmul.f32 %v3013, %v3013
        %v3086 = vmul.f32 %v3018, %v3018
        %v3087 = vmul.f32 %v3021, %v3021
        %v3088 = vmul.f32 %v3026, %v3026
        %v3089 = vmul.f32 %v3029, %v3029
        %v3090 = vmul.f32 %v3034, %v3034
        %v3091 = vmul.f32 %v3037, %v3037
        %v3092 = vmul.f32 %v3042, %v3042
        %v3093 = vmul.f32 %v3045, %v3045
        %v3094 = vmul.f32 %v3050, %v3050
        %v3095 = vmul.f32 %v3053, %v3053
        %v3096 = vadd.f32 %v3080, %v3081
        %v3097 = vadd.f32 %v3096, %v3082
        %v3098 = vadd.f32 %v3097, %v3083
        %v3099 = vadd.f32 %v3098, %v3084
        %v3100 = vadd.f32 %v3099, %v3085
        %v3101 = vadd.f32 %v3100, %v3086
        %v3102 = vadd.f32 %v3101, %v3087
        %v3103 = vadd.f32 %v3102, %v3088
        %v3104 = vadd.f32 %v3103, %v3089
        %v3105 = vadd.f32 %v3104, %v3090
        %v3106 = vadd.f32 %v3105, %v3091
        %v3107 = vadd.f32 %v3106, %v3092
        %v3108 = vadd.f32 %v3107, %v3093
        %v3109 = vadd.f32 %v3108, %v3094
        %v3110 = vadd.f32 %v3109, %v3095
        %v3111 = vrot.slane %v3110, 4
        %v3112 = vadd.f32 %v3110, %v3111
        %v3113 = vrot.slane %v3112, 2
        %v3114 = vadd.f32 %v3112, %v3113
        %v3115 = vrot.slane %v3114, 1
        %v3116 = vadd.f32 %v3114, %v3115
        %v3117 = vmul.f32 %v3116, 0.0078125
        %v3118 = vmul.f32 %v3079, %v3079
        %v3119 = vsub.f32 %v3117, %v3118
        %v3120 = vsub.f32 %v2994, %v3079
        %v3121 = vsub.f32 %v2997, %v3079
        %v3122 = vsub.f32 %v3002, %v3079
        %v3123 = vsub.f32 %v3005, %v3079
        %v3124 = vsub.f32 %v3010, %v3079
        %v3125 = vsub.f32 %v3013, %v3079
        %v3126 = vsub.f32 %v3018, %v3079
        %v3127 = vsub.f32 %v3021, %v3079
        %v3128 = vsub.f32 %v3026, %v3079
        %v3129 = vsub.f32 %v3029, %v3079
        %v3130 = vsub.f32 %v3034, %v3079
        %v3131 = vsub.f32 %v3037, %v3079
        %v3132 = vsub.f32 %v3042, %v3079
        %v3133 = vsub.f32 %v3045, %v3079
        %v3134 = vsub.f32 %v3050, %v3079
        %v3135 = vsub.f32 %v3053, %v3079
        %v3136 = vadd.f32 %v3119, 1e-05
        %v3137 = vrsqrt.pop %v3136
        %v3138 = vmul.f32 %v3120, %v3137
        %v3139 = vmul.f32 %v3121, %v3137
        %v3140 = vmul.f32 %v3122, %v3137
        %v3141 = vmul.f32 %v3123, %v3137
        %v3142 = vmul.f32 %v3124, %v3137
        %v3143 = vmul.f32 %v3125, %v3137
        %v3144 = vmul.f32 %v3126, %v3137
        %v3145 = vmul.f32 %v3127, %v3137
        %v3146 = vmul.f32 %v3128, %v3137
        %v3147 = vmul.f32 %v3129, %v3137
        %v3148 = vmul.f32 %v3130, %v3137
        %v3149 = vmul.f32 %v3131, %v3137
        %v3150 = vmul.f32 %v3132, %v3137
        %v3151 = vmul.f32 %v3133, %v3137
        %v3152 = vmul.f32 %v3134, %v3137
        %v3153 = vmul.f32 %v3135, %v3137
        %v3155 = vlaneseq
        %v3156 = vshrl.u32 %v3155, 7
        %v3157 = vsub.s32 0, %v3156
        %v3158 = vrot.slane %v3056, %v3157
        %v3160 = vmul.f32 %v3138, %v3158
        %v3161 = vmul.f32 %v3139, %v3158
        %v3162 = vmul.f32 %v3140, %v3158
        %v3163 = vmul.f32 %v3141, %v3158
        %v3164 = vmul.f32 %v3142, %v3158
        %v3165 = vmul.f32 %v3143, %v3158
        %v3166 = vmul.f32 %v3144, %v3158
        %v3167 = vmul.f32 %v3145, %v3158
        %v3168 = vmul.f32 %v3146, %v3158
        %v3169 = vmul.f32 %v3147, %v3158
        %v3170 = vmul.f32 %v3148, %v3158
        %v3171 = vmul.f32 %v3149, %v3158
        %v3172 = vmul.f32 %v3150, %v3158
        %v3173 = vmul.f32 %v3151, %v3158
        %v3174 = vmul.f32 %v3152, %v3158
        %v3175 = vmul.f32 %v3153, %v3158
        %v3177 = vlaneseq
        %v3178 = vshrl.u32 %v3177, 7
        %v3179 = vsub.s32 0, %v3178
        %v3180 = vrot.slane %v3057, %v3179
        %v3182 = vadd.f32 %v3160, %v3180
        %v3183 = vadd.f32 %v3161, %v3180
        %v3184 = vadd.f32 %v3162, %v3180
        %v3185 = vadd.f32 %v3163, %v3180
        %v3186 = vadd.f32 %v3164, %v3180
        %v3187 = vadd.f32 %v3165, %v3180
        %v3188 = vadd.f32 %v3166, %v3180
        %v3189 = vadd.f32 %v3167, %v3180
        %v3190 = vadd.f32 %v3168, %v3180
        %v3191 = vadd.f32 %v3169, %v3180
        %v3192 = vadd.f32 %v3170, %v3180
        %v3193 = vadd.f32 %v3171, %v3180
        %v3194 = vadd.f32 %v3172, %v3180
        %v3195 = vadd.f32 %v3173, %v3180
        %v3196 = vadd.f32 %v3174, %v3180
        %v3197 = vadd.f32 %v3175, %v3180
        %v3198 = vmax.f32 %v3182, 0.0
        %v3199 = vmax.f32 %v3183, 0.0
        %v3200 = vmax.f32 %v3184, 0.0
        %v3201 = vmax.f32 %v3185, 0.0
        %v3202 = vmax.f32 %v3186, 0.0
        %v3203 = vmax.f32 %v3187, 0.0
        %v3204 = vmax.f32 %v3188, 0.0
        %v3205 = vmax.f32 %v3189, 0.0
        %v3206 = vmax.f32 %v3190, 0.0
        %v3207 = vmax.f32 %v3191, 0.0
        %v3208 = vmax.f32 %v3192, 0.0
        %v3209 = vmax.f32 %v3193, 0.0
        %v3210 = vmax.f32 %v3194, 0.0
        %v3211 = vmax.f32 %v3195, 0.0
        %v3212 = vmax.f32 %v3196, 0.0
        %v3213 = vmax.f32 %v3197, 0.0
        %v3214 = vpack.c.bf16 %v3199, %v3198
        %v3215 = vpack.c.bf16 %v3201, %v3200
        %v3216 = vpack.c.bf16 %v3203, %v3202
        %v3217 = vpack.c.bf16 %v3205, %v3204
        %v3218 = vpack.c.bf16 %v3207, %v3206
        %v3219 = vpack.c.bf16 %v3209, %v3208
        %v3220 = vpack.c.bf16 %v3211, %v3210
        %v3221 = vpack.c.bf16 %v3213, %v3212
        %v3222 = vld [vmem:[#allocation13] sm:$0xff]
        %v3223 = vld [vmem:[#allocation13 + $0x8] sm:$0xff]
        %v3224 = vld [vmem:[#allocation13 + $0x10] sm:$0xff]
        %v3225 = vld [vmem:[#allocation13 + $0x18] sm:$0xff]
        %v3226 = vld [vmem:[#allocation13 + $0x20] sm:$0xff]
        %v3227 = vld [vmem:[#allocation13 + $0x28] sm:$0xff]
        %v3228 = vld [vmem:[#allocation13 + $0x30] sm:$0xff]
        %v3229 = vld [vmem:[#allocation13 + $0x38] sm:$0xff]
        %v3230 = vld [vmem:[#allocation13 + $0x40] sm:$0xff]
        %v3231 = vld [vmem:[#allocation13 + $0x48] sm:$0xff]
        %v3232 = vld [vmem:[#allocation13 + $0x50] sm:$0xff]
        %v3233 = vld [vmem:[#allocation13 + $0x58] sm:$0xff]
        %v3234 = vld [vmem:[#allocation13 + $0x60] sm:$0xff]
        %v3235 = vld [vmem:[#allocation13 + $0x68] sm:$0xff]
        %v3236 = vld [vmem:[#allocation13 + $0x70] sm:$0xff]
        %v3237 = vld [vmem:[#allocation13 + $0x78] sm:$0xff]
        %v3238 = vld [vmem:[%s14] sm:$0x3]
        %v3240 = vlaneseq
        %v3241 = vshrl.u32 %v3240, 7
        %v3242 = vsub.s32 0, %v3241
        %v3243 = vrot.slane %v3238, %v3242
        %v3244 = vlaneseq
        %v3245 = vshrl.u32 %v3244, 7
        %v3246 = vsub.s32 1, %v3245
        %v3247 = vrot.slane %v3238, %v3246
        %v3266 = vunpack.c.l.b16 %v3222
        %v3267 = vunpack.c.h.b16 %v3222
        %v3268 = vunpack.c.l.b16 %v3223
        %v3269 = vunpack.c.h.b16 %v3223
        %v3270 = vunpack.c.l.b16 %v3224
        %v3271 = vunpack.c.h.b16 %v3224
        %v3272 = vunpack.c.l.b16 %v3225
        %v3273 = vunpack.c.h.b16 %v3225
        %v3274 = vunpack.c.l.b16 %v3226
        %v3275 = vunpack.c.h.b16 %v3226
        %v3276 = vunpack.c.l.b16 %v3227
        %v3277 = vunpack.c.h.b16 %v3227
        %v3278 = vunpack.c.l.b16 %v3228
        %v3279 = vunpack.c.h.b16 %v3228
        %v3280 = vunpack.c.l.b16 %v3229
        %v3281 = vunpack.c.h.b16 %v3229
        %v3282 = vunpack.c.l.b16 %v3230
        %v3283 = vunpack.c.h.b16 %v3230
        %v3284 = vunpack.c.l.b16 %v3231
        %v3285 = vunpack.c.h.b16 %v3231
        %v3286 = vunpack.c.l.b16 %v3232
        %v3287 = vunpack.c.h.b16 %v3232
        %v3288 = vunpack.c.l.b16 %v3233
        %v3289 = vunpack.c.h.b16 %v3233
        %v3290 = vunpack.c.l.b16 %v3234
        %v3291 = vunpack.c.h.b16 %v3234
        %v3292 = vunpack.c.l.b16 %v3235
        %v3293 = vunpack.c.h.b16 %v3235
        %v3294 = vunpack.c.l.b16 %v3236
        %v3295 = vunpack.c.h.b16 %v3236
        %v3296 = vunpack.c.l.b16 %v3237
        %v3297 = vunpack.c.h.b16 %v3237
        %v3298 = vpack.c.b16 %v3268, %v3266
        %v3299 = vpack.c.b16 %v3269, %v3267
        %v3300 = vpack.c.b16 %v3272, %v3270
        %v3301 = vpack.c.b16 %v3273, %v3271
        %v3302 = vpack.c.b16 %v3276, %v3274
        %v3303 = vpack.c.b16 %v3277, %v3275
        %v3304 = vpack.c.b16 %v3280, %v3278
        %v3305 = vpack.c.b16 %v3281, %v3279
        %v3306 = vpack.c.b16 %v3284, %v3282
        %v3307 = vpack.c.b16 %v3285, %v3283
        %v3308 = vpack.c.b16 %v3288, %v3286
        %v3309 = vpack.c.b16 %v3289, %v3287
        %v3310 = vpack.c.b16 %v3292, %v3290
        %v3311 = vpack.c.b16 %v3293, %v3291
        %v3312 = vpack.c.b16 %v3296, %v3294
        %v3313 = vpack.c.b16 %v3297, %v3295
        %3330 = vmatprep.subr.bf16.mxu0 %v3299
        %3331 = vmatpush1.bf16.msra.mxu0 %v3298
        %3332 = vmatprep.subr.bf16.mxu0 %v3301
        %3333 = vmatpush1.bf16.msra.mxu0 %v3300
        %3334 = vmatprep.subr.bf16.mxu0 %v3303
        %3335 = vmatpush1.bf16.msra.mxu0 %v3302
        %3336 = vmatprep.subr.bf16.mxu0 %v3305
        %3337 = vmatpush1.bf16.msra.mxu0 %v3304
        %3338 = vmatprep.subr.bf16.mxu0 %v3307
        %3339 = vmatpush1.bf16.msra.mxu0 %v3306
        %3340 = vmatprep.subr.bf16.mxu0 %v3309
        %3341 = vmatpush1.bf16.msra.mxu0 %v3308
        %3342 = vmatprep.subr.bf16.mxu0 %v3311
        %3343 = vmatpush1.bf16.msra.mxu0 %v3310
        %3344 = vmatprep.subr.bf16.mxu0 %v3313
        %3345 = vmatpush1.bf16.msra.mxu0 %v3312
        %3346 = vmatprep.subr.bf16.mxu0 0
        %3347 = vmatpush1.bf16.msra.mxu0 0
        %3348 = vmatprep.subr.bf16.mxu0 0
        %3349 = vmatpush1.bf16.msra.mxu0 0
        %3350 = vmatprep.subr.bf16.mxu0 0
        %3351 = vmatpush1.bf16.msra.mxu0 0
        %3352 = vmatprep.subr.bf16.mxu0 0
        %3353 = vmatpush1.bf16.msra.mxu0 0
        %3354 = vmatprep.subr.bf16.mxu0 0
        %3355 = vmatpush1.bf16.msra.mxu0 0
        %3356 = vmatprep.subr.bf16.mxu0 0
        %3357 = vmatpush1.bf16.msra.mxu0 0
        %3358 = vmatprep.subr.bf16.mxu0 0
        %3359 = vmatpush1.bf16.msra.mxu0 0
        %3360 = vmatprep.subr.bf16.mxu0 0
        %3361 = vmatpush1.bf16.msra.mxu0 0
        %3362 = vmatprep.mubr.bf16.mxu0 0
        %3363 = vmatmul.mubr.bf16.gmra.mrb[0].mxu0 %v3214
        %v3364 = vpop.f32.mrb[0].mxu0
        %v3365 = vadd.f32 %v3243, %v3364
        %v3366 = vpop.f32.mrb[0].mxu0
        %v3367 = vadd.f32 %v3247, %v3366
        %v3368 = vpop.f32.mrb[0].mxu0
        %v3369 = vadd.f32 %v3243, %v3368
        %v3370 = vpop.f32.mrb[0].mxu0
        %v3371 = vadd.f32 %v3247, %v3370
        %3372 = vmatprep.mubr.bf16.mxu0 0
        %3373 = vmatmul.mubr.bf16.gmra.mrb[0].mxu0 %v3215
        %v3374 = vpop.f32.mrb[0].mxu0
        %v3375 = vadd.f32 %v3243, %v3374
        %v3376 = vpop.f32.mrb[0].mxu0
        %v3377 = vadd.f32 %v3247, %v3376
        %v3378 = vpop.f32.mrb[0].mxu0
        %v3379 = vadd.f32 %v3243, %v3378
        %v3380 = vpop.f32.mrb[0].mxu0
        %v3381 = vadd.f32 %v3247, %v3380
        %3382 = vmatprep.mubr.bf16.mxu0 0
        %3383 = vmatmul.mubr.bf16.gmra.mrb[0].mxu0 %v3216
        %v3384 = vpop.f32.mrb[0].mxu0
        %v3385 = vadd.f32 %v3243, %v3384
        %v3386 = vpop.f32.mrb[0].mxu0
        %v3387 = vadd.f32 %v3247, %v3386
        %v3388 = vpop.f32.mrb[0].mxu0
        %v3389 = vadd.f32 %v3243, %v3388
        %v3390 = vpop.f32.mrb[0].mxu0
        %v3391 = vadd.f32 %v3247, %v3390
        %3392 = vmatprep.mubr.bf16.mxu0 0
        %3393 = vmatmul.mubr.bf16.gmra.mrb[0].mxu0 %v3217
        %v3394 = vpop.f32.mrb[0].mxu0
        %v3395 = vadd.f32 %v3243, %v3394
        %v3396 = vpop.f32.mrb[0].mxu0
        %v3397 = vadd.f32 %v3247, %v3396
        %v3398 = vpop.f32.mrb[0].mxu0
        %v3399 = vadd.f32 %v3243, %v3398
        %v3400 = vpop.f32.mrb[0].mxu0
        %v3401 = vadd.f32 %v3247, %v3400
        %3402 = vmatprep.mubr.bf16.mxu0 0
        %3403 = vmatmul.mubr.bf16.gmra.mrb[0].mxu0 %v3218
        %v3404 = vpop.f32.mrb[0].mxu0
        %v3405 = vadd.f32 %v3243, %v3404
        %v3406 = vpop.f32.mrb[0].mxu0
        %v3407 = vadd.f32 %v3247, %v3406
        %v3408 = vpop.f32.mrb[0].mxu0
        %v3409 = vadd.f32 %v3243, %v3408
        %v3410 = vpop.f32.mrb[0].mxu0
        %v3411 = vadd.f32 %v3247, %v3410
        %3412 = vmatprep.mubr.bf16.mxu0 0
        %3413 = vmatmul.mubr.bf16.gmra.mrb[0].mxu0 %v3219
        %v3414 = vpop.f32.mrb[0].mxu0
        %v3415 = vadd.f32 %v3243, %v3414
        %v3416 = vpop.f32.mrb[0].mxu0
        %v3417 = vadd.f32 %v3247, %v3416
        %v3418 = vpop.f32.mrb[0].mxu0
        %v3419 = vadd.f32 %v3243, %v3418
        %v3420 = vpop.f32.mrb[0].mxu0
        %v3421 = vadd.f32 %v3247, %v3420
        %3422 = vmatprep.mubr.bf16.mxu0 0
        %3423 = vmatmul.mubr.bf16.gmra.mrb[0].mxu0 %v3220
        %v3424 = vpop.f32.mrb[0].mxu0
        %v3425 = vadd.f32 %v3243, %v3424
        %v3426 = vpop.f32.mrb[0].mxu0
        %v3427 = vadd.f32 %v3247, %v3426
        %v3428 = vpop.f32.mrb[0].mxu0
        %v3429 = vadd.f32 %v3243, %v3428
        %v3430 = vpop.f32.mrb[0].mxu0
        %v3431 = vadd.f32 %v3247, %v3430
        %3432 = vmatprep.mubr.bf16.mxu0 0
        %3433 = vmatmul.mubr.bf16.gmra.mrb[0].mxu0 %v3221
        %v3434 = vpop.f32.mrb[0].mxu0
        %v3435 = vadd.f32 %v3243, %v3434
        %v3436 = vpop.f32.mrb[0].mxu0
        %v3437 = vadd.f32 %v3247, %v3436
        %v3438 = vpop.f32.mrb[0].mxu0
        %v3439 = vadd.f32 %v3243, %v3438
        %v3440 = vpop.f32.mrb[0].mxu0
        %v3441 = vadd.f32 %v3247, %v3440
        %3442 = vdwg.mxu0
        %3443 = vst [vmem:[%s630] sm:$0xff] %v3365
        %3444 = vst [vmem:[%s630 + $0x8] sm:$0xff] %v3367
        %3445 = vst [vmem:[%s630 + $0x10] sm:$0xff] %v3369
        %3446 = vst [vmem:[%s630 + $0x18] sm:$0xff] %v3371
        %3447 = vst [vmem:[%s630 + $0x20] sm:$0xff] %v3375
        %3448 = vst [vmem:[%s630 + $0x28] sm:$0xff] %v3377
        %3449 = vst [vmem:[%s630 + $0x30] sm:$0xff] %v3379
        %3450 = vst [vmem:[%s630 + $0x38] sm:$0xff] %v3381
        %3451 = vst [vmem:[%s630 + $0x40] sm:$0xff] %v3385
        %3452 = vst [vmem:[%s630 + $0x48] sm:$0xff] %v3387
        %3453 = vst [vmem:[%s630 + $0x50] sm:$0xff] %v3389
        %3454 = vst [vmem:[%s630 + $0x58] sm:$0xff] %v3391
        %3455 = vst [vmem:[%s630 + $0x60] sm:$0xff] %v3395
        %3456 = vst [vmem:[%s630 + $0x68] sm:$0xff] %v3397
        %3457 = vst [vmem:[%s630 + $0x70] sm:$0xff] %v3399
        %3458 = vst [vmem:[%s630 + $0x78] sm:$0xff] %v3401
        %3459 = vst [vmem:[%s630 + $0x80] sm:$0xff] %v3405
        %3460 = vst [vmem:[%s630 + $0x88] sm:$0xff] %v3407
        %3461 = vst [vmem:[%s630 + $0x90] sm:$0xff] %v3409
        %3462 = vst [vmem:[%s630 + $0x98] sm:$0xff] %v3411
        %3463 = vst [vmem:[%s630 + $0xa0] sm:$0xff] %v3415
        %3464 = vst [vmem:[%s630 + $0xa8] sm:$0xff] %v3417
        %3465 = vst [vmem:[%s630 + $0xb0] sm:$0xff] %v3419
        %3466 = vst [vmem:[%s630 + $0xb8] sm:$0xff] %v3421
        %3467 = vst [vmem:[%s630 + $0xc0] sm:$0xff] %v3425
        %3468 = vst [vmem:[%s630 + $0xc8] sm:$0xff] %v3427
        %3469 = vst [vmem:[%s630 + $0xd0] sm:$0xff] %v3429
        %3470 = vst [vmem:[%s630 + $0xd8] sm:$0xff] %v3431
        %3471 = vst [vmem:[%s630 + $0xe0] sm:$0xff] %v3435
        %3472 = vst [vmem:[%s630 + $0xe8] sm:$0xff] %v3437
        %3473 = vst [vmem:[%s630 + $0xf0] sm:$0xff] %v3439
        %3474 = vst [vmem:[%s630 + $0xf8] sm:$0xff] %v3441
        %3475 = vst [vmem:[%s637] sm:$0xff] %v2783
        %3476 = vst [vmem:[%s637 + $0x8] sm:$0xff] %v2784
        %3477 = vst [vmem:[%s637 + $0x10] sm:$0xff] %v2785
        %3478 = vst [vmem:[%s637 + $0x18] sm:$0xff] %v2786
        %3479 = vst [vmem:[%s637 + $0x20] sm:$0xff] %v2787
        %3480 = vst [vmem:[%s637 + $0x28] sm:$0xff] %v2788
        %3481 = vst [vmem:[%s637 + $0x30] sm:$0xff] %v2789
        %3482 = vst [vmem:[%s637 + $0x38] sm:$0xff] %v2790
        %3483 = vst [vmem:[%s637 + $0x40] sm:$0xff] %v2791
        %3484 = vst [vmem:[%s637 + $0x48] sm:$0xff] %v2792
        %3485 = vst [vmem:[%s637 + $0x50] sm:$0xff] %v2793
        %3486 = vst [vmem:[%s637 + $0x58] sm:$0xff] %v2794
        %3487 = vst [vmem:[%s637 + $0x60] sm:$0xff] %v2795
        %3488 = vst [vmem:[%s637 + $0x68] sm:$0xff] %v2796
        %3489 = vst [vmem:[%s637 + $0x70] sm:$0xff] %v2797
        %3490 = vst [vmem:[%s637 + $0x78] sm:$0xff] %v2798
        %3491 = vst [vmem:[%s637 + $0x80] sm:$0xff] %v2799
        %3492 = vst [vmem:[%s637 + $0x88] sm:$0xff] %v2800
        %3493 = vst [vmem:[%s637 + $0x90] sm:$0xff] %v2801
        %3494 = vst [vmem:[%s637 + $0x98] sm:$0xff] %v2802
        %3495 = vst [vmem:[%s637 + $0xa0] sm:$0xff] %v2803
        %3496 = vst [vmem:[%s637 + $0xa8] sm:$0xff] %v2804
        %3497 = vst [vmem:[%s637 + $0xb0] sm:$0xff] %v2805
        %3498 = vst [vmem:[%s637 + $0xb8] sm:$0xff] %v2806
        %3499 = vst [vmem:[%s637 + $0xc0] sm:$0xff] %v2807
        %3500 = vst [vmem:[%s637 + $0xc8] sm:$0xff] %v2808
        %3501 = vst [vmem:[%s637 + $0xd0] sm:$0xff] %v2809
        %3502 = vst [vmem:[%s637 + $0xd8] sm:$0xff] %v2810
        %3503 = vst [vmem:[%s637 + $0xe0] sm:$0xff] %v2811
        %3504 = vst [vmem:[%s637 + $0xe8] sm:$0xff] %v2812
        %3505 = vst [vmem:[%s637 + $0xf0] sm:$0xff] %v2813
        %3506 = vst [vmem:[%s637 + $0xf8] sm:$0xff] %v2814
        %s3507 = sand.u32 %s368, 1
        %s3508 = scalar_lea.sflag [#allocation4], %s3507
        %s3509 = sand.u32 %s368, 1
        %s3510 = smul.addr %s3509, 256
        %s3511 = scalar_lea.vmem [#allocation14], %s3510
        %s3512 = sand.u32 %s394, 1
        %s3513 = scalar_lea.sflag [#allocation16], %s3512
        %s3514 = sand.u32 %s394, 1
        %s3515 = smul.addr %s3514, 256
        %s3516 = scalar_lea.vmem [#allocation15], %s3515
        // Predicated region
        $region109: #{tpu_custom_call.1} parent=79 // pred_check
          %p3517 = pneg %p378
        $region110: #{tpu_custom_call.1} parent=79 // pred_check_branch
          %3519 = sbr.rel (%p3517) target = $region112
        $region111: #{tpu_custom_call.1} parent=79 // pred_region
          %s3521 = ssub.s32 4096, 4096
          %3522 = vsyncadd %s3508, %s3521
          %s3523 = smul.addr %s40, 32
          %s3524 = smul.addr %s3523, 128
          %s3525 = scalar_lea.hbm %s15, %s3524
          %s3526 = sshll.u32 %s3511, 4
          %s3527 = int_to_ptr.vmem [resolvable:$true] %s3526
          %3532 = dma.vmem_to_hbm [thread:$0]  %s3527, 4096, %s3525, %s3508, 256, 256, 16
        $region112: #{tpu_custom_call.1} parent=79 // pred_fallthru
          _
        // Predicated region
        $region113: #{tpu_custom_call.1} parent=79 // pred_check
          %p3533 = pneg %p404
        $region114: #{tpu_custom_call.1} parent=79 // pred_check_branch
          %3535 = sbr.rel (%p3533) target = $region116
        $region115: #{tpu_custom_call.1} parent=79 // pred_region
          %s3537 = ssub.s32 4096, 4096
          %3538 = vsyncadd %s3513, %s3537
          %s3539 = smul.addr %s40, 32
          %s3540 = smul.addr %s3539, 128
          %s3541 = scalar_lea.hbm %s16, %s3540
          %s3542 = sshll.u32 %s3516, 4
          %s3543 = int_to_ptr.vmem [resolvable:$true] %s3542
          %3548 = dma.vmem_to_hbm [thread:$0]  %s3543, 4096, %s3541, %s3513, 256, 256, 16
        $region116: #{tpu_custom_call.1} parent=79 // pred_fallthru
          _
      $region80: #{tpu_custom_call.1} parent=5 // pred_fallthru
        _
      %p3549 = scmp.le.s32.totalorder 2, %s35
      // Predicated region
      $region117: #{tpu_custom_call.1} parent=5 // pred_check
        %p3550 = pneg %p3549
      $region118: #{tpu_custom_call.1} parent=5 // pred_check_branch
        %3552 = sbr.rel (%p3550) target = $region120
      $region119: #{tpu_custom_call.1} parent=5 // pred_region
        %s3553 = ssub.s32 %s35, 2
        // Predicated region
        $region121: #{tpu_custom_call.1} parent=119 // pred_check
          %p3554 = pneg %p384
        $region122: #{tpu_custom_call.1} parent=119 // pred_check_branch
          %3556 = sbr.rel (%p3554) target = $region124
        $region123: #{tpu_custom_call.1} parent=119 // pred_region
          %s3557 = sand.u32 %s369, 1
          %s3558 = scalar_lea.sflag [#allocation4], %s3557
          %s3559 = sand.u32 %s369, 1
          %s3560 = smul.addr %s3559, 256
          %s3561 = scalar_lea.vmem [#allocation14], %s3560
          %3562 = dma.done %s3558, 4096
        $region124: #{tpu_custom_call.1} parent=119 // pred_fallthru
          _
        // Predicated region
        $region125: #{tpu_custom_call.1} parent=119 // pred_check
          %p3563 = pneg %p410
        $region126: #{tpu_custom_call.1} parent=119 // pred_check_branch
          %3565 = sbr.rel (%p3563) target = $region128
        $region127: #{tpu_custom_call.1} parent=119 // pred_region
          %s3566 = sand.u32 %s395, 1
          %s3567 = scalar_lea.sflag [#allocation16], %s3566
          %s3568 = sand.u32 %s395, 1
          %s3569 = smul.addr %s3568, 256
          %s3570 = scalar_lea.vmem [#allocation15], %s3569
          %3571 = dma.done %s3567, 4096
        $region128: #{tpu_custom_call.1} parent=119 // pred_fallthru
          _
      $region120: #{tpu_custom_call.1} parent=5 // pred_fallthru
        _
    $region6: #{tpu_custom_call.1} parent=1 // loop_footer
      %s39 = sadd.s32 1, %s35
    $region7: #{tpu_custom_call.1} parent=1 // loop_footer_branch
      %34 = sbr.rel target = $region3
    $region8: #{tpu_custom_call.1} parent=1 // loop_exit
      _
    %3572 = vsyncpa [#allocation3], 1
    %s3573 = scalar_lea.sflag [#allocation3], 1
    %3574 = vsyncpa %s3573, 1
    %3575 = vsyncpa [#allocation6], 1
    %3576 = vsyncpa [#allocation9], 1
    %3577 = vsyncpa [#allocation12], 1
    %3578 = vsyncpa [#allocation4], 1
    %s3579 = scalar_lea.sflag [#allocation4], 1
    %3580 = vsyncpa %s3579, 1
    %3581 = vsyncpa [#allocation16], 1
    %s3582 = scalar_lea.sflag [#allocation16], 1
    %3583 = vsyncpa %s3582, 1

</llo_original>
